<compile_context>
chip_gen: v5e
topology: v5e:2x2
jax: 0.10.0
libtpu: 0.0.40
codegen_flags: <defaults>
</compile_context>

<pallas_src>
import functools

import jax
import jax.numpy as jnp
from jax.experimental import pallas as pl
from jax.experimental.pallas import tpu as pltpu

EPS = 1e-5     # nn.BatchNorm2d default eps
LANE = 128     # TPU lane width


# --------------------------------------------------------------------------- kernel helpers

def _conv3x3_im2col_stats(interior, w_ref, y_ref, stats_ref, pad_scr, col_scr):
    """One sample's 3x3 'same' conv + per-sample batch statistics.

    interior : (H, W, Cp) activation (spatially unpadded, already post-activation
               when applicable).
    w_ref    : (9*Cp, Cp) im2col-ordered weight (kh, kw, cin) x cout.
    y_ref    : (1, H, W, Cp) pre-BN conv output for this sample.
    stats_ref: (1, 2, Cp)  [per-channel sum, per-channel sum of squares].
    pad_scr  : (H+2, W+2, Cp) VMEM halo buffer.
    col_scr  : (H*W, 9*Cp) VMEM im2col buffer.
    """
    H, W, Cp = interior.shape
    Hp, Wp = H + 2, W + 2
    HW = H * W

    # Zero only the 1-element halo ring; the interior is fully overwritten below.
    zrow = jnp.zeros((1, Wp, Cp), jnp.float32)
    zcol = jnp.zeros((Hp, 1, Cp), jnp.float32)
    pad_scr[0:1, :, :] = zrow
    pad_scr[Hp - 1:Hp, :, :] = zrow
    pad_scr[:, 0:1, :] = zcol
    pad_scr[:, Wp - 1:Wp, :] = zcol
    pad_scr[1:H + 1, 1:W + 1, :] = interior

    # im2col: 9 shifted taps laid out along lanes -> (HW, 9*Cp).
    for k in range(9):
        dy, dx = k // 3, k % 3
        col_scr[:, k * Cp:(k + 1) * Cp] = (
            pad_scr[dy:dy + H, dx:dx + W, :].reshape(HW, Cp))

    # Single MXU matmul per conv, f32 accumulation (K = 9*Cp, N = Cp).
    # bf16 operands would ~2x MXU rate on v6e/v7x; kept f32 for the 1e-4 tolerance.
    y = jnp.dot(col_scr[...], w_ref[...], preferred_element_type=jnp.float32)
    y_ref[...] = y.reshape(y_ref.shape)

    # One-pass batch stats, reduced on the MXU (ones-row matmul) instead of a
    # cross-sublane XLU reduce.
    ones_row = jnp.ones((1, HW), jnp.float32)
    s = jnp.dot(ones_row, y, preferred_element_type=jnp.float32)       # (1, Cp)
    ss = jnp.dot(ones_row, y * y, preferred_element_type=jnp.float32)  # (1, Cp)
    stats_ref[...] = jnp.concatenate([s, ss], axis=0).reshape(stats_ref.shape)


def _bn_scale_shift(stats_all, gamma, beta, inv_nhw):
    """In-kernel BN finalize: fold batch mean/var + affine into scale/shift (1, Cp).

    stats_all: (N, 2, Cp) per-sample [sum, sum_sq]; gamma/beta: (1, Cp).
    """
    tot = jnp.sum(stats_all, axis=0)            # (2, Cp): sums over samples
    mean = tot[0:1] * inv_nhw                   # (1, Cp)
    var = tot[1:2] * inv_nhw - mean * mean      # biased variance (PyTorch train mode)
    scale = gamma * jax.lax.rsqrt(var + EPS)    # gamma / sqrt(var + eps)   (EUP rsqrt)
    shift = beta - mean * scale
    return scale, shift


# --------------------------------------------------------------------------- kernels

def conv_stats_kernel(x_ref, w_ref, y_ref, stats_ref, pad_scr, col_scr):
    # Pass 1: conv1 (pre-BN, no bias) + per-sample stats.
    _conv3x3_im2col_stats(x_ref[0], w_ref, y_ref, stats_ref, pad_scr, col_scr)


def bn_relu_conv_stats_kernel(y1_ref, stats1_ref, gamma_ref, beta_ref, w_ref,
                              y2_ref, stats2_ref, pad_scr, col_scr, *, inv_nhw):
    # Pass 2: fold BN1 stats in-kernel, apply affine (+ReLU), then conv2 + stats.
    scale, shift = _bn_scale_shift(stats1_ref[...], gamma_ref[...], beta_ref[...],
                                   inv_nhw)
    a = jnp.maximum(y1_ref[0] * scale + shift, 0.0)
    _conv3x3_im2col_stats(a, w_ref, y2_ref, stats2_ref, pad_scr, col_scr)


def bn_relu_residual_kernel(y2_ref, x_ref, stats2_ref, gamma_ref, beta_ref,
                            out_ref, *, inv_nhw):
    # Pass 3: fold BN2 stats in-kernel, apply affine (+ReLU), add residual.
    scale, shift = _bn_scale_shift(stats2_ref[...], gamma_ref[...], beta_ref[...],
                                   inv_nhw)
    a = jnp.maximum(y2_ref[0] * scale + shift, 0.0)
    out_ref[0] = (a + x_ref[0]).astype(out_ref.dtype)


# --------------------------------------------------------------------------- wrapper

def residual_block(x_nchw, params):
    """x_nchw: (N, C, H, W) float32. params: 8 arrays in PyTorch layouts."""
    N, C, H, W = x_nchw.shape
    w1, b1, g1, be1, w2, b2, g2, be2 = params
    del b1, b2  # conv bias immediately followed by train-mode BN cancels exactly

    Cp = ((C + LANE - 1) // LANE) * LANE       # lane-dense channel count
    HW = H * W
    inv_nhw = 1.0 / float(N * H * W)

    # NCHW -> NHWC, zero-pad channels to Cp (padded channels stay exactly zero).
    x_nhwc = jnp.transpose(x_nchw, (0, 2, 3, 1)).astype(jnp.float32)
    x_p = jnp.pad(x_nhwc, ((0, 0), (0, 0), (0, 0), (0, Cp - C)))

    def prep_weight(w):
        # (Cout, Cin, kh, kw) -> (kh, kw, Cin, Cout) -> channel-pad -> (9*Cp, Cp)
        wk = jnp.transpose(w, (2, 3, 1, 0))
        wk = jnp.pad(wk, ((0, 0), (0, 0), (0, Cp - C), (0, Cp - C)))
        return wk.reshape(9 * Cp, Cp).astype(jnp.float32)

    w1m, w2m = prep_weight(w1), prep_weight(w2)
    pad_c = lambda v: jnp.pad(v.astype(jnp.float32), (0, Cp - C))[None, :]  # (1, Cp)
    g1p, be1p, g2p, be2p = pad_c(g1), pad_c(be1), pad_c(g2), pad_c(be2)

    cparams = pltpu.CompilerParams(
        dimension_semantics=("parallel",),      # shard batch over v7x's 2 TensorCores
        vmem_limit_bytes=32 * 1024 * 1024,      # explicit; well under v7x 64 MiB VMEM
    )

    img_spec = pl.BlockSpec((1, H, W, Cp), lambda n: (n, 0, 0, 0))
    w_spec = pl.BlockSpec((9 * Cp, Cp), lambda n: (0, 0))
    vec_spec = pl.BlockSpec((1, Cp), lambda n: (0, 0))
    stats_out_spec = pl.BlockSpec((1, 2, Cp), lambda n: (n, 0, 0))
    stats_in_spec = pl.BlockSpec((N, 2, Cp), lambda n: (0, 0, 0))
    scratch = [pltpu.VMEM((H + 2, W + 2, Cp), jnp.float32),   # halo pad buffer
               pltpu.VMEM((HW, 9 * Cp), jnp.float32)]         # im2col buffer

    # --- pass 1: conv1 (pre-BN) + per-sample batch stats -----------------------
    y1_pre, stats1 = pl.pallas_call(
        conv_stats_kernel,
        out_shape=(jax.ShapeDtypeStruct((N, H, W, Cp), jnp.float32),
                   jax.ShapeDtypeStruct((N, 2, Cp), jnp.float32)),
        grid=(N,),
        in_specs=[img_spec, w_spec],
        out_specs=(img_spec, stats_out_spec),
        scratch_shapes=scratch,
        compiler_params=cparams,
    )(x_p, w1m)

    # --- pass 2: fold BN1 (+ReLU) in-kernel, conv2 (pre-BN) + per-sample stats --
    y2_pre, stats2 = pl.pallas_call(
        functools.partial(bn_relu_conv_stats_kernel, inv_nhw=inv_nhw),
        out_shape=(jax.ShapeDtypeStruct((N, H, W, Cp), jnp.float32),
                   jax.ShapeDtypeStruct((N, 2, Cp), jnp.float32)),
        grid=(N,),
        in_specs=[img_spec, stats_in_spec, vec_spec, vec_spec, w_spec],
        out_specs=(img_spec, stats_out_spec),
        scratch_shapes=scratch,
        compiler_params=cparams,
    )(y1_pre, stats1, g1p, be1p, w2m)

    # --- pass 3: fold BN2 (+ReLU) in-kernel + residual add ----------------------
    out_p = pl.pallas_call(
        functools.partial(bn_relu_residual_kernel, inv_nhw=inv_nhw),
        out_shape=jax.ShapeDtypeStruct((N, H, W, Cp), x_nchw.dtype),
        grid=(N,),
        in_specs=[img_spec, img_spec, stats_in_spec, vec_spec, vec_spec],
        out_specs=img_spec,
        compiler_params=cparams,
    )(y2_pre, x_p, stats2, g2p, be2p)

    # slice away padded channels, back to NCHW
    return jnp.transpose(out_p[..., :C], (0, 3, 1, 2))

    # TODO(synk): BatchNorm2d running_mean/running_var buffer updates (a training-time
    # side effect) are not modeled; they do not affect the forward output.


# --------------------------------------------------------------------------- reference

def residual_block_ref(x_nchw, params):
    """Pure-JAX reference (NCHW, mirrors PyTorch semantics, including conv bias)."""
    w1, b1, g1, be1, w2, b2, g2, be2 = params

    def conv_bn_relu(x, w, b, g, be):
        y = jax.lax.conv_general_dilated(
            x, w, window_strides=(1, 1), padding=((1, 1), (1, 1)),
            dimension_numbers=('NCHW', 'OIHW', 'NCHW'))
        y = y + b[None, :, None, None]
        mean = jnp.mean(y, axis=(0, 2, 3), keepdims=True)
        var = jnp.mean((y - mean) ** 2, axis=(0, 2, 3), keepdims=True)
        y = (y - mean) * jax.lax.rsqrt(var + EPS)
        y = y * g[None, :, None, None] + be[None, :, None, None]
        return jnp.maximum(y, 0.0)

    y = conv_bn_relu(x_nchw, w1, b1, g1, be1)
    y = conv_bn_relu(y, w2, b2, g2, be2)
    return y + x_nchw


def init_params(key, channels):
    k1, k2, k3, k4 = jax.random.split(key, 4)
    # Conv2d(channels, channels, 3): weight (C, C, 3, 3), bias (C,)
    w1 = 0.1 * jax.random.normal(k1, (channels, channels, 3, 3), jnp.float32)
    b1 = 0.05 * jax.random.normal(k2, (channels,), jnp.float32)
    w2 = 0.1 * jax.random.normal(k3, (channels, channels, 3, 3), jnp.float32)
    b2 = 0.05 * jax.random.normal(k4, (channels,), jnp.float32)
    # BatchNorm2d default init: gamma=1, beta=0
    g1 = jnp.ones((channels,), jnp.float32)
    be1 = jnp.zeros((channels,), jnp.float32)
    g2 = jnp.ones((channels,), jnp.float32)
    be2 = jnp.zeros((channels,), jnp.float32)
    return (w1, b1, g1, be1, w2, b2, g2, be2)


if __name__ == "__main__":
    key = jax.random.PRNGKey(0)
    kx, kp = jax.random.split(key)

    N, C, H, W = 2, 4, 16, 16
    x = jax.random.normal(kx, (N, C, H, W), jnp.float32)
    params = init_params(kp, C)

    out = jax.block_until_ready(residual_block(x, params))
    ref = residual_block_ref(x, params)

    assert out.shape == (N, C, H, W)
    assert jnp.allclose(out, ref, atol=1e-4, rtol=1e-4), "mismatch vs reference"

    print("KERNEL_OK")
</pallas_src>

<mosaic_0001>
module attributes {stable_mosaic.version = 11 : i64} {
  func.func @conv_stats_kernel(%arg0: i32, %arg1: memref<1x16x16x128xf32, #tpu.memory_space<vmem>>, %arg2: memref<1152x128xf32, #tpu.memory_space<vmem>>, %arg3: memref<1x16x16x128xf32, #tpu.memory_space<vmem>>, %arg4: memref<1x2x128xf32, #tpu.memory_space<vmem>>, %arg5: memref<18x18x128xf32, #tpu.memory_space<vmem>>, %arg6: memref<256x1152xf32, #tpu.memory_space<vmem>>) attributes {dimension_semantics = [#tpu.dimension_semantics<parallel>], iteration_bounds = array<i64: 2>, scalar_prefetch = 0 : i64, scratch_operands = 2 : i64, tpu.core_type = #tpu.core_type<tc>, window_params = [{transform_indices = @transform_0, window_bounds = array<i64: 1, 16, 16, 128>}, {pipeline_mode = #tpu.pipeline_mode<synchronous>, transform_indices = @transform_1, window_bounds = array<i64: 1152, 128>}, {transform_indices = @transform_2, window_bounds = array<i64: 1, 16, 16, 128>}, {transform_indices = @transform_3, window_bounds = array<i64: 1, 2, 128>}]} {
    %c0 = arith.constant 0 : index
    %c0_0 = arith.constant 0 : index
    %c0_1 = arith.constant 0 : index
    %c0_2 = arith.constant 0 : index
    %0 = vector.load %arg1[%c0, %c0_0, %c0_1, %c0_2] : memref<1x16x16x128xf32, #tpu.memory_space<vmem>>, vector<1x16x16x128xf32>
    %1 = vector.shape_cast %0 : vector<1x16x16x128xf32> to vector<16x16x128xf32>
    %cst = arith.constant 0.000000e+00 : f32
    %2 = vector.broadcast %cst : f32 to vector<1x18x128xf32>
    %cst_3 = arith.constant 0.000000e+00 : f32
    %3 = vector.broadcast %cst_3 : f32 to vector<18x1x128xf32>
    %c0_4 = arith.constant 0 : index
    %c0_5 = arith.constant 0 : index
    %c0_6 = arith.constant 0 : index
    %4 = vector.load %arg5[%c0_4, %c0_5, %c0_6] : memref<18x18x128xf32, #tpu.memory_space<vmem>>, vector<1x18x128xf32>
    tpu.vector_store %arg5[%c0_4, %c0_5, %c0_6], %2 {strides = array<i32>} : memref<18x18x128xf32, #tpu.memory_space<vmem>>, vector<1x18x128xf32>,
    %c17 = arith.constant 17 : index
    %c0_7 = arith.constant 0 : index
    %c0_8 = arith.constant 0 : index
    %5 = vector.load %arg5[%c17, %c0_7, %c0_8] : memref<18x18x128xf32, #tpu.memory_space<vmem>>, vector<1x18x128xf32>
    tpu.vector_store %arg5[%c17, %c0_7, %c0_8], %2 {strides = array<i32>} : memref<18x18x128xf32, #tpu.memory_space<vmem>>, vector<1x18x128xf32>,
    %c0_9 = arith.constant 0 : index
    %c0_10 = arith.constant 0 : index
    %c0_11 = arith.constant 0 : index
    %6 = vector.load %arg5[%c0_9, %c0_10, %c0_11] : memref<18x18x128xf32, #tpu.memory_space<vmem>>, vector<18x1x128xf32>
    tpu.vector_store %arg5[%c0_9, %c0_10, %c0_11], %3 {strides = array<i32>} : memref<18x18x128xf32, #tpu.memory_space<vmem>>, vector<18x1x128xf32>,
    %c0_12 = arith.constant 0 : index
    %c17_13 = arith.constant 17 : index
    %c0_14 = arith.constant 0 : index
    %7 = vector.load %arg5[%c0_12, %c17_13, %c0_14] : memref<18x18x128xf32, #tpu.memory_space<vmem>>, vector<18x1x128xf32>
    tpu.vector_store %arg5[%c0_12, %c17_13, %c0_14], %3 {strides = array<i32>} : memref<18x18x128xf32, #tpu.memory_space<vmem>>, vector<18x1x128xf32>,
    %c1 = arith.constant 1 : index
    %c1_15 = arith.constant 1 : index
    %c0_16 = arith.constant 0 : index
    %8 = vector.load %arg5[%c1, %c1_15, %c0_16] : memref<18x18x128xf32, #tpu.memory_space<vmem>>, vector<16x16x128xf32>
    tpu.vector_store %arg5[%c1, %c1_15, %c0_16], %1 {strides = array<i32>} : memref<18x18x128xf32, #tpu.memory_space<vmem>>, vector<16x16x128xf32>,
    %c0_17 = arith.constant 0 : index
    %c0_18 = arith.constant 0 : index
    %c0_19 = arith.constant 0 : index
    %9 = vector.load %arg5[%c0_17, %c0_18, %c0_19] : memref<18x18x128xf32, #tpu.memory_space<vmem>>, vector<16x16x128xf32>
    %10 = vector.shape_cast %9 : vector<16x16x128xf32> to vector<256x128xf32>
    %c0_20 = arith.constant 0 : index
    %c0_21 = arith.constant 0 : index
    %11 = vector.load %arg6[%c0_20, %c0_21] : memref<256x1152xf32, #tpu.memory_space<vmem>>, vector<256x128xf32>
    tpu.vector_store %arg6[%c0_20, %c0_21], %10 {strides = array<i32>} : memref<256x1152xf32, #tpu.memory_space<vmem>>, vector<256x128xf32>,
    %c0_22 = arith.constant 0 : index
    %c1_23 = arith.constant 1 : index
    %c0_24 = arith.constant 0 : index
    %12 = vector.load %arg5[%c0_22, %c1_23, %c0_24] : memref<18x18x128xf32, #tpu.memory_space<vmem>>, vector<16x16x128xf32>
    %13 = vector.shape_cast %12 : vector<16x16x128xf32> to vector<256x128xf32>
    %c0_25 = arith.constant 0 : index
    %c128 = arith.constant 128 : index
    %14 = vector.load %arg6[%c0_25, %c128] : memref<256x1152xf32, #tpu.memory_space<vmem>>, vector<256x128xf32>
    tpu.vector_store %arg6[%c0_25, %c128], %13 {strides = array<i32>} : memref<256x1152xf32, #tpu.memory_space<vmem>>, vector<256x128xf32>,
    %c0_26 = arith.constant 0 : index
    %c2 = arith.constant 2 : index
    %c0_27 = arith.constant 0 : index
    %15 = vector.load %arg5[%c0_26, %c2, %c0_27] : memref<18x18x128xf32, #tpu.memory_space<vmem>>, vector<16x16x128xf32>
    %16 = vector.shape_cast %15 : vector<16x16x128xf32> to vector<256x128xf32>
    %c0_28 = arith.constant 0 : index
    %c256 = arith.constant 256 : index
    %17 = vector.load %arg6[%c0_28, %c256] : memref<256x1152xf32, #tpu.memory_space<vmem>>, vector<256x128xf32>
    tpu.vector_store %arg6[%c0_28, %c256], %16 {strides = array<i32>} : memref<256x1152xf32, #tpu.memory_space<vmem>>, vector<256x128xf32>,
    %c1_29 = arith.constant 1 : index
    %c0_30 = arith.constant 0 : index
    %c0_31 = arith.constant 0 : index
    %18 = vector.load %arg5[%c1_29, %c0_30, %c0_31] : memref<18x18x128xf32, #tpu.memory_space<vmem>>, vector<16x16x128xf32>
    %19 = vector.shape_cast %18 : vector<16x16x128xf32> to vector<256x128xf32>
    %c0_32 = arith.constant 0 : index
    %c384 = arith.constant 384 : index
    %20 = vector.load %arg6[%c0_32, %c384] : memref<256x1152xf32, #tpu.memory_space<vmem>>, vector<256x128xf32>
    tpu.vector_store %arg6[%c0_32, %c384], %19 {strides = array<i32>} : memref<256x1152xf32, #tpu.memory_space<vmem>>, vector<256x128xf32>,
    %c1_33 = arith.constant 1 : index
    %c1_34 = arith.constant 1 : index
    %c0_35 = arith.constant 0 : index
    %21 = vector.load %arg5[%c1_33, %c1_34, %c0_35] : memref<18x18x128xf32, #tpu.memory_space<vmem>>, vector<16x16x128xf32>
    %22 = vector.shape_cast %21 : vector<16x16x128xf32> to vector<256x128xf32>
    %c0_36 = arith.constant 0 : index
    %c512 = arith.constant 512 : index
    %23 = vector.load %arg6[%c0_36, %c512] : memref<256x1152xf32, #tpu.memory_space<vmem>>, vector<256x128xf32>
    tpu.vector_store %arg6[%c0_36, %c512], %22 {strides = array<i32>} : memref<256x1152xf32, #tpu.memory_space<vmem>>, vector<256x128xf32>,
    %c1_37 = arith.constant 1 : index
    %c2_38 = arith.constant 2 : index
    %c0_39 = arith.constant 0 : index
    %24 = vector.load %arg5[%c1_37, %c2_38, %c0_39] : memref<18x18x128xf32, #tpu.memory_space<vmem>>, vector<16x16x128xf32>
    %25 = vector.shape_cast %24 : vector<16x16x128xf32> to vector<256x128xf32>
    %c0_40 = arith.constant 0 : index
    %c640 = arith.constant 640 : index
    %26 = vector.load %arg6[%c0_40, %c640] : memref<256x1152xf32, #tpu.memory_space<vmem>>, vector<256x128xf32>
    tpu.vector_store %arg6[%c0_40, %c640], %25 {strides = array<i32>} : memref<256x1152xf32, #tpu.memory_space<vmem>>, vector<256x128xf32>,
    %c2_41 = arith.constant 2 : index
    %c0_42 = arith.constant 0 : index
    %c0_43 = arith.constant 0 : index
    %27 = vector.load %arg5[%c2_41, %c0_42, %c0_43] : memref<18x18x128xf32, #tpu.memory_space<vmem>>, vector<16x16x128xf32>
    %28 = vector.shape_cast %27 : vector<16x16x128xf32> to vector<256x128xf32>
    %c0_44 = arith.constant 0 : index
    %c768 = arith.constant 768 : index
    %29 = vector.load %arg6[%c0_44, %c768] : memref<256x1152xf32, #tpu.memory_space<vmem>>, vector<256x128xf32>
    tpu.vector_store %arg6[%c0_44, %c768], %28 {strides = array<i32>} : memref<256x1152xf32, #tpu.memory_space<vmem>>, vector<256x128xf32>,
    %c2_45 = arith.constant 2 : index
    %c1_46 = arith.constant 1 : index
    %c0_47 = arith.constant 0 : index
    %30 = vector.load %arg5[%c2_45, %c1_46, %c0_47] : memref<18x18x128xf32, #tpu.memory_space<vmem>>, vector<16x16x128xf32>
    %31 = vector.shape_cast %30 : vector<16x16x128xf32> to vector<256x128xf32>
    %c0_48 = arith.constant 0 : index
    %c896 = arith.constant 896 : index
    %32 = vector.load %arg6[%c0_48, %c896] : memref<256x1152xf32, #tpu.memory_space<vmem>>, vector<256x128xf32>
    tpu.vector_store %arg6[%c0_48, %c896], %31 {strides = array<i32>} : memref<256x1152xf32, #tpu.memory_space<vmem>>, vector<256x128xf32>,
    %c2_49 = arith.constant 2 : index
    %c2_50 = arith.constant 2 : index
    %c0_51 = arith.constant 0 : index
    %33 = vector.load %arg5[%c2_49, %c2_50, %c0_51] : memref<18x18x128xf32, #tpu.memory_space<vmem>>, vector<16x16x128xf32>
    %34 = vector.shape_cast %33 : vector<16x16x128xf32> to vector<256x128xf32>
    %c0_52 = arith.constant 0 : index
    %c1024 = arith.constant 1024 : index
    %35 = vector.load %arg6[%c0_52, %c1024] : memref<256x1152xf32, #tpu.memory_space<vmem>>, vector<256x128xf32>
    tpu.vector_store %arg6[%c0_52, %c1024], %34 {strides = array<i32>} : memref<256x1152xf32, #tpu.memory_space<vmem>>, vector<256x128xf32>,
    %c0_53 = arith.constant 0 : index
    %c0_54 = arith.constant 0 : index
    %36 = vector.load %arg6[%c0_53, %c0_54] : memref<256x1152xf32, #tpu.memory_space<vmem>>, vector<256x1152xf32>
    %c0_55 = arith.constant 0 : index
    %c0_56 = arith.constant 0 : index
    %37 = vector.load %arg2[%c0_55, %c0_56] : memref<1152x128xf32, #tpu.memory_space<vmem>>, vector<1152x128xf32>
    %cst_57 = arith.constant dense<0.000000e+00> : vector<256x128xf32>
    %38 = tpu.matmul %36, %37, %cst_57 {dimension_numbers = #tpu.dot_dimension_numbers<[1], [0], [0], [1], [0, 0, 1, 1], [], []>} : vector<256x1152xf32>, vector<1152x128xf32>, vector<256x128xf32> -> vector<256x128xf32>
    %39 = vector.shape_cast %38 : vector<256x128xf32> to vector<1x16x16x128xf32>
    %c0_58 = arith.constant 0 : index
    %c0_59 = arith.constant 0 : index
    %c0_60 = arith.constant 0 : index
    %c0_61 = arith.constant 0 : index
    %40 = vector.load %arg3[%c0_58, %c0_59, %c0_60, %c0_61] : memref<1x16x16x128xf32, #tpu.memory_space<vmem>>, vector<1x16x16x128xf32>
    tpu.vector_store %arg3[%c0_58, %c0_59, %c0_60, %c0_61], %39 {strides = array<i32>} : memref<1x16x16x128xf32, #tpu.memory_space<vmem>>, vector<1x16x16x128xf32>,
    %cst_62 = arith.constant 1.000000e+00 : f32
    %41 = vector.broadcast %cst_62 : f32 to vector<1x256xf32>
    %cst_63 = arith.constant dense<0.000000e+00> : vector<1x128xf32>
    %42 = tpu.matmul %41, %38, %cst_63 {dimension_numbers = #tpu.dot_dimension_numbers<[1], [0], [0], [1], [0, 0, 1, 1], [], []>} : vector<1x256xf32>, vector<256x128xf32>, vector<1x128xf32> -> vector<1x128xf32>
    %43 = arith.mulf %38, %38 : vector<256x128xf32>
    %cst_64 = arith.constant dense<0.000000e+00> : vector<1x128xf32>
    %44 = tpu.matmul %41, %43, %cst_64 {dimension_numbers = #tpu.dot_dimension_numbers<[1], [0], [0], [1], [0, 0, 1, 1], [], []>} : vector<1x256xf32>, vector<256x128xf32>, vector<1x128xf32> -> vector<1x128xf32>
    %45 = tpu.concatenate %42, %44 in 0 : vector<1x128xf32>, vector<1x128xf32> -> vector<2x128xf32>
    %46 = vector.shape_cast %45 : vector<2x128xf32> to vector<1x2x128xf32>
    %c0_65 = arith.constant 0 : index
    %c0_66 = arith.constant 0 : index
    %c0_67 = arith.constant 0 : index
    %47 = vector.load %arg4[%c0_65, %c0_66, %c0_67] : memref<1x2x128xf32, #tpu.memory_space<vmem>>, vector<1x2x128xf32>
    tpu.vector_store %arg4[%c0_65, %c0_66, %c0_67], %46 {strides = array<i32>} : memref<1x2x128xf32, #tpu.memory_space<vmem>>, vector<1x2x128xf32>,
    return
  }
  func.func @transform_0(%arg0: i32) -> (i32, i32, i32, i32) {
    %c0_i32 = arith.constant 0 : i32
    %c0_i32_0 = arith.constant 0 : i32
    %c0_i32_1 = arith.constant 0 : i32
    %c0_i32_2 = arith.constant 0 : i32
    return %arg0, %c0_i32, %c0_i32_0, %c0_i32_1 : i32, i32, i32, i32
  }
  func.func @transform_1(%arg0: i32) -> (i32, i32) {
    %c0_i32 = arith.constant 0 : i32
    %c0_i32_0 = arith.constant 0 : i32
    %c0_i32_1 = arith.constant 0 : i32
    return %c0_i32, %c0_i32_0 : i32, i32
  }
  func.func @transform_2(%arg0: i32) -> (i32, i32, i32, i32) {
    %c0_i32 = arith.constant 0 : i32
    %c0_i32_0 = arith.constant 0 : i32
    %c0_i32_1 = arith.constant 0 : i32
    %c0_i32_2 = arith.constant 0 : i32
    return %arg0, %c0_i32, %c0_i32_0, %c0_i32_1 : i32, i32, i32, i32
  }
  func.func @transform_3(%arg0: i32) -> (i32, i32, i32) {
    %c0_i32 = arith.constant 0 : i32
    %c0_i32_0 = arith.constant 0 : i32
    %c0_i32_1 = arith.constant 0 : i32
    return %arg0, %c0_i32, %c0_i32_0 : i32, i32, i32
  }
}

</mosaic_0001>

<llo_original>
// kernel: tpu_custom_call.1
$region0: #{tpu_custom_call.1}
  #allocation0 [shape = 'u32[]', space=smem, size = 0x4, offset = 0x4, fixed_abs, tag = 'smem constant byte address 0x4 - core index']
  #allocation1 [shape = 'u32[72,128]{1,0:T(1,128)}', space=vmem, size = 0x9000, scoped, tag = 'internal scratch']
  #allocation2 [shape = 'f32[18,18,128]{2,1,0:T(8,128)}', space=vmem, size = 0x36000, scoped, tag = 'scratch operand']
  #allocation3 [shape = 'f32[256,1152]{1,0:T(8,128)}', space=vmem, size = 0x120000, scoped, tag = 'scratch operand']
  %s0 = inlined_call_operand.hbm [shape: f32[2,16,16,128], index: 0, kind: input, shape index: {}]
  %s1 = inlined_call_operand.hbm [shape: f32[1152,128], index: 1, kind: input, shape index: {}]
  %s2 = inlined_call_operand.hbm [shape: f32[2,16,16,128], index: 2, kind: output, shape index: {0}]
  %s3 = inlined_call_operand.hbm [shape: f32[2,2,128], index: 3, kind: output, shape index: {1}]
  %4 = xla_tuple %s2, %s3
  %s5 = sld [smem:[#allocation0]]
  $region57: #{tpu_custom_call.1} parent=0
    _
  %s7 = ssub.s32 1, %s5
  %s8 = scalar_select 0, %s7, %s5
  $region1: #{tpu_custom_call.1} parent=0
    #allocation4 [shape = 'u8[262144]{0}', space=vmem, size = 0x40000, scoped, tag = 'input window, operand 0']
    #allocation5 [shape = 's32[2]{0}', space=sflag, size = 0x8, scoped, tag = 'scoped memory for tpu_custom_call.1']
    #allocation6 [shape = 's32[2]{0}', space=sflag, size = 0x8, scoped, tag = 'scoped memory for tpu_custom_call.1']
    #allocation7 [shape = 'u8[589824]{0}', space=vmem, size = 0x90000, scoped, tag = 'input window, operand 1, single buffered']
    #allocation8 [shape = 's32[1]{0}', space=sflag, size = 0x4, scoped, tag = 'scoped memory for tpu_custom_call.1']
    #allocation9 [shape = 'u8[262144]{0}', space=vmem, size = 0x40000, scoped, tag = 'output window, operand 0']
    #allocation10 [shape = 'u8[2048]{0}', space=vmem, size = 0x800, scoped, tag = 'output window, operand 1']
    #allocation11 [shape = 's32[2]{0}', space=sflag, size = 0x8, scoped, tag = 'scoped memory for tpu_custom_call.1']
    %9 = vsyncpa [#allocation5], 0
    %s10 = scalar_lea.sflag [#allocation5], 1
    %11 = vsyncpa %s10, 0
    %12 = vsyncpa [#allocation8], 0
    %13 = vsyncpa [#allocation6], 0
    %s14 = scalar_lea.sflag [#allocation6], 1
    %15 = vsyncpa %s14, 0
    %16 = vsyncpa [#allocation11], 0
    %s17 = scalar_lea.sflag [#allocation11], 1
    %18 = vsyncpa %s17, 0
    loop: start=0, step=1, limit=4
    $region2: #{tpu_custom_call.1} parent=1 // loop_pre_header
      _
    $region3: #{tpu_custom_call.1} parent=1 // loop_header
      %s20 = sphi 0, %s24
      %p21 = scmp.ge.s32.totalorder %s20, 4
      %s30 = sphi 0, %s32
      %s33 = sphi 0, %s30
      %s34 = sphi 0, %s33
      %s50 = sphi 0, %s34
      %s54 = sphi 0, %s54
      %s56 = sphi 0, %s54
      %s57 = sphi 0, %s56
      %s71 = sphi 0, %s57
      %s77 = sphi 0, %s79
      %s80 = sphi 0, %s77
      %s81 = sphi 0, %s80
      %s97 = sphi 0, %s81
      %s103 = sphi 0, %s105
      %s106 = sphi 0, %s103
      %s107 = sphi 0, %s106
      %s123 = sphi 0, %s107
    $region4: #{tpu_custom_call.1} parent=1 // loop_header_branch
      %23 = sbr.rel (%p21) target = $region8
    $region5: #{tpu_custom_call.1} parent=1 // loop_body
      %s25 = ssub.s32 %s20, 1
      %s26 = ssub.s32 %s20, 2
      %s27 = sadd.s32 %s20, 1
      %s28 = ssub.s32 %s20, %s27
      %p29 = scmp.eq.s32.totalorder %s28, 0
      %s31 = sadd.s32 %s30, 1
      %s32 = scalar_select %p29, %s30, %s31
      %p35 = pneg %p29
      %p36 = scmp.eq.s32.totalorder %s20, 1
      %p37 = por %p35, %p36
      %p38 = scmp.ne.s32.totalorder %s30, %s33
      %p39 = scmp.eq.s32.totalorder %s20, 0
      %p40 = por %p38, %p39
      %p41 = scmp.ne.s32.totalorder %s30, %s33
      %p42 = scmp.eq.s32.totalorder %s25, 1
      %p43 = por %p41, %p42
      %p44 = scmp.ne.s32.totalorder %s33, %s34
      %p45 = scmp.eq.s32.totalorder %s25, 0
      %p46 = por %p44, %p45
      %p47 = scmp.ne.s32.totalorder %s33, %s34
      %p48 = scmp.eq.s32.totalorder %s26, 1
      %p49 = por %p47, %p48
      %p51 = scmp.ne.s32.totalorder %s34, %s50
      %p52 = scmp.eq.s32.totalorder %s26, 0
      %p53 = por %p51, %p52
      %s55 = sadd.s32 %s54, 1
      %p58 = scmp.eq.s32.totalorder %s20, 1
      %p59 = scmp.ne.s32.totalorder %s54, %s56
      %p60 = scmp.eq.s32.totalorder %s20, 0
      %p61 = por %p59, %p60
      %p62 = scmp.ne.s32.totalorder %s54, %s56
      %p63 = scmp.eq.s32.totalorder %s25, 1
      %p64 = por %p62, %p63
      %p65 = scmp.ne.s32.totalorder %s56, %s57
      %p66 = scmp.eq.s32.totalorder %s25, 0
      %p67 = por %p65, %p66
      %p68 = scmp.ne.s32.totalorder %s56, %s57
      %p69 = scmp.eq.s32.totalorder %s26, 1
      %p70 = por %p68, %p69
      %p72 = scmp.ne.s32.totalorder %s57, %s71
      %p73 = scmp.eq.s32.totalorder %s26, 0
      %p74 = por %p72, %p73
      %s75 = ssub.s32 %s20, %s27
      %p76 = scmp.eq.s32.totalorder %s75, 0
      %s78 = sadd.s32 %s77, 1
      %s79 = scalar_select %p76, %s77, %s78
      %p82 = pneg %p76
      %p83 = scmp.eq.s32.totalorder %s20, 1
      %p84 = por %p82, %p83
      %p85 = scmp.ne.s32.totalorder %s77, %s80
      %p86 = scmp.eq.s32.totalorder %s20, 0
      %p87 = por %p85, %p86
      %p88 = scmp.ne.s32.totalorder %s77, %s80
      %p89 = scmp.eq.s32.totalorder %s25, 1
      %p90 = por %p88, %p89
      %p91 = scmp.ne.s32.totalorder %s80, %s81
      %p92 = scmp.eq.s32.totalorder %s25, 0
      %p93 = por %p91, %p92
      %p94 = scmp.ne.s32.totalorder %s80, %s81
      %p95 = scmp.eq.s32.totalorder %s26, 1
      %p96 = por %p94, %p95
      %p98 = scmp.ne.s32.totalorder %s81, %s97
      %p99 = scmp.eq.s32.totalorder %s26, 0
      %p100 = por %p98, %p99
      %s101 = ssub.s32 %s20, %s27
      %p102 = scmp.eq.s32.totalorder %s101, 0
      %s104 = sadd.s32 %s103, 1
      %s105 = scalar_select %p102, %s103, %s104
      %p108 = pneg %p102
      %p109 = scmp.eq.s32.totalorder %s20, 1
      %p110 = por %p108, %p109
      %p111 = scmp.ne.s32.totalorder %s103, %s106
      %p112 = scmp.eq.s32.totalorder %s20, 0
      %p113 = por %p111, %p112
      %p114 = scmp.ne.s32.totalorder %s103, %s106
      %p115 = scmp.eq.s32.totalorder %s25, 1
      %p116 = por %p114, %p115
      %p117 = scmp.ne.s32.totalorder %s106, %s107
      %p118 = scmp.eq.s32.totalorder %s25, 0
      %p119 = por %p117, %p118
      %p120 = scmp.ne.s32.totalorder %s106, %s107
      %p121 = scmp.eq.s32.totalorder %s26, 1
      %p122 = por %p120, %p121
      %p124 = scmp.ne.s32.totalorder %s107, %s123
      %p125 = scmp.eq.s32.totalorder %s26, 0
      %p126 = por %p124, %p125
      %p127 = scmp.le.s32.totalorder 1, %s20
      %p128 = scmp.lt.s32.totalorder %s20, 3
      %p129 = pnand %p127, %p128
      %p130 = pneg %p129
      // Predicated region
      $region9: #{tpu_custom_call.1} parent=5 // pred_check
        _
      $region10: #{tpu_custom_call.1} parent=5 // pred_check_branch
        %132 = sbr.rel (%p129) target = $region12
      $region11: #{tpu_custom_call.1} parent=5 // pred_region
        %s133 = ssub.s32 %s20, 1
        // Predicated region
        $region13: #{tpu_custom_call.1} parent=11 // pred_check
          %p134 = pneg %p67
        $region14: #{tpu_custom_call.1} parent=11 // pred_check_branch
          %136 = sbr.rel (%p134) target = $region16
        $region15: #{tpu_custom_call.1} parent=11 // pred_region
          %138 = vsyncadd [#allocation8], 0
          %s139 = sshll.u32 %s1, 4
          %s140 = int_to_ptr.hbm [resolvable:$true] %s139
          %s141 = sshll.u32 [#allocation7], 4
          %s142 = int_to_ptr.vmem [resolvable:$true] %s141
          %147 = dma.hbm_to_vmem [thread:$0]  %s140, 18432, %s142, [#allocation8], 128, 128, 8
        $region16: #{tpu_custom_call.1} parent=11 // pred_fallthru
          _
      $region12: #{tpu_custom_call.1} parent=5 // pred_fallthru
        _
      %p148 = scmp.lt.s32.totalorder %s20, 2
      // Predicated region
      $region17: #{tpu_custom_call.1} parent=5 // pred_check
        %p149 = pneg %p148
      $region18: #{tpu_custom_call.1} parent=5 // pred_check_branch
        %151 = sbr.rel (%p149) target = $region20
      $region19: #{tpu_custom_call.1} parent=5 // pred_region
        // Predicated region
        $region21: #{tpu_custom_call.1} parent=19 // pred_check
          %p152 = pneg %p40
        $region22: #{tpu_custom_call.1} parent=19 // pred_check_branch
          %154 = sbr.rel (%p152) target = $region24
        $region23: #{tpu_custom_call.1} parent=19 // pred_region
          %s155 = sand.u32 %s30, 1
          %s156 = scalar_lea.sflag [#allocation5], %s155
          %s157 = sand.u32 %s30, 1
          %s158 = smul.addr %s157, 256
          %s159 = scalar_lea.vmem [#allocation4], %s158
          %161 = vsyncadd %s156, 0
          %s162 = smul.addr %s20, 32
          %s163 = smul.addr %s162, 8
          %s164 = scalar_lea.hbm %s0, %s163
          %s165 = sshll.u32 %s164, 4
          %s166 = int_to_ptr.hbm [resolvable:$true] %s165
          %s167 = sshll.u32 %s159, 4
          %s168 = int_to_ptr.vmem [resolvable:$true] %s167
          %173 = dma.hbm_to_vmem [thread:$0]  %s166, 4096, %s168, %s156, 128, 128, 8
        $region24: #{tpu_custom_call.1} parent=19 // pred_fallthru
          _
      $region20: #{tpu_custom_call.1} parent=5 // pred_fallthru
        _
      %p174 = scmp.le.s32.totalorder 1, %s20
      %p175 = scmp.lt.s32.totalorder %s20, 3
      %p176 = pnand %p174, %p175
      %p177 = pneg %p176
      // Predicated region
      $region25: #{tpu_custom_call.1} parent=5 // pred_check
        _
      $region26: #{tpu_custom_call.1} parent=5 // pred_check_branch
        %179 = sbr.rel (%p176) target = $region28
      $region27: #{tpu_custom_call.1} parent=5 // pred_region
        %s180 = ssub.s32 %s20, 1
        %s181 = sand.u32 %s33, 1
        %s182 = scalar_lea.sflag [#allocation5], %s181
        %s183 = sand.u32 %s33, 1
        %s184 = smul.addr %s183, 256
        %s185 = scalar_lea.vmem [#allocation4], %s184
        // Predicated region
        $region29: #{tpu_custom_call.1} parent=27 // pred_check
          %p186 = pneg %p46
        $region30: #{tpu_custom_call.1} parent=27 // pred_check_branch
          %188 = sbr.rel (%p186) target = $region32
        $region31: #{tpu_custom_call.1} parent=27 // pred_region
          %190 = dma.done %s182, 4096
        $region32: #{tpu_custom_call.1} parent=27 // pred_fallthru
          _
        // Predicated region
        $region33: #{tpu_custom_call.1} parent=27 // pred_check
          %p191 = pneg %p67
        $region34: #{tpu_custom_call.1} parent=27 // pred_check_branch
          %193 = sbr.rel (%p191) target = $region36
        $region35: #{tpu_custom_call.1} parent=27 // pred_region
          %195 = dma.done [#allocation8], 18432
        $region36: #{tpu_custom_call.1} parent=27 // pred_fallthru
          _
        %s196 = sand.u32 %s33, 1
        %s197 = scalar_lea.sflag [#allocation5], %s196
        %s198 = sand.u32 %s33, 1
        %s199 = smul.addr %s198, 256
        %s200 = scalar_lea.vmem [#allocation4], %s199
        %p201 = pneg %p46
        %p202 = pneg %p43
        %p203 = pneg %p67
        %p204 = pneg %p64
        %p205 = pneg %p93
        %p206 = pneg %p90
        %s207 = sand.u32 %s80, 1
        %s208 = scalar_lea.sflag [#allocation6], %s207
        %s209 = sand.u32 %s80, 1
        %s210 = smul.addr %s209, 256
        %s211 = scalar_lea.vmem [#allocation9], %s210
        %p212 = pneg %p119
        %p213 = pneg %p116
        %s214 = sand.u32 %s106, 1
        %s215 = scalar_lea.sflag [#allocation11], %s214
        %s216 = sand.u32 %s106, 1
        %s217 = smul.addr %s216, 2
        %s218 = scalar_lea.vmem [#allocation10], %s217
        %v219 = vld [vmem:[%s185] sm:$0xff]
        %v220 = vld [vmem:[%s185 + $0x8] sm:$0xff]
        %v221 = vld [vmem:[%s185 + $0x10] sm:$0xff]
        %v222 = vld [vmem:[%s185 + $0x18] sm:$0xff]
        %v223 = vld [vmem:[%s185 + $0x20] sm:$0xff]
        %v224 = vld [vmem:[%s185 + $0x28] sm:$0xff]
        %v225 = vld [vmem:[%s185 + $0x30] sm:$0xff]
        %v226 = vld [vmem:[%s185 + $0x38] sm:$0xff]
        %v227 = vld [vmem:[%s185 + $0x40] sm:$0xff]
        %v228 = vld [vmem:[%s185 + $0x48] sm:$0xff]
        %v229 = vld [vmem:[%s185 + $0x50] sm:$0xff]
        %v230 = vld [vmem:[%s185 + $0x58] sm:$0xff]
        %v231 = vld [vmem:[%s185 + $0x60] sm:$0xff]
        %v232 = vld [vmem:[%s185 + $0x68] sm:$0xff]
        %v233 = vld [vmem:[%s185 + $0x70] sm:$0xff]
        %v234 = vld [vmem:[%s185 + $0x78] sm:$0xff]
        %v235 = vld [vmem:[%s185 + $0x80] sm:$0xff]
        %v236 = vld [vmem:[%s185 + $0x88] sm:$0xff]
        %v237 = vld [vmem:[%s185 + $0x90] sm:$0xff]
        %v238 = vld [vmem:[%s185 + $0x98] sm:$0xff]
        %v239 = vld [vmem:[%s185 + $0xa0] sm:$0xff]
        %v240 = vld [vmem:[%s185 + $0xa8] sm:$0xff]
        %v241 = vld [vmem:[%s185 + $0xb0] sm:$0xff]
        %v242 = vld [vmem:[%s185 + $0xb8] sm:$0xff]
        %v243 = vld [vmem:[%s185 + $0xc0] sm:$0xff]
        %v244 = vld [vmem:[%s185 + $0xc8] sm:$0xff]
        %v245 = vld [vmem:[%s185 + $0xd0] sm:$0xff]
        %v246 = vld [vmem:[%s185 + $0xd8] sm:$0xff]
        %v247 = vld [vmem:[%s185 + $0xe0] sm:$0xff]
        %v248 = vld [vmem:[%s185 + $0xe8] sm:$0xff]
        %v249 = vld [vmem:[%s185 + $0xf0] sm:$0xff]
        %v250 = vld [vmem:[%s185 + $0xf8] sm:$0xff]
        %251 = vst [vmem:[#allocation2] sm:$0xff] 0.0
        %252 = vst [vmem:[#allocation2 + $0x8] sm:$0xff] 0.0
        %253 = vst [vmem:[#allocation2 + $0x10] sm:$0x3] 0.0
        %s254 = scalar_lea.vmem [#allocation2], 408
        %255 = vst [vmem:[%s254] sm:$0xff] 0.0
        %256 = vst [vmem:[%s254 + $0x8] sm:$0xff] 0.0
        %257 = vst [vmem:[%s254 + $0x10] sm:$0x3] 0.0
        %258 = vst [vmem:[#allocation2] sm:$0x1] 0.0
        %259 = vst [vmem:[#allocation2 + $0x18] sm:$0x1] 0.0
        %260 = vst [vmem:[#allocation2 + $0x30] sm:$0x1] 0.0
        %261 = vst [vmem:[#allocation2 + $0x48] sm:$0x1] 0.0
        %262 = vst [vmem:[#allocation2 + $0x60] sm:$0x1] 0.0
        %263 = vst [vmem:[#allocation2 + $0x78] sm:$0x1] 0.0
        %264 = vst [vmem:[#allocation2 + $0x90] sm:$0x1] 0.0
        %265 = vst [vmem:[#allocation2 + $0xa8] sm:$0x1] 0.0
        %266 = vst [vmem:[#allocation2 + $0xc0] sm:$0x1] 0.0
        %267 = vst [vmem:[#allocation2 + $0xd8] sm:$0x1] 0.0
        %268 = vst [vmem:[#allocation2 + $0xf0] sm:$0x1] 0.0
        %269 = vst [vmem:[#allocation2 + $0x108] sm:$0x1] 0.0
        %270 = vst [vmem:[#allocation2 + $0x120] sm:$0x1] 0.0
        %271 = vst [vmem:[#allocation2 + $0x138] sm:$0x1] 0.0
        %272 = vst [vmem:[#allocation2 + $0x150] sm:$0x1] 0.0
        %273 = vst [vmem:[#allocation2 + $0x168] sm:$0x1] 0.0
        %274 = vst [vmem:[#allocation2 + $0x180] sm:$0x1] 0.0
        %275 = vst [vmem:[#allocation2 + $0x198] sm:$0x1] 0.0
        %276 = vst [vmem:[#allocation2 + $0x11] sm:$0x1] 0.0
        %277 = vst [vmem:[#allocation2 + $0x29] sm:$0x1] 0.0
        %278 = vst [vmem:[#allocation2 + $0x41] sm:$0x1] 0.0
        %279 = vst [vmem:[#allocation2 + $0x59] sm:$0x1] 0.0
        %280 = vst [vmem:[#allocation2 + $0x71] sm:$0x1] 0.0
        %281 = vst [vmem:[#allocation2 + $0x89] sm:$0x1] 0.0
        %282 = vst [vmem:[#allocation2 + $0xa1] sm:$0x1] 0.0
        %283 = vst [vmem:[#allocation2 + $0xb9] sm:$0x1] 0.0
        %284 = vst [vmem:[#allocation2 + $0xd1] sm:$0x1] 0.0
        %285 = vst [vmem:[#allocation2 + $0xe9] sm:$0x1] 0.0
        %286 = vst [vmem:[#allocation2 + $0x101] sm:$0x1] 0.0
        %287 = vst [vmem:[#allocation2 + $0x119] sm:$0x1] 0.0
        %288 = vst [vmem:[#allocation2 + $0x131] sm:$0x1] 0.0
        %289 = vst [vmem:[#allocation2 + $0x149] sm:$0x1] 0.0
        %290 = vst [vmem:[#allocation2 + $0x161] sm:$0x1] 0.0
        %291 = vst [vmem:[#allocation2 + $0x179] sm:$0x1] 0.0
        %292 = vst [vmem:[#allocation2 + $0x191] sm:$0x1] 0.0
        %293 = vst [vmem:[#allocation2 + $0x1a9] sm:$0x1] 0.0
        %s294 = scalar_lea.vmem [#allocation2], 24
        %295 = vst [vmem:[%s294 + $0x1] sm:$0xff] %v219
        %296 = vst [vmem:[%s294 + $0x9] sm:$0xff] %v220
        %297 = vst [vmem:[%s294 + $0x19] sm:$0xff] %v221
        %298 = vst [vmem:[%s294 + $0x21] sm:$0xff] %v222
        %299 = vst [vmem:[%s294 + $0x31] sm:$0xff] %v223
        %300 = vst [vmem:[%s294 + $0x39] sm:$0xff] %v224
        %301 = vst [vmem:[%s294 + $0x49] sm:$0xff] %v225
        %302 = vst [vmem:[%s294 + $0x51] sm:$0xff] %v226
        %303 = vst [vmem:[%s294 + $0x61] sm:$0xff] %v227
        %304 = vst [vmem:[%s294 + $0x69] sm:$0xff] %v228
        %305 = vst [vmem:[%s294 + $0x79] sm:$0xff] %v229
        %306 = vst [vmem:[%s294 + $0x81] sm:$0xff] %v230
        %307 = vst [vmem:[%s294 + $0x91] sm:$0xff] %v231
        %308 = vst [vmem:[%s294 + $0x99] sm:$0xff] %v232
        %309 = vst [vmem:[%s294 + $0xa9] sm:$0xff] %v233
        %310 = vst [vmem:[%s294 + $0xb1] sm:$0xff] %v234
        %311 = vst [vmem:[%s294 + $0xc1] sm:$0xff] %v235
        %312 = vst [vmem:[%s294 + $0xc9] sm:$0xff] %v236
        %313 = vst [vmem:[%s294 + $0xd9] sm:$0xff] %v237
        %314 = vst [vmem:[%s294 + $0xe1] sm:$0xff] %v238
        %315 = vst [vmem:[%s294 + $0xf1] sm:$0xff] %v239
        %316 = vst [vmem:[%s294 + $0xf9] sm:$0xff] %v240
        %317 = vst [vmem:[%s294 + $0x109] sm:$0xff] %v241
        %318 = vst [vmem:[%s294 + $0x111] sm:$0xff] %v242
        %319 = vst [vmem:[%s294 + $0x121] sm:$0xff] %v243
        %320 = vst [vmem:[%s294 + $0x129] sm:$0xff] %v244
        %321 = vst [vmem:[%s294 + $0x139] sm:$0xff] %v245
        %322 = vst [vmem:[%s294 + $0x141] sm:$0xff] %v246
        %323 = vst [vmem:[%s294 + $0x151] sm:$0xff] %v247
        %324 = vst [vmem:[%s294 + $0x159] sm:$0xff] %v248
        %325 = vst [vmem:[%s294 + $0x169] sm:$0xff] %v249
        %326 = vst [vmem:[%s294 + $0x171] sm:$0xff] %v250
        %v327 = vld [vmem:[#allocation2] sm:$0xff]
        %v328 = vld [vmem:[#allocation2 + $0x8] sm:$0xff]
        %v329 = vld [vmem:[#allocation2 + $0x18] sm:$0xff]
        %v330 = vld [vmem:[#allocation2 + $0x20] sm:$0xff]
        %v331 = vld [vmem:[#allocation2 + $0x30] sm:$0xff]
        %v332 = vld [vmem:[#allocation2 + $0x38] sm:$0xff]
        %v333 = vld [vmem:[#allocation2 + $0x48] sm:$0xff]
        %v334 = vld [vmem:[#allocation2 + $0x50] sm:$0xff]
        %v335 = vld [vmem:[#allocation2 + $0x60] sm:$0xff]
        %v336 = vld [vmem:[#allocation2 + $0x68] sm:$0xff]
        %v337 = vld [vmem:[#allocation2 + $0x78] sm:$0xff]
        %v338 = vld [vmem:[#allocation2 + $0x80] sm:$0xff]
        %v339 = vld [vmem:[#allocation2 + $0x90] sm:$0xff]
        %v340 = vld [vmem:[#allocation2 + $0x98] sm:$0xff]
        %v341 = vld [vmem:[#allocation2 + $0xa8] sm:$0xff]
        %v342 = vld [vmem:[#allocation2 + $0xb0] sm:$0xff]
        %v343 = vld [vmem:[#allocation2 + $0xc0] sm:$0xff]
        %v344 = vld [vmem:[#allocation2 + $0xc8] sm:$0xff]
        %v345 = vld [vmem:[#allocation2 + $0xd8] sm:$0xff]
        %v346 = vld [vmem:[#allocation2 + $0xe0] sm:$0xff]
        %v347 = vld [vmem:[#allocation2 + $0xf0] sm:$0xff]
        %v348 = vld [vmem:[#allocation2 + $0xf8] sm:$0xff]
        %v349 = vld [vmem:[#allocation2 + $0x108] sm:$0xff]
        %v350 = vld [vmem:[#allocation2 + $0x110] sm:$0xff]
        %v351 = vld [vmem:[#allocation2 + $0x120] sm:$0xff]
        %v352 = vld [vmem:[#allocation2 + $0x128] sm:$0xff]
        %v353 = vld [vmem:[#allocation2 + $0x138] sm:$0xff]
        %v354 = vld [vmem:[#allocation2 + $0x140] sm:$0xff]
        %v355 = vld [vmem:[#allocation2 + $0x150] sm:$0xff]
        %v356 = vld [vmem:[#allocation2 + $0x158] sm:$0xff]
        %v357 = vld [vmem:[#allocation2 + $0x168] sm:$0xff]
        %v358 = vld [vmem:[#allocation2 + $0x170] sm:$0xff]
        %359 = vst [vmem:[#allocation3] sm:$0xff] %v327
        %360 = vst [vmem:[#allocation3 + $0x48] sm:$0xff] %v328
        %361 = vst [vmem:[#allocation3 + $0x90] sm:$0xff] %v329
        %362 = vst [vmem:[#allocation3 + $0xd8] sm:$0xff] %v330
        %363 = vst [vmem:[#allocation3 + $0x120] sm:$0xff] %v331
        %364 = vst [vmem:[#allocation3 + $0x168] sm:$0xff] %v332
        %365 = vst [vmem:[#allocation3 + $0x1b0] sm:$0xff] %v333
        %366 = vst [vmem:[#allocation3 + $0x1f8] sm:$0xff] %v334
        %367 = vst [vmem:[#allocation3 + $0x240] sm:$0xff] %v335
        %368 = vst [vmem:[#allocation3 + $0x288] sm:$0xff] %v336
        %369 = vst [vmem:[#allocation3 + $0x2d0] sm:$0xff] %v337
        %370 = vst [vmem:[#allocation3 + $0x318] sm:$0xff] %v338
        %371 = vst [vmem:[#allocation3 + $0x360] sm:$0xff] %v339
        %372 = vst [vmem:[#allocation3 + $0x3a8] sm:$0xff] %v340
        %373 = vst [vmem:[#allocation3 + $0x3f0] sm:$0xff] %v341
        %374 = vst [vmem:[#allocation3 + $0x438] sm:$0xff] %v342
        %375 = vst [vmem:[#allocation3 + $0x480] sm:$0xff] %v343
        %376 = vst [vmem:[#allocation3 + $0x4c8] sm:$0xff] %v344
        %377 = vst [vmem:[#allocation3 + $0x510] sm:$0xff] %v345
        %378 = vst [vmem:[#allocation3 + $0x558] sm:$0xff] %v346
        %379 = vst [vmem:[#allocation3 + $0x5a0] sm:$0xff] %v347
        %380 = vst [vmem:[#allocation3 + $0x5e8] sm:$0xff] %v348
        %381 = vst [vmem:[#allocation3 + $0x630] sm:$0xff] %v349
        %382 = vst [vmem:[#allocation3 + $0x678] sm:$0xff] %v350
        %383 = vst [vmem:[#allocation3 + $0x6c0] sm:$0xff] %v351
        %384 = vst [vmem:[#allocation3 + $0x708] sm:$0xff] %v352
        %385 = vst [vmem:[#allocation3 + $0x750] sm:$0xff] %v353
        %386 = vst [vmem:[#allocation3 + $0x798] sm:$0xff] %v354
        %387 = vst [vmem:[#allocation3 + $0x7e0] sm:$0xff] %v355
        %388 = vst [vmem:[#allocation3 + $0x828] sm:$0xff] %v356
        %389 = vst [vmem:[#allocation3 + $0x870] sm:$0xff] %v357
        %390 = vst [vmem:[#allocation3 + $0x8b8] sm:$0xff] %v358
        %v391 = vld [vmem:[#allocation2 + $0x1] sm:$0xff]
        %v392 = vld [vmem:[#allocation2 + $0x9] sm:$0xff]
        %v393 = vld [vmem:[#allocation2 + $0x19] sm:$0xff]
        %v394 = vld [vmem:[#allocation2 + $0x21] sm:$0xff]
        %v395 = vld [vmem:[#allocation2 + $0x31] sm:$0xff]
        %v396 = vld [vmem:[#allocation2 + $0x39] sm:$0xff]
        %v397 = vld [vmem:[#allocation2 + $0x49] sm:$0xff]
        %v398 = vld [vmem:[#allocation2 + $0x51] sm:$0xff]
        %v399 = vld [vmem:[#allocation2 + $0x61] sm:$0xff]
        %v400 = vld [vmem:[#allocation2 + $0x69] sm:$0xff]
        %v401 = vld [vmem:[#allocation2 + $0x79] sm:$0xff]
        %v402 = vld [vmem:[#allocation2 + $0x81] sm:$0xff]
        %v403 = vld [vmem:[#allocation2 + $0x91] sm:$0xff]
        %v404 = vld [vmem:[#allocation2 + $0x99] sm:$0xff]
        %v405 = vld [vmem:[#allocation2 + $0xa9] sm:$0xff]
        %v406 = vld [vmem:[#allocation2 + $0xb1] sm:$0xff]
        %v407 = vld [vmem:[#allocation2 + $0xc1] sm:$0xff]
        %v408 = vld [vmem:[#allocation2 + $0xc9] sm:$0xff]
        %v409 = vld [vmem:[#allocation2 + $0xd9] sm:$0xff]
        %v410 = vld [vmem:[#allocation2 + $0xe1] sm:$0xff]
        %v411 = vld [vmem:[#allocation2 + $0xf1] sm:$0xff]
        %v412 = vld [vmem:[#allocation2 + $0xf9] sm:$0xff]
        %v413 = vld [vmem:[#allocation2 + $0x109] sm:$0xff]
        %v414 = vld [vmem:[#allocation2 + $0x111] sm:$0xff]
        %v415 = vld [vmem:[#allocation2 + $0x121] sm:$0xff]
        %v416 = vld [vmem:[#allocation2 + $0x129] sm:$0xff]
        %v417 = vld [vmem:[#allocation2 + $0x139] sm:$0xff]
        %v418 = vld [vmem:[#allocation2 + $0x141] sm:$0xff]
        %v419 = vld [vmem:[#allocation2 + $0x151] sm:$0xff]
        %v420 = vld [vmem:[#allocation2 + $0x159] sm:$0xff]
        %v421 = vld [vmem:[#allocation2 + $0x169] sm:$0xff]
        %v422 = vld [vmem:[#allocation2 + $0x171] sm:$0xff]
        %423 = vst [vmem:[#allocation3 + $0x8] sm:$0xff] %v391
        %424 = vst [vmem:[#allocation3 + $0x50] sm:$0xff] %v392
        %425 = vst [vmem:[#allocation3 + $0x98] sm:$0xff] %v393
        %426 = vst [vmem:[#allocation3 + $0xe0] sm:$0xff] %v394
        %427 = vst [vmem:[#allocation3 + $0x128] sm:$0xff] %v395
        %428 = vst [vmem:[#allocation3 + $0x170] sm:$0xff] %v396
        %429 = vst [vmem:[#allocation3 + $0x1b8] sm:$0xff] %v397
        %430 = vst [vmem:[#allocation3 + $0x200] sm:$0xff] %v398
        %431 = vst [vmem:[#allocation3 + $0x248] sm:$0xff] %v399
        %432 = vst [vmem:[#allocation3 + $0x290] sm:$0xff] %v400
        %433 = vst [vmem:[#allocation3 + $0x2d8] sm:$0xff] %v401
        %434 = vst [vmem:[#allocation3 + $0x320] sm:$0xff] %v402
        %435 = vst [vmem:[#allocation3 + $0x368] sm:$0xff] %v403
        %436 = vst [vmem:[#allocation3 + $0x3b0] sm:$0xff] %v404
        %437 = vst [vmem:[#allocation3 + $0x3f8] sm:$0xff] %v405
        %438 = vst [vmem:[#allocation3 + $0x440] sm:$0xff] %v406
        %439 = vst [vmem:[#allocation3 + $0x488] sm:$0xff] %v407
        %440 = vst [vmem:[#allocation3 + $0x4d0] sm:$0xff] %v408
        %441 = vst [vmem:[#allocation3 + $0x518] sm:$0xff] %v409
        %442 = vst [vmem:[#allocation3 + $0x560] sm:$0xff] %v410
        %443 = vst [vmem:[#allocation3 + $0x5a8] sm:$0xff] %v411
        %444 = vst [vmem:[#allocation3 + $0x5f0] sm:$0xff] %v412
        %445 = vst [vmem:[#allocation3 + $0x638] sm:$0xff] %v413
        %446 = vst [vmem:[#allocation3 + $0x680] sm:$0xff] %v414
        %447 = vst [vmem:[#allocation3 + $0x6c8] sm:$0xff] %v415
        %448 = vst [vmem:[#allocation3 + $0x710] sm:$0xff] %v416
        %449 = vst [vmem:[#allocation3 + $0x758] sm:$0xff] %v417
        %450 = vst [vmem:[#allocation3 + $0x7a0] sm:$0xff] %v418
        %451 = vst [vmem:[#allocation3 + $0x7e8] sm:$0xff] %v419
        %452 = vst [vmem:[#allocation3 + $0x830] sm:$0xff] %v420
        %453 = vst [vmem:[#allocation3 + $0x878] sm:$0xff] %v421
        %454 = vst [vmem:[#allocation3 + $0x8c0] sm:$0xff] %v422
        %v455 = vld [vmem:[#allocation2 + $0x2] sm:$0xff]
        %v456 = vld [vmem:[#allocation2 + $0xa] sm:$0xff]
        %v457 = vld [vmem:[#allocation2 + $0x1a] sm:$0xff]
        %v458 = vld [vmem:[#allocation2 + $0x22] sm:$0xff]
        %v459 = vld [vmem:[#allocation2 + $0x32] sm:$0xff]
        %v460 = vld [vmem:[#allocation2 + $0x3a] sm:$0xff]
        %v461 = vld [vmem:[#allocation2 + $0x4a] sm:$0xff]
        %v462 = vld [vmem:[#allocation2 + $0x52] sm:$0xff]
        %v463 = vld [vmem:[#allocation2 + $0x62] sm:$0xff]
        %v464 = vld [vmem:[#allocation2 + $0x6a] sm:$0xff]
        %v465 = vld [vmem:[#allocation2 + $0x7a] sm:$0xff]
        %v466 = vld [vmem:[#allocation2 + $0x82] sm:$0xff]
        %v467 = vld [vmem:[#allocation2 + $0x92] sm:$0xff]
        %v468 = vld [vmem:[#allocation2 + $0x9a] sm:$0xff]
        %v469 = vld [vmem:[#allocation2 + $0xaa] sm:$0xff]
        %v470 = vld [vmem:[#allocation2 + $0xb2] sm:$0xff]
        %v471 = vld [vmem:[#allocation2 + $0xc2] sm:$0xff]
        %v472 = vld [vmem:[#allocation2 + $0xca] sm:$0xff]
        %v473 = vld [vmem:[#allocation2 + $0xda] sm:$0xff]
        %v474 = vld [vmem:[#allocation2 + $0xe2] sm:$0xff]
        %v475 = vld [vmem:[#allocation2 + $0xf2] sm:$0xff]
        %v476 = vld [vmem:[#allocation2 + $0xfa] sm:$0xff]
        %v477 = vld [vmem:[#allocation2 + $0x10a] sm:$0xff]
        %v478 = vld [vmem:[#allocation2 + $0x112] sm:$0xff]
        %v479 = vld [vmem:[#allocation2 + $0x122] sm:$0xff]
        %v480 = vld [vmem:[#allocation2 + $0x12a] sm:$0xff]
        %v481 = vld [vmem:[#allocation2 + $0x13a] sm:$0xff]
        %v482 = vld [vmem:[#allocation2 + $0x142] sm:$0xff]
        %v483 = vld [vmem:[#allocation2 + $0x152] sm:$0xff]
        %v484 = vld [vmem:[#allocation2 + $0x15a] sm:$0xff]
        %v485 = vld [vmem:[#allocation2 + $0x16a] sm:$0xff]
        %v486 = vld [vmem:[#allocation2 + $0x172] sm:$0xff]
        %487 = vst [vmem:[#allocation3 + $0x10] sm:$0xff] %v455
        %488 = vst [vmem:[#allocation3 + $0x58] sm:$0xff] %v456
        %489 = vst [vmem:[#allocation3 + $0xa0] sm:$0xff] %v457
        %490 = vst [vmem:[#allocation3 + $0xe8] sm:$0xff] %v458
        %491 = vst [vmem:[#allocation3 + $0x130] sm:$0xff] %v459
        %492 = vst [vmem:[#allocation3 + $0x178] sm:$0xff] %v460
        %493 = vst [vmem:[#allocation3 + $0x1c0] sm:$0xff] %v461
        %494 = vst [vmem:[#allocation3 + $0x208] sm:$0xff] %v462
        %495 = vst [vmem:[#allocation3 + $0x250] sm:$0xff] %v463
        %496 = vst [vmem:[#allocation3 + $0x298] sm:$0xff] %v464
        %497 = vst [vmem:[#allocation3 + $0x2e0] sm:$0xff] %v465
        %498 = vst [vmem:[#allocation3 + $0x328] sm:$0xff] %v466
        %499 = vst [vmem:[#allocation3 + $0x370] sm:$0xff] %v467
        %500 = vst [vmem:[#allocation3 + $0x3b8] sm:$0xff] %v468
        %501 = vst [vmem:[#allocation3 + $0x400] sm:$0xff] %v469
        %502 = vst [vmem:[#allocation3 + $0x448] sm:$0xff] %v470
        %503 = vst [vmem:[#allocation3 + $0x490] sm:$0xff] %v471
        %504 = vst [vmem:[#allocation3 + $0x4d8] sm:$0xff] %v472
        %505 = vst [vmem:[#allocation3 + $0x520] sm:$0xff] %v473
        %506 = vst [vmem:[#allocation3 + $0x568] sm:$0xff] %v474
        %507 = vst [vmem:[#allocation3 + $0x5b0] sm:$0xff] %v475
        %508 = vst [vmem:[#allocation3 + $0x5f8] sm:$0xff] %v476
        %509 = vst [vmem:[#allocation3 + $0x640] sm:$0xff] %v477
        %510 = vst [vmem:[#allocation3 + $0x688] sm:$0xff] %v478
        %511 = vst [vmem:[#allocation3 + $0x6d0] sm:$0xff] %v479
        %512 = vst [vmem:[#allocation3 + $0x718] sm:$0xff] %v480
        %513 = vst [vmem:[#allocation3 + $0x760] sm:$0xff] %v481
        %514 = vst [vmem:[#allocation3 + $0x7a8] sm:$0xff] %v482
        %515 = vst [vmem:[#allocation3 + $0x7f0] sm:$0xff] %v483
        %516 = vst [vmem:[#allocation3 + $0x838] sm:$0xff] %v484
        %517 = vst [vmem:[#allocation3 + $0x880] sm:$0xff] %v485
        %518 = vst [vmem:[#allocation3 + $0x8c8] sm:$0xff] %v486
        %v519 = vld [vmem:[%s294] sm:$0xff]
        %v520 = vld [vmem:[%s294 + $0x8] sm:$0xff]
        %v521 = vld [vmem:[%s294 + $0x18] sm:$0xff]
        %v522 = vld [vmem:[%s294 + $0x20] sm:$0xff]
        %v523 = vld [vmem:[%s294 + $0x30] sm:$0xff]
        %v524 = vld [vmem:[%s294 + $0x38] sm:$0xff]
        %v525 = vld [vmem:[%s294 + $0x48] sm:$0xff]
        %v526 = vld [vmem:[%s294 + $0x50] sm:$0xff]
        %v527 = vld [vmem:[%s294 + $0x60] sm:$0xff]
        %v528 = vld [vmem:[%s294 + $0x68] sm:$0xff]
        %v529 = vld [vmem:[%s294 + $0x78] sm:$0xff]
        %v530 = vld [vmem:[%s294 + $0x80] sm:$0xff]
        %v531 = vld [vmem:[%s294 + $0x90] sm:$0xff]
        %v532 = vld [vmem:[%s294 + $0x98] sm:$0xff]
        %v533 = vld [vmem:[%s294 + $0xa8] sm:$0xff]
        %v534 = vld [vmem:[%s294 + $0xb0] sm:$0xff]
        %v535 = vld [vmem:[%s294 + $0xc0] sm:$0xff]
        %v536 = vld [vmem:[%s294 + $0xc8] sm:$0xff]
        %v537 = vld [vmem:[%s294 + $0xd8] sm:$0xff]
        %v538 = vld [vmem:[%s294 + $0xe0] sm:$0xff]
        %v539 = vld [vmem:[%s294 + $0xf0] sm:$0xff]
        %v540 = vld [vmem:[%s294 + $0xf8] sm:$0xff]
        %v541 = vld [vmem:[%s294 + $0x108] sm:$0xff]
        %v542 = vld [vmem:[%s294 + $0x110] sm:$0xff]
        %v543 = vld [vmem:[%s294 + $0x120] sm:$0xff]
        %v544 = vld [vmem:[%s294 + $0x128] sm:$0xff]
        %v545 = vld [vmem:[%s294 + $0x138] sm:$0xff]
        %v546 = vld [vmem:[%s294 + $0x140] sm:$0xff]
        %v547 = vld [vmem:[%s294 + $0x150] sm:$0xff]
        %v548 = vld [vmem:[%s294 + $0x158] sm:$0xff]
        %v549 = vld [vmem:[%s294 + $0x168] sm:$0xff]
        %v550 = vld [vmem:[%s294 + $0x170] sm:$0xff]
        %551 = vst [vmem:[#allocation3 + $0x18] sm:$0xff] %v519
        %552 = vst [vmem:[#allocation3 + $0x60] sm:$0xff] %v520
        %553 = vst [vmem:[#allocation3 + $0xa8] sm:$0xff] %v521
        %554 = vst [vmem:[#allocation3 + $0xf0] sm:$0xff] %v522
        %555 = vst [vmem:[#allocation3 + $0x138] sm:$0xff] %v523
        %556 = vst [vmem:[#allocation3 + $0x180] sm:$0xff] %v524
        %557 = vst [vmem:[#allocation3 + $0x1c8] sm:$0xff] %v525
        %558 = vst [vmem:[#allocation3 + $0x210] sm:$0xff] %v526
        %559 = vst [vmem:[#allocation3 + $0x258] sm:$0xff] %v527
        %560 = vst [vmem:[#allocation3 + $0x2a0] sm:$0xff] %v528
        %561 = vst [vmem:[#allocation3 + $0x2e8] sm:$0xff] %v529
        %562 = vst [vmem:[#allocation3 + $0x330] sm:$0xff] %v530
        %563 = vst [vmem:[#allocation3 + $0x378] sm:$0xff] %v531
        %564 = vst [vmem:[#allocation3 + $0x3c0] sm:$0xff] %v532
        %565 = vst [vmem:[#allocation3 + $0x408] sm:$0xff] %v533
        %566 = vst [vmem:[#allocation3 + $0x450] sm:$0xff] %v534
        %567 = vst [vmem:[#allocation3 + $0x498] sm:$0xff] %v535
        %568 = vst [vmem:[#allocation3 + $0x4e0] sm:$0xff] %v536
        %569 = vst [vmem:[#allocation3 + $0x528] sm:$0xff] %v537
        %570 = vst [vmem:[#allocation3 + $0x570] sm:$0xff] %v538
        %571 = vst [vmem:[#allocation3 + $0x5b8] sm:$0xff] %v539
        %572 = vst [vmem:[#allocation3 + $0x600] sm:$0xff] %v540
        %573 = vst [vmem:[#allocation3 + $0x648] sm:$0xff] %v541
        %574 = vst [vmem:[#allocation3 + $0x690] sm:$0xff] %v542
        %575 = vst [vmem:[#allocation3 + $0x6d8] sm:$0xff] %v543
        %576 = vst [vmem:[#allocation3 + $0x720] sm:$0xff] %v544
        %577 = vst [vmem:[#allocation3 + $0x768] sm:$0xff] %v545
        %578 = vst [vmem:[#allocation3 + $0x7b0] sm:$0xff] %v546
        %579 = vst [vmem:[#allocation3 + $0x7f8] sm:$0xff] %v547
        %580 = vst [vmem:[#allocation3 + $0x840] sm:$0xff] %v548
        %581 = vst [vmem:[#allocation3 + $0x888] sm:$0xff] %v549
        %582 = vst [vmem:[#allocation3 + $0x8d0] sm:$0xff] %v550
        %v583 = vld [vmem:[%s294 + $0x1] sm:$0xff]
        %v584 = vld [vmem:[%s294 + $0x9] sm:$0xff]
        %v585 = vld [vmem:[%s294 + $0x19] sm:$0xff]
        %v586 = vld [vmem:[%s294 + $0x21] sm:$0xff]
        %v587 = vld [vmem:[%s294 + $0x31] sm:$0xff]
        %v588 = vld [vmem:[%s294 + $0x39] sm:$0xff]
        %v589 = vld [vmem:[%s294 + $0x49] sm:$0xff]
        %v590 = vld [vmem:[%s294 + $0x51] sm:$0xff]
        %v591 = vld [vmem:[%s294 + $0x61] sm:$0xff]
        %v592 = vld [vmem:[%s294 + $0x69] sm:$0xff]
        %v593 = vld [vmem:[%s294 + $0x79] sm:$0xff]
        %v594 = vld [vmem:[%s294 + $0x81] sm:$0xff]
        %v595 = vld [vmem:[%s294 + $0x91] sm:$0xff]
        %v596 = vld [vmem:[%s294 + $0x99] sm:$0xff]
        %v597 = vld [vmem:[%s294 + $0xa9] sm:$0xff]
        %v598 = vld [vmem:[%s294 + $0xb1] sm:$0xff]
        %v599 = vld [vmem:[%s294 + $0xc1] sm:$0xff]
        %v600 = vld [vmem:[%s294 + $0xc9] sm:$0xff]
        %v601 = vld [vmem:[%s294 + $0xd9] sm:$0xff]
        %v602 = vld [vmem:[%s294 + $0xe1] sm:$0xff]
        %v603 = vld [vmem:[%s294 + $0xf1] sm:$0xff]
        %v604 = vld [vmem:[%s294 + $0xf9] sm:$0xff]
        %v605 = vld [vmem:[%s294 + $0x109] sm:$0xff]
        %v606 = vld [vmem:[%s294 + $0x111] sm:$0xff]
        %v607 = vld [vmem:[%s294 + $0x121] sm:$0xff]
        %v608 = vld [vmem:[%s294 + $0x129] sm:$0xff]
        %v609 = vld [vmem:[%s294 + $0x139] sm:$0xff]
        %v610 = vld [vmem:[%s294 + $0x141] sm:$0xff]
        %v611 = vld [vmem:[%s294 + $0x151] sm:$0xff]
        %v612 = vld [vmem:[%s294 + $0x159] sm:$0xff]
        %v613 = vld [vmem:[%s294 + $0x169] sm:$0xff]
        %v614 = vld [vmem:[%s294 + $0x171] sm:$0xff]
        %615 = vst [vmem:[#allocation3 + $0x20] sm:$0xff] %v583
        %616 = vst [vmem:[#allocation3 + $0x68] sm:$0xff] %v584
        %617 = vst [vmem:[#allocation3 + $0xb0] sm:$0xff] %v585
        %618 = vst [vmem:[#allocation3 + $0xf8] sm:$0xff] %v586
        %619 = vst [vmem:[#allocation3 + $0x140] sm:$0xff] %v587
        %620 = vst [vmem:[#allocation3 + $0x188] sm:$0xff] %v588
        %621 = vst [vmem:[#allocation3 + $0x1d0] sm:$0xff] %v589
        %622 = vst [vmem:[#allocation3 + $0x218] sm:$0xff] %v590
        %623 = vst [vmem:[#allocation3 + $0x260] sm:$0xff] %v591
        %624 = vst [vmem:[#allocation3 + $0x2a8] sm:$0xff] %v592
        %625 = vst [vmem:[#allocation3 + $0x2f0] sm:$0xff] %v593
        %626 = vst [vmem:[#allocation3 + $0x338] sm:$0xff] %v594
        %627 = vst [vmem:[#allocation3 + $0x380] sm:$0xff] %v595
        %628 = vst [vmem:[#allocation3 + $0x3c8] sm:$0xff] %v596
        %629 = vst [vmem:[#allocation3 + $0x410] sm:$0xff] %v597
        %630 = vst [vmem:[#allocation3 + $0x458] sm:$0xff] %v598
        %631 = vst [vmem:[#allocation3 + $0x4a0] sm:$0xff] %v599
        %632 = vst [vmem:[#allocation3 + $0x4e8] sm:$0xff] %v600
        %633 = vst [vmem:[#allocation3 + $0x530] sm:$0xff] %v601
        %634 = vst [vmem:[#allocation3 + $0x578] sm:$0xff] %v602
        %635 = vst [vmem:[#allocation3 + $0x5c0] sm:$0xff] %v603
        %636 = vst [vmem:[#allocation3 + $0x608] sm:$0xff] %v604
        %637 = vst [vmem:[#allocation3 + $0x650] sm:$0xff] %v605
        %638 = vst [vmem:[#allocation3 + $0x698] sm:$0xff] %v606
        %639 = vst [vmem:[#allocation3 + $0x6e0] sm:$0xff] %v607
        %640 = vst [vmem:[#allocation3 + $0x728] sm:$0xff] %v608
        %641 = vst [vmem:[#allocation3 + $0x770] sm:$0xff] %v609
        %642 = vst [vmem:[#allocation3 + $0x7b8] sm:$0xff] %v610
        %643 = vst [vmem:[#allocation3 + $0x800] sm:$0xff] %v611
        %644 = vst [vmem:[#allocation3 + $0x848] sm:$0xff] %v612
        %645 = vst [vmem:[#allocation3 + $0x890] sm:$0xff] %v613
        %646 = vst [vmem:[#allocation3 + $0x8d8] sm:$0xff] %v614
        %v647 = vld [vmem:[%s294 + $0x2] sm:$0xff]
        %v648 = vld [vmem:[%s294 + $0xa] sm:$0xff]
        %v649 = vld [vmem:[%s294 + $0x1a] sm:$0xff]
        %v650 = vld [vmem:[%s294 + $0x22] sm:$0xff]
        %v651 = vld [vmem:[%s294 + $0x32] sm:$0xff]
        %v652 = vld [vmem:[%s294 + $0x3a] sm:$0xff]
        %v653 = vld [vmem:[%s294 + $0x4a] sm:$0xff]
        %v654 = vld [vmem:[%s294 + $0x52] sm:$0xff]
        %v655 = vld [vmem:[%s294 + $0x62] sm:$0xff]
        %v656 = vld [vmem:[%s294 + $0x6a] sm:$0xff]
        %v657 = vld [vmem:[%s294 + $0x7a] sm:$0xff]
        %v658 = vld [vmem:[%s294 + $0x82] sm:$0xff]
        %v659 = vld [vmem:[%s294 + $0x92] sm:$0xff]
        %v660 = vld [vmem:[%s294 + $0x9a] sm:$0xff]
        %v661 = vld [vmem:[%s294 + $0xaa] sm:$0xff]
        %v662 = vld [vmem:[%s294 + $0xb2] sm:$0xff]
        %v663 = vld [vmem:[%s294 + $0xc2] sm:$0xff]
        %v664 = vld [vmem:[%s294 + $0xca] sm:$0xff]
        %v665 = vld [vmem:[%s294 + $0xda] sm:$0xff]
        %v666 = vld [vmem:[%s294 + $0xe2] sm:$0xff]
        %v667 = vld [vmem:[%s294 + $0xf2] sm:$0xff]
        %v668 = vld [vmem:[%s294 + $0xfa] sm:$0xff]
        %v669 = vld [vmem:[%s294 + $0x10a] sm:$0xff]
        %v670 = vld [vmem:[%s294 + $0x112] sm:$0xff]
        %v671 = vld [vmem:[%s294 + $0x122] sm:$0xff]
        %v672 = vld [vmem:[%s294 + $0x12a] sm:$0xff]
        %v673 = vld [vmem:[%s294 + $0x13a] sm:$0xff]
        %v674 = vld [vmem:[%s294 + $0x142] sm:$0xff]
        %v675 = vld [vmem:[%s294 + $0x152] sm:$0xff]
        %v676 = vld [vmem:[%s294 + $0x15a] sm:$0xff]
        %v677 = vld [vmem:[%s294 + $0x16a] sm:$0xff]
        %v678 = vld [vmem:[%s294 + $0x172] sm:$0xff]
        %679 = vst [vmem:[#allocation3 + $0x28] sm:$0xff] %v647
        %680 = vst [vmem:[#allocation3 + $0x70] sm:$0xff] %v648
        %681 = vst [vmem:[#allocation3 + $0xb8] sm:$0xff] %v649
        %682 = vst [vmem:[#allocation3 + $0x100] sm:$0xff] %v650
        %683 = vst [vmem:[#allocation3 + $0x148] sm:$0xff] %v651
        %684 = vst [vmem:[#allocation3 + $0x190] sm:$0xff] %v652
        %685 = vst [vmem:[#allocation3 + $0x1d8] sm:$0xff] %v653
        %686 = vst [vmem:[#allocation3 + $0x220] sm:$0xff] %v654
        %687 = vst [vmem:[#allocation3 + $0x268] sm:$0xff] %v655
        %688 = vst [vmem:[#allocation3 + $0x2b0] sm:$0xff] %v656
        %689 = vst [vmem:[#allocation3 + $0x2f8] sm:$0xff] %v657
        %690 = vst [vmem:[#allocation3 + $0x340] sm:$0xff] %v658
        %691 = vst [vmem:[#allocation3 + $0x388] sm:$0xff] %v659
        %692 = vst [vmem:[#allocation3 + $0x3d0] sm:$0xff] %v660
        %693 = vst [vmem:[#allocation3 + $0x418] sm:$0xff] %v661
        %694 = vst [vmem:[#allocation3 + $0x460] sm:$0xff] %v662
        %695 = vst [vmem:[#allocation3 + $0x4a8] sm:$0xff] %v663
        %696 = vst [vmem:[#allocation3 + $0x4f0] sm:$0xff] %v664
        %697 = vst [vmem:[#allocation3 + $0x538] sm:$0xff] %v665
        %698 = vst [vmem:[#allocation3 + $0x580] sm:$0xff] %v666
        %699 = vst [vmem:[#allocation3 + $0x5c8] sm:$0xff] %v667
        %700 = vst [vmem:[#allocation3 + $0x610] sm:$0xff] %v668
        %701 = vst [vmem:[#allocation3 + $0x658] sm:$0xff] %v669
        %702 = vst [vmem:[#allocation3 + $0x6a0] sm:$0xff] %v670
        %703 = vst [vmem:[#allocation3 + $0x6e8] sm:$0xff] %v671
        %704 = vst [vmem:[#allocation3 + $0x730] sm:$0xff] %v672
        %705 = vst [vmem:[#allocation3 + $0x778] sm:$0xff] %v673
        %706 = vst [vmem:[#allocation3 + $0x7c0] sm:$0xff] %v674
        %707 = vst [vmem:[#allocation3 + $0x808] sm:$0xff] %v675
        %708 = vst [vmem:[#allocation3 + $0x850] sm:$0xff] %v676
        %709 = vst [vmem:[#allocation3 + $0x898] sm:$0xff] %v677
        %710 = vst [vmem:[#allocation3 + $0x8e0] sm:$0xff] %v678
        %s711 = scalar_lea.vmem [#allocation2], 48
        %v712 = vld [vmem:[%s711] sm:$0xff]
        %v713 = vld [vmem:[%s711 + $0x8] sm:$0xff]
        %v714 = vld [vmem:[%s711 + $0x18] sm:$0xff]
        %v715 = vld [vmem:[%s711 + $0x20] sm:$0xff]
        %v716 = vld [vmem:[%s711 + $0x30] sm:$0xff]
        %v717 = vld [vmem:[%s711 + $0x38] sm:$0xff]
        %v718 = vld [vmem:[%s711 + $0x48] sm:$0xff]
        %v719 = vld [vmem:[%s711 + $0x50] sm:$0xff]
        %v720 = vld [vmem:[%s711 + $0x60] sm:$0xff]
        %v721 = vld [vmem:[%s711 + $0x68] sm:$0xff]
        %v722 = vld [vmem:[%s711 + $0x78] sm:$0xff]
        %v723 = vld [vmem:[%s711 + $0x80] sm:$0xff]
        %v724 = vld [vmem:[%s711 + $0x90] sm:$0xff]
        %v725 = vld [vmem:[%s711 + $0x98] sm:$0xff]
        %v726 = vld [vmem:[%s711 + $0xa8] sm:$0xff]
        %v727 = vld [vmem:[%s711 + $0xb0] sm:$0xff]
        %v728 = vld [vmem:[%s711 + $0xc0] sm:$0xff]
        %v729 = vld [vmem:[%s711 + $0xc8] sm:$0xff]
        %v730 = vld [vmem:[%s711 + $0xd8] sm:$0xff]
        %v731 = vld [vmem:[%s711 + $0xe0] sm:$0xff]
        %v732 = vld [vmem:[%s711 + $0xf0] sm:$0xff]
        %v733 = vld [vmem:[%s711 + $0xf8] sm:$0xff]
        %v734 = vld [vmem:[%s711 + $0x108] sm:$0xff]
        %v735 = vld [vmem:[%s711 + $0x110] sm:$0xff]
        %v736 = vld [vmem:[%s711 + $0x120] sm:$0xff]
        %v737 = vld [vmem:[%s711 + $0x128] sm:$0xff]
        %v738 = vld [vmem:[%s711 + $0x138] sm:$0xff]
        %v739 = vld [vmem:[%s711 + $0x140] sm:$0xff]
        %v740 = vld [vmem:[%s711 + $0x150] sm:$0xff]
        %v741 = vld [vmem:[%s711 + $0x158] sm:$0xff]
        %v742 = vld [vmem:[%s711 + $0x168] sm:$0xff]
        %v743 = vld [vmem:[%s711 + $0x170] sm:$0xff]
        %744 = vst [vmem:[#allocation3 + $0x30] sm:$0xff] %v712
        %745 = vst [vmem:[#allocation3 + $0x78] sm:$0xff] %v713
        %746 = vst [vmem:[#allocation3 + $0xc0] sm:$0xff] %v714
        %747 = vst [vmem:[#allocation3 + $0x108] sm:$0xff] %v715
        %748 = vst [vmem:[#allocation3 + $0x150] sm:$0xff] %v716
        %749 = vst [vmem:[#allocation3 + $0x198] sm:$0xff] %v717
        %750 = vst [vmem:[#allocation3 + $0x1e0] sm:$0xff] %v718
        %751 = vst [vmem:[#allocation3 + $0x228] sm:$0xff] %v719
        %752 = vst [vmem:[#allocation3 + $0x270] sm:$0xff] %v720
        %753 = vst [vmem:[#allocation3 + $0x2b8] sm:$0xff] %v721
        %754 = vst [vmem:[#allocation3 + $0x300] sm:$0xff] %v722
        %755 = vst [vmem:[#allocation3 + $0x348] sm:$0xff] %v723
        %756 = vst [vmem:[#allocation3 + $0x390] sm:$0xff] %v724
        %757 = vst [vmem:[#allocation3 + $0x3d8] sm:$0xff] %v725
        %758 = vst [vmem:[#allocation3 + $0x420] sm:$0xff] %v726
        %759 = vst [vmem:[#allocation3 + $0x468] sm:$0xff] %v727
        %760 = vst [vmem:[#allocation3 + $0x4b0] sm:$0xff] %v728
        %761 = vst [vmem:[#allocation3 + $0x4f8] sm:$0xff] %v729
        %762 = vst [vmem:[#allocation3 + $0x540] sm:$0xff] %v730
        %763 = vst [vmem:[#allocation3 + $0x588] sm:$0xff] %v731
        %764 = vst [vmem:[#allocation3 + $0x5d0] sm:$0xff] %v732
        %765 = vst [vmem:[#allocation3 + $0x618] sm:$0xff] %v733
        %766 = vst [vmem:[#allocation3 + $0x660] sm:$0xff] %v734
        %767 = vst [vmem:[#allocation3 + $0x6a8] sm:$0xff] %v735
        %768 = vst [vmem:[#allocation3 + $0x6f0] sm:$0xff] %v736
        %769 = vst [vmem:[#allocation3 + $0x738] sm:$0xff] %v737
        %770 = vst [vmem:[#allocation3 + $0x780] sm:$0xff] %v738
        %771 = vst [vmem:[#allocation3 + $0x7c8] sm:$0xff] %v739
        %772 = vst [vmem:[#allocation3 + $0x810] sm:$0xff] %v740
        %773 = vst [vmem:[#allocation3 + $0x858] sm:$0xff] %v741
        %774 = vst [vmem:[#allocation3 + $0x8a0] sm:$0xff] %v742
        %775 = vst [vmem:[#allocation3 + $0x8e8] sm:$0xff] %v743
        %v776 = vld [vmem:[%s711 + $0x1] sm:$0xff]
        %v777 = vld [vmem:[%s711 + $0x9] sm:$0xff]
        %v778 = vld [vmem:[%s711 + $0x19] sm:$0xff]
        %v779 = vld [vmem:[%s711 + $0x21] sm:$0xff]
        %v780 = vld [vmem:[%s711 + $0x31] sm:$0xff]
        %v781 = vld [vmem:[%s711 + $0x39] sm:$0xff]
        %v782 = vld [vmem:[%s711 + $0x49] sm:$0xff]
        %v783 = vld [vmem:[%s711 + $0x51] sm:$0xff]
        %v784 = vld [vmem:[%s711 + $0x61] sm:$0xff]
        %v785 = vld [vmem:[%s711 + $0x69] sm:$0xff]
        %v786 = vld [vmem:[%s711 + $0x79] sm:$0xff]
        %v787 = vld [vmem:[%s711 + $0x81] sm:$0xff]
        %v788 = vld [vmem:[%s711 + $0x91] sm:$0xff]
        %v789 = vld [vmem:[%s711 + $0x99] sm:$0xff]
        %v790 = vld [vmem:[%s711 + $0xa9] sm:$0xff]
        %v791 = vld [vmem:[%s711 + $0xb1] sm:$0xff]
        %v792 = vld [vmem:[%s711 + $0xc1] sm:$0xff]
        %v793 = vld [vmem:[%s711 + $0xc9] sm:$0xff]
        %v794 = vld [vmem:[%s711 + $0xd9] sm:$0xff]
        %v795 = vld [vmem:[%s711 + $0xe1] sm:$0xff]
        %v796 = vld [vmem:[%s711 + $0xf1] sm:$0xff]
        %v797 = vld [vmem:[%s711 + $0xf9] sm:$0xff]
        %v798 = vld [vmem:[%s711 + $0x109] sm:$0xff]
        %v799 = vld [vmem:[%s711 + $0x111] sm:$0xff]
        %v800 = vld [vmem:[%s711 + $0x121] sm:$0xff]
        %v801 = vld [vmem:[%s711 + $0x129] sm:$0xff]
        %v802 = vld [vmem:[%s711 + $0x139] sm:$0xff]
        %v803 = vld [vmem:[%s711 + $0x141] sm:$0xff]
        %v804 = vld [vmem:[%s711 + $0x151] sm:$0xff]
        %v805 = vld [vmem:[%s711 + $0x159] sm:$0xff]
        %v806 = vld [vmem:[%s711 + $0x169] sm:$0xff]
        %v807 = vld [vmem:[%s711 + $0x171] sm:$0xff]
        %808 = vst [vmem:[#allocation3 + $0x38] sm:$0xff] %v776
        %809 = vst [vmem:[#allocation3 + $0x80] sm:$0xff] %v777
        %810 = vst [vmem:[#allocation3 + $0xc8] sm:$0xff] %v778
        %811 = vst [vmem:[#allocation3 + $0x110] sm:$0xff] %v779
        %812 = vst [vmem:[#allocation3 + $0x158] sm:$0xff] %v780
        %813 = vst [vmem:[#allocation3 + $0x1a0] sm:$0xff] %v781
        %814 = vst [vmem:[#allocation3 + $0x1e8] sm:$0xff] %v782
        %815 = vst [vmem:[#allocation3 + $0x230] sm:$0xff] %v783
        %816 = vst [vmem:[#allocation3 + $0x278] sm:$0xff] %v784
        %817 = vst [vmem:[#allocation3 + $0x2c0] sm:$0xff] %v785
        %818 = vst [vmem:[#allocation3 + $0x308] sm:$0xff] %v786
        %819 = vst [vmem:[#allocation3 + $0x350] sm:$0xff] %v787
        %820 = vst [vmem:[#allocation3 + $0x398] sm:$0xff] %v788
        %821 = vst [vmem:[#allocation3 + $0x3e0] sm:$0xff] %v789
        %822 = vst [vmem:[#allocation3 + $0x428] sm:$0xff] %v790
        %823 = vst [vmem:[#allocation3 + $0x470] sm:$0xff] %v791
        %824 = vst [vmem:[#allocation3 + $0x4b8] sm:$0xff] %v792
        %825 = vst [vmem:[#allocation3 + $0x500] sm:$0xff] %v793
        %826 = vst [vmem:[#allocation3 + $0x548] sm:$0xff] %v794
        %827 = vst [vmem:[#allocation3 + $0x590] sm:$0xff] %v795
        %828 = vst [vmem:[#allocation3 + $0x5d8] sm:$0xff] %v796
        %829 = vst [vmem:[#allocation3 + $0x620] sm:$0xff] %v797
        %830 = vst [vmem:[#allocation3 + $0x668] sm:$0xff] %v798
        %831 = vst [vmem:[#allocation3 + $0x6b0] sm:$0xff] %v799
        %832 = vst [vmem:[#allocation3 + $0x6f8] sm:$0xff] %v800
        %833 = vst [vmem:[#allocation3 + $0x740] sm:$0xff] %v801
        %834 = vst [vmem:[#allocation3 + $0x788] sm:$0xff] %v802
        %835 = vst [vmem:[#allocation3 + $0x7d0] sm:$0xff] %v803
        %836 = vst [vmem:[#allocation3 + $0x818] sm:$0xff] %v804
        %837 = vst [vmem:[#allocation3 + $0x860] sm:$0xff] %v805
        %838 = vst [vmem:[#allocation3 + $0x8a8] sm:$0xff] %v806
        %839 = vst [vmem:[#allocation3 + $0x8f0] sm:$0xff] %v807
        %v840 = vld [vmem:[%s711 + $0x2] sm:$0xff]
        %v841 = vld [vmem:[%s711 + $0xa] sm:$0xff]
        %v842 = vld [vmem:[%s711 + $0x1a] sm:$0xff]
        %v843 = vld [vmem:[%s711 + $0x22] sm:$0xff]
        %v844 = vld [vmem:[%s711 + $0x32] sm:$0xff]
        %v845 = vld [vmem:[%s711 + $0x3a] sm:$0xff]
        %v846 = vld [vmem:[%s711 + $0x4a] sm:$0xff]
        %v847 = vld [vmem:[%s711 + $0x52] sm:$0xff]
        %v848 = vld [vmem:[%s711 + $0x62] sm:$0xff]
        %v849 = vld [vmem:[%s711 + $0x6a] sm:$0xff]
        %v850 = vld [vmem:[%s711 + $0x7a] sm:$0xff]
        %v851 = vld [vmem:[%s711 + $0x82] sm:$0xff]
        %v852 = vld [vmem:[%s711 + $0x92] sm:$0xff]
        %v853 = vld [vmem:[%s711 + $0x9a] sm:$0xff]
        %v854 = vld [vmem:[%s711 + $0xaa] sm:$0xff]
        %v855 = vld [vmem:[%s711 + $0xb2] sm:$0xff]
        %v856 = vld [vmem:[%s711 + $0xc2] sm:$0xff]
        %v857 = vld [vmem:[%s711 + $0xca] sm:$0xff]
        %v858 = vld [vmem:[%s711 + $0xda] sm:$0xff]
        %v859 = vld [vmem:[%s711 + $0xe2] sm:$0xff]
        %v860 = vld [vmem:[%s711 + $0xf2] sm:$0xff]
        %v861 = vld [vmem:[%s711 + $0xfa] sm:$0xff]
        %v862 = vld [vmem:[%s711 + $0x10a] sm:$0xff]
        %v863 = vld [vmem:[%s711 + $0x112] sm:$0xff]
        %v864 = vld [vmem:[%s711 + $0x122] sm:$0xff]
        %v865 = vld [vmem:[%s711 + $0x12a] sm:$0xff]
        %v866 = vld [vmem:[%s711 + $0x13a] sm:$0xff]
        %v867 = vld [vmem:[%s711 + $0x142] sm:$0xff]
        %v868 = vld [vmem:[%s711 + $0x152] sm:$0xff]
        %v869 = vld [vmem:[%s711 + $0x15a] sm:$0xff]
        %v870 = vld [vmem:[%s711 + $0x16a] sm:$0xff]
        %v871 = vld [vmem:[%s711 + $0x172] sm:$0xff]
        %872 = vst [vmem:[#allocation3 + $0x40] sm:$0xff] %v840
        %873 = vst [vmem:[#allocation3 + $0x88] sm:$0xff] %v841
        %874 = vst [vmem:[#allocation3 + $0xd0] sm:$0xff] %v842
        %875 = vst [vmem:[#allocation3 + $0x118] sm:$0xff] %v843
        %876 = vst [vmem:[#allocation3 + $0x160] sm:$0xff] %v844
        %877 = vst [vmem:[#allocation3 + $0x1a8] sm:$0xff] %v845
        %878 = vst [vmem:[#allocation3 + $0x1f0] sm:$0xff] %v846
        %879 = vst [vmem:[#allocation3 + $0x238] sm:$0xff] %v847
        %880 = vst [vmem:[#allocation3 + $0x280] sm:$0xff] %v848
        %881 = vst [vmem:[#allocation3 + $0x2c8] sm:$0xff] %v849
        %882 = vst [vmem:[#allocation3 + $0x310] sm:$0xff] %v850
        %883 = vst [vmem:[#allocation3 + $0x358] sm:$0xff] %v851
        %884 = vst [vmem:[#allocation3 + $0x3a0] sm:$0xff] %v852
        %885 = vst [vmem:[#allocation3 + $0x3e8] sm:$0xff] %v853
        %886 = vst [vmem:[#allocation3 + $0x430] sm:$0xff] %v854
        %887 = vst [vmem:[#allocation3 + $0x478] sm:$0xff] %v855
        %888 = vst [vmem:[#allocation3 + $0x4c0] sm:$0xff] %v856
        %889 = vst [vmem:[#allocation3 + $0x508] sm:$0xff] %v857
        %890 = vst [vmem:[#allocation3 + $0x550] sm:$0xff] %v858
        %891 = vst [vmem:[#allocation3 + $0x598] sm:$0xff] %v859
        %892 = vst [vmem:[#allocation3 + $0x5e0] sm:$0xff] %v860
        %893 = vst [vmem:[#allocation3 + $0x628] sm:$0xff] %v861
        %894 = vst [vmem:[#allocation3 + $0x670] sm:$0xff] %v862
        %895 = vst [vmem:[#allocation3 + $0x6b8] sm:$0xff] %v863
        %896 = vst [vmem:[#allocation3 + $0x700] sm:$0xff] %v864
        %897 = vst [vmem:[#allocation3 + $0x748] sm:$0xff] %v865
        %898 = vst [vmem:[#allocation3 + $0x790] sm:$0xff] %v866
        %899 = vst [vmem:[#allocation3 + $0x7d8] sm:$0xff] %v867
        %900 = vst [vmem:[#allocation3 + $0x820] sm:$0xff] %v868
        %901 = vst [vmem:[#allocation3 + $0x868] sm:$0xff] %v869
        %902 = vst [vmem:[#allocation3 + $0x8b0] sm:$0xff] %v870
        %903 = vst [vmem:[#allocation3 + $0x8f8] sm:$0xff] %v871
        %v904 = vld [vmem:[#allocation3] sm:$0xff]
        %v905 = vld [vmem:[#allocation3 + $0x8] sm:$0xff]
        %v906 = vld [vmem:[#allocation3 + $0x10] sm:$0xff]
        %v907 = vld [vmem:[#allocation3 + $0x18] sm:$0xff]
        %v908 = vld [vmem:[#allocation3 + $0x20] sm:$0xff]
        %v909 = vld [vmem:[#allocation3 + $0x28] sm:$0xff]
        %v910 = vld [vmem:[#allocation3 + $0x30] sm:$0xff]
        %v911 = vld [vmem:[#allocation3 + $0x38] sm:$0xff]
        %v912 = vld [vmem:[#allocation3 + $0x40] sm:$0xff]
        %v913 = vld [vmem:[#allocation3 + $0x48] sm:$0xff]
        %v914 = vld [vmem:[#allocation3 + $0x50] sm:$0xff]
        %v915 = vld [vmem:[#allocation3 + $0x58] sm:$0xff]
        %v916 = vld [vmem:[#allocation3 + $0x60] sm:$0xff]
        %v917 = vld [vmem:[#allocation3 + $0x68] sm:$0xff]
        %v918 = vld [vmem:[#allocation3 + $0x70] sm:$0xff]
        %v919 = vld [vmem:[#allocation3 + $0x78] sm:$0xff]
        %v920 = vld [vmem:[#allocation3 + $0x80] sm:$0xff]
        %v921 = vld [vmem:[#allocation3 + $0x88] sm:$0xff]
        %v922 = vld [vmem:[#allocation3 + $0x90] sm:$0xff]
        %v923 = vld [vmem:[#allocation3 + $0x98] sm:$0xff]
        %v924 = vld [vmem:[#allocation3 + $0xa0] sm:$0xff]
        %v925 = vld [vmem:[#allocation3 + $0xa8] sm:$0xff]
        %v926 = vld [vmem:[#allocation3 + $0xb0] sm:$0xff]
        %v927 = vld [vmem:[#allocation3 + $0xb8] sm:$0xff]
        %v928 = vld [vmem:[#allocation3 + $0xc0] sm:$0xff]
        %v929 = vld [vmem:[#allocation3 + $0xc8] sm:$0xff]
        %v930 = vld [vmem:[#allocation3 + $0xd0] sm:$0xff]
        %v931 = vld [vmem:[#allocation3 + $0xd8] sm:$0xff]
        %v932 = vld [vmem:[#allocation3 + $0xe0] sm:$0xff]
        %v933 = vld [vmem:[#allocation3 + $0xe8] sm:$0xff]
        %v934 = vld [vmem:[#allocation3 + $0xf0] sm:$0xff]
        %v935 = vld [vmem:[#allocation3 + $0xf8] sm:$0xff]
        %v936 = vld [vmem:[#allocation3 + $0x100] sm:$0xff]
        %v937 = vld [vmem:[#allocation3 + $0x108] sm:$0xff]
        %v938 = vld [vmem:[#allocation3 + $0x110] sm:$0xff]
        %v939 = vld [vmem:[#allocation3 + $0x118] sm:$0xff]
        %v940 = vld [vmem:[#allocation3 + $0x120] sm:$0xff]
        %v941 = vld [vmem:[#allocation3 + $0x128] sm:$0xff]
        %v942 = vld [vmem:[#allocation3 + $0x130] sm:$0xff]
        %v943 = vld [vmem:[#allocation3 + $0x138] sm:$0xff]
        %v944 = vld [vmem:[#allocation3 + $0x140] sm:$0xff]
        %v945 = vld [vmem:[#allocation3 + $0x148] sm:$0xff]
        %v946 = vld [vmem:[#allocation3 + $0x150] sm:$0xff]
        %v947 = vld [vmem:[#allocation3 + $0x158] sm:$0xff]
        %v948 = vld [vmem:[#allocation3 + $0x160] sm:$0xff]
        %v949 = vld [vmem:[#allocation3 + $0x168] sm:$0xff]
        %v950 = vld [vmem:[#allocation3 + $0x170] sm:$0xff]
        %v951 = vld [vmem:[#allocation3 + $0x178] sm:$0xff]
        %v952 = vld [vmem:[#allocation3 + $0x180] sm:$0xff]
        %v953 = vld [vmem:[#allocation3 + $0x188] sm:$0xff]
        %v954 = vld [vmem:[#allocation3 + $0x190] sm:$0xff]
        %v955 = vld [vmem:[#allocation3 + $0x198] sm:$0xff]
        %v956 = vld [vmem:[#allocation3 + $0x1a0] sm:$0xff]
        %v957 = vld [vmem:[#allocation3 + $0x1a8] sm:$0xff]
        %v958 = vld [vmem:[#allocation3 + $0x1b0] sm:$0xff]
        %v959 = vld [vmem:[#allocation3 + $0x1b8] sm:$0xff]
        %v960 = vld [vmem:[#allocation3 + $0x1c0] sm:$0xff]
        %v961 = vld [vmem:[#allocation3 + $0x1c8] sm:$0xff]
        %v962 = vld [vmem:[#allocation3 + $0x1d0] sm:$0xff]
        %v963 = vld [vmem:[#allocation3 + $0x1d8] sm:$0xff]
        %v964 = vld [vmem:[#allocation3 + $0x1e0] sm:$0xff]
        %v965 = vld [vmem:[#allocation3 + $0x1e8] sm:$0xff]
        %v966 = vld [vmem:[#allocation3 + $0x1f0] sm:$0xff]
        %v967 = vld [vmem:[#allocation3 + $0x1f8] sm:$0xff]
        %v968 = vld [vmem:[#allocation3 + $0x200] sm:$0xff]
        %v969 = vld [vmem:[#allocation3 + $0x208] sm:$0xff]
        %v970 = vld [vmem:[#allocation3 + $0x210] sm:$0xff]
        %v971 = vld [vmem:[#allocation3 + $0x218] sm:$0xff]
        %v972 = vld [vmem:[#allocation3 + $0x220] sm:$0xff]
        %v973 = vld [vmem:[#allocation3 + $0x228] sm:$0xff]
        %v974 = vld [vmem:[#allocation3 + $0x230] sm:$0xff]
        %v975 = vld [vmem:[#allocation3 + $0x238] sm:$0xff]
        %v976 = vld [vmem:[#allocation3 + $0x240] sm:$0xff]
        %v977 = vld [vmem:[#allocation3 + $0x248] sm:$0xff]
        %v978 = vld [vmem:[#allocation3 + $0x250] sm:$0xff]
        %v979 = vld [vmem:[#allocation3 + $0x258] sm:$0xff]
        %v980 = vld [vmem:[#allocation3 + $0x260] sm:$0xff]
        %v981 = vld [vmem:[#allocation3 + $0x268] sm:$0xff]
        %v982 = vld [vmem:[#allocation3 + $0x270] sm:$0xff]
        %v983 = vld [vmem:[#allocation3 + $0x278] sm:$0xff]
        %v984 = vld [vmem:[#allocation3 + $0x280] sm:$0xff]
        %v985 = vld [vmem:[#allocation3 + $0x288] sm:$0xff]
        %v986 = vld [vmem:[#allocation3 + $0x290] sm:$0xff]
        %v987 = vld [vmem:[#allocation3 + $0x298] sm:$0xff]
        %v988 = vld [vmem:[#allocation3 + $0x2a0] sm:$0xff]
        %v989 = vld [vmem:[#allocation3 + $0x2a8] sm:$0xff]
        %v990 = vld [vmem:[#allocation3 + $0x2b0] sm:$0xff]
        %v991 = vld [vmem:[#allocation3 + $0x2b8] sm:$0xff]
        %v992 = vld [vmem:[#allocation3 + $0x2c0] sm:$0xff]
        %v993 = vld [vmem:[#allocation3 + $0x2c8] sm:$0xff]
        %v994 = vld [vmem:[#allocation3 + $0x2d0] sm:$0xff]
        %v995 = vld [vmem:[#allocation3 + $0x2d8] sm:$0xff]
        %v996 = vld [vmem:[#allocation3 + $0x2e0] sm:$0xff]
        %v997 = vld [vmem:[#allocation3 + $0x2e8] sm:$0xff]
        %v998 = vld [vmem:[#allocation3 + $0x2f0] sm:$0xff]
        %v999 = vld [vmem:[#allocation3 + $0x2f8] sm:$0xff]
        %v1000 = vld [vmem:[#allocation3 + $0x300] sm:$0xff]
        %v1001 = vld [vmem:[#allocation3 + $0x308] sm:$0xff]
        %v1002 = vld [vmem:[#allocation3 + $0x310] sm:$0xff]
        %v1003 = vld [vmem:[#allocation3 + $0x318] sm:$0xff]
        %v1004 = vld [vmem:[#allocation3 + $0x320] sm:$0xff]
        %v1005 = vld [vmem:[#allocation3 + $0x328] sm:$0xff]
        %v1006 = vld [vmem:[#allocation3 + $0x330] sm:$0xff]
        %v1007 = vld [vmem:[#allocation3 + $0x338] sm:$0xff]
        %v1008 = vld [vmem:[#allocation3 + $0x340] sm:$0xff]
        %v1009 = vld [vmem:[#allocation3 + $0x348] sm:$0xff]
        %v1010 = vld [vmem:[#allocation3 + $0x350] sm:$0xff]
        %v1011 = vld [vmem:[#allocation3 + $0x358] sm:$0xff]
        %v1012 = vld [vmem:[#allocation3 + $0x360] sm:$0xff]
        %v1013 = vld [vmem:[#allocation3 + $0x368] sm:$0xff]
        %v1014 = vld [vmem:[#allocation3 + $0x370] sm:$0xff]
        %v1015 = vld [vmem:[#allocation3 + $0x378] sm:$0xff]
        %v1016 = vld [vmem:[#allocation3 + $0x380] sm:$0xff]
        %v1017 = vld [vmem:[#allocation3 + $0x388] sm:$0xff]
        %v1018 = vld [vmem:[#allocation3 + $0x390] sm:$0xff]
        %v1019 = vld [vmem:[#allocation3 + $0x398] sm:$0xff]
        %v1020 = vld [vmem:[#allocation3 + $0x3a0] sm:$0xff]
        %v1021 = vld [vmem:[#allocation3 + $0x3a8] sm:$0xff]
        %v1022 = vld [vmem:[#allocation3 + $0x3b0] sm:$0xff]
        %v1023 = vld [vmem:[#allocation3 + $0x3b8] sm:$0xff]
        %v1024 = vld [vmem:[#allocation3 + $0x3c0] sm:$0xff]
        %v1025 = vld [vmem:[#allocation3 + $0x3c8] sm:$0xff]
        %v1026 = vld [vmem:[#allocation3 + $0x3d0] sm:$0xff]
        %v1027 = vld [vmem:[#allocation3 + $0x3d8] sm:$0xff]
        %v1028 = vld [vmem:[#allocation3 + $0x3e0] sm:$0xff]
        %v1029 = vld [vmem:[#allocation3 + $0x3e8] sm:$0xff]
        %v1030 = vld [vmem:[#allocation3 + $0x3f0] sm:$0xff]
        %v1031 = vld [vmem:[#allocation3 + $0x3f8] sm:$0xff]
        %v1032 = vld [vmem:[#allocation3 + $0x400] sm:$0xff]
        %v1033 = vld [vmem:[#allocation3 + $0x408] sm:$0xff]
        %v1034 = vld [vmem:[#allocation3 + $0x410] sm:$0xff]
        %v1035 = vld [vmem:[#allocation3 + $0x418] sm:$0xff]
        %v1036 = vld [vmem:[#allocation3 + $0x420] sm:$0xff]
        %v1037 = vld [vmem:[#allocation3 + $0x428] sm:$0xff]
        %v1038 = vld [vmem:[#allocation3 + $0x430] sm:$0xff]
        %v1039 = vld [vmem:[#allocation3 + $0x438] sm:$0xff]
        %v1040 = vld [vmem:[#allocation3 + $0x440] sm:$0xff]
        %v1041 = vld [vmem:[#allocation3 + $0x448] sm:$0xff]
        %v1042 = vld [vmem:[#allocation3 + $0x450] sm:$0xff]
        %v1043 = vld [vmem:[#allocation3 + $0x458] sm:$0xff]
        %v1044 = vld [vmem:[#allocation3 + $0x460] sm:$0xff]
        %v1045 = vld [vmem:[#allocation3 + $0x468] sm:$0xff]
        %v1046 = vld [vmem:[#allocation3 + $0x470] sm:$0xff]
        %v1047 = vld [vmem:[#allocation3 + $0x478] sm:$0xff]
        %v1048 = vld [vmem:[#allocation3 + $0x480] sm:$0xff]
        %v1049 = vld [vmem:[#allocation3 + $0x488] sm:$0xff]
        %v1050 = vld [vmem:[#allocation3 + $0x490] sm:$0xff]
        %v1051 = vld [vmem:[#allocation3 + $0x498] sm:$0xff]
        %v1052 = vld [vmem:[#allocation3 + $0x4a0] sm:$0xff]
        %v1053 = vld [vmem:[#allocation3 + $0x4a8] sm:$0xff]
        %v1054 = vld [vmem:[#allocation3 + $0x4b0] sm:$0xff]
        %v1055 = vld [vmem:[#allocation3 + $0x4b8] sm:$0xff]
        %v1056 = vld [vmem:[#allocation3 + $0x4c0] sm:$0xff]
        %v1057 = vld [vmem:[#allocation3 + $0x4c8] sm:$0xff]
        %v1058 = vld [vmem:[#allocation3 + $0x4d0] sm:$0xff]
        %v1059 = vld [vmem:[#allocation3 + $0x4d8] sm:$0xff]
        %v1060 = vld [vmem:[#allocation3 + $0x4e0] sm:$0xff]
        %v1061 = vld [vmem:[#allocation3 + $0x4e8] sm:$0xff]
        %v1062 = vld [vmem:[#allocation3 + $0x4f0] sm:$0xff]
        %v1063 = vld [vmem:[#allocation3 + $0x4f8] sm:$0xff]
        %v1064 = vld [vmem:[#allocation3 + $0x500] sm:$0xff]
        %v1065 = vld [vmem:[#allocation3 + $0x508] sm:$0xff]
        %v1066 = vld [vmem:[#allocation3 + $0x510] sm:$0xff]
        %v1067 = vld [vmem:[#allocation3 + $0x518] sm:$0xff]
        %v1068 = vld [vmem:[#allocation3 + $0x520] sm:$0xff]
        %v1069 = vld [vmem:[#allocation3 + $0x528] sm:$0xff]
        %v1070 = vld [vmem:[#allocation3 + $0x530] sm:$0xff]
        %v1071 = vld [vmem:[#allocation3 + $0x538] sm:$0xff]
        %v1072 = vld [vmem:[#allocation3 + $0x540] sm:$0xff]
        %v1073 = vld [vmem:[#allocation3 + $0x548] sm:$0xff]
        %v1074 = vld [vmem:[#allocation3 + $0x550] sm:$0xff]
        %v1075 = vld [vmem:[#allocation3 + $0x558] sm:$0xff]
        %v1076 = vld [vmem:[#allocation3 + $0x560] sm:$0xff]
        %v1077 = vld [vmem:[#allocation3 + $0x568] sm:$0xff]
        %v1078 = vld [vmem:[#allocation3 + $0x570] sm:$0xff]
        %v1079 = vld [vmem:[#allocation3 + $0x578] sm:$0xff]
        %v1080 = vld [vmem:[#allocation3 + $0x580] sm:$0xff]
        %v1081 = vld [vmem:[#allocation3 + $0x588] sm:$0xff]
        %v1082 = vld [vmem:[#allocation3 + $0x590] sm:$0xff]
        %v1083 = vld [vmem:[#allocation3 + $0x598] sm:$0xff]
        %v1084 = vld [vmem:[#allocation3 + $0x5a0] sm:$0xff]
        %v1085 = vld [vmem:[#allocation3 + $0x5a8] sm:$0xff]
        %v1086 = vld [vmem:[#allocation3 + $0x5b0] sm:$0xff]
        %v1087 = vld [vmem:[#allocation3 + $0x5b8] sm:$0xff]
        %v1088 = vld [vmem:[#allocation3 + $0x5c0] sm:$0xff]
        %v1089 = vld [vmem:[#allocation3 + $0x5c8] sm:$0xff]
        %v1090 = vld [vmem:[#allocation3 + $0x5d0] sm:$0xff]
        %v1091 = vld [vmem:[#allocation3 + $0x5d8] sm:$0xff]
        %v1092 = vld [vmem:[#allocation3 + $0x5e0] sm:$0xff]
        %v1093 = vld [vmem:[#allocation3 + $0x5e8] sm:$0xff]
        %v1094 = vld [vmem:[#allocation3 + $0x5f0] sm:$0xff]
        %v1095 = vld [vmem:[#allocation3 + $0x5f8] sm:$0xff]
        %v1096 = vld [vmem:[#allocation3 + $0x600] sm:$0xff]
        %v1097 = vld [vmem:[#allocation3 + $0x608] sm:$0xff]
        %v1098 = vld [vmem:[#allocation3 + $0x610] sm:$0xff]
        %v1099 = vld [vmem:[#allocation3 + $0x618] sm:$0xff]
        %v1100 = vld [vmem:[#allocation3 + $0x620] sm:$0xff]
        %v1101 = vld [vmem:[#allocation3 + $0x628] sm:$0xff]
        %v1102 = vld [vmem:[#allocation3 + $0x630] sm:$0xff]
        %v1103 = vld [vmem:[#allocation3 + $0x638] sm:$0xff]
        %v1104 = vld [vmem:[#allocation3 + $0x640] sm:$0xff]
        %v1105 = vld [vmem:[#allocation3 + $0x648] sm:$0xff]
        %v1106 = vld [vmem:[#allocation3 + $0x650] sm:$0xff]
        %v1107 = vld [vmem:[#allocation3 + $0x658] sm:$0xff]
        %v1108 = vld [vmem:[#allocation3 + $0x660] sm:$0xff]
        %v1109 = vld [vmem:[#allocation3 + $0x668] sm:$0xff]
        %v1110 = vld [vmem:[#allocation3 + $0x670] sm:$0xff]
        %v1111 = vld [vmem:[#allocation3 + $0x678] sm:$0xff]
        %v1112 = vld [vmem:[#allocation3 + $0x680] sm:$0xff]
        %v1113 = vld [vmem:[#allocation3 + $0x688] sm:$0xff]
        %v1114 = vld [vmem:[#allocation3 + $0x690] sm:$0xff]
        %v1115 = vld [vmem:[#allocation3 + $0x698] sm:$0xff]
        %v1116 = vld [vmem:[#allocation3 + $0x6a0] sm:$0xff]
        %v1117 = vld [vmem:[#allocation3 + $0x6a8] sm:$0xff]
        %v1118 = vld [vmem:[#allocation3 + $0x6b0] sm:$0xff]
        %v1119 = vld [vmem:[#allocation3 + $0x6b8] sm:$0xff]
        %v1120 = vld [vmem:[#allocation3 + $0x6c0] sm:$0xff]
        %v1121 = vld [vmem:[#allocation3 + $0x6c8] sm:$0xff]
        %v1122 = vld [vmem:[#allocation3 + $0x6d0] sm:$0xff]
        %v1123 = vld [vmem:[#allocation3 + $0x6d8] sm:$0xff]
        %v1124 = vld [vmem:[#allocation3 + $0x6e0] sm:$0xff]
        %v1125 = vld [vmem:[#allocation3 + $0x6e8] sm:$0xff]
        %v1126 = vld [vmem:[#allocation3 + $0x6f0] sm:$0xff]
        %v1127 = vld [vmem:[#allocation3 + $0x6f8] sm:$0xff]
        %v1128 = vld [vmem:[#allocation3 + $0x700] sm:$0xff]
        %v1129 = vld [vmem:[#allocation3 + $0x708] sm:$0xff]
        %v1130 = vld [vmem:[#allocation3 + $0x710] sm:$0xff]
        %v1131 = vld [vmem:[#allocation3 + $0x718] sm:$0xff]
        %v1132 = vld [vmem:[#allocation3 + $0x720] sm:$0xff]
        %v1133 = vld [vmem:[#allocation3 + $0x728] sm:$0xff]
        %v1134 = vld [vmem:[#allocation3 + $0x730] sm:$0xff]
        %v1135 = vld [vmem:[#allocation3 + $0x738] sm:$0xff]
        %v1136 = vld [vmem:[#allocation3 + $0x740] sm:$0xff]
        %v1137 = vld [vmem:[#allocation3 + $0x748] sm:$0xff]
        %v1138 = vld [vmem:[#allocation3 + $0x750] sm:$0xff]
        %v1139 = vld [vmem:[#allocation3 + $0x758] sm:$0xff]
        %v1140 = vld [vmem:[#allocation3 + $0x760] sm:$0xff]
        %v1141 = vld [vmem:[#allocation3 + $0x768] sm:$0xff]
        %v1142 = vld [vmem:[#allocation3 + $0x770] sm:$0xff]
        %v1143 = vld [vmem:[#allocation3 + $0x778] sm:$0xff]
        %v1144 = vld [vmem:[#allocation3 + $0x780] sm:$0xff]
        %v1145 = vld [vmem:[#allocation3 + $0x788] sm:$0xff]
        %v1146 = vld [vmem:[#allocation3 + $0x790] sm:$0xff]
        %v1147 = vld [vmem:[#allocation3 + $0x798] sm:$0xff]
        %v1148 = vld [vmem:[#allocation3 + $0x7a0] sm:$0xff]
        %v1149 = vld [vmem:[#allocation3 + $0x7a8] sm:$0xff]
        %v1150 = vld [vmem:[#allocation3 + $0x7b0] sm:$0xff]
        %v1151 = vld [vmem:[#allocation3 + $0x7b8] sm:$0xff]
        %v1152 = vld [vmem:[#allocation3 + $0x7c0] sm:$0xff]
        %v1153 = vld [vmem:[#allocation3 + $0x7c8] sm:$0xff]
        %v1154 = vld [vmem:[#allocation3 + $0x7d0] sm:$0xff]
        %v1155 = vld [vmem:[#allocation3 + $0x7d8] sm:$0xff]
        %v1156 = vld [vmem:[#allocation3 + $0x7e0] sm:$0xff]
        %v1157 = vld [vmem:[#allocation3 + $0x7e8] sm:$0xff]
        %v1158 = vld [vmem:[#allocation3 + $0x7f0] sm:$0xff]
        %v1159 = vld [vmem:[#allocation3 + $0x7f8] sm:$0xff]
        %v1160 = vld [vmem:[#allocation3 + $0x800] sm:$0xff]
        %v1161 = vld [vmem:[#allocation3 + $0x808] sm:$0xff]
        %v1162 = vld [vmem:[#allocation3 + $0x810] sm:$0xff]
        %v1163 = vld [vmem:[#allocation3 + $0x818] sm:$0xff]
        %v1164 = vld [vmem:[#allocation3 + $0x820] sm:$0xff]
        %v1165 = vld [vmem:[#allocation3 + $0x828] sm:$0xff]
        %v1166 = vld [vmem:[#allocation3 + $0x830] sm:$0xff]
        %v1167 = vld [vmem:[#allocation3 + $0x838] sm:$0xff]
        %v1168 = vld [vmem:[#allocation3 + $0x840] sm:$0xff]
        %v1169 = vld [vmem:[#allocation3 + $0x848] sm:$0xff]
        %v1170 = vld [vmem:[#allocation3 + $0x850] sm:$0xff]
        %v1171 = vld [vmem:[#allocation3 + $0x858] sm:$0xff]
        %v1172 = vld [vmem:[#allocation3 + $0x860] sm:$0xff]
        %v1173 = vld [vmem:[#allocation3 + $0x868] sm:$0xff]
        %v1174 = vld [vmem:[#allocation3 + $0x870] sm:$0xff]
        %v1175 = vld [vmem:[#allocation3 + $0x878] sm:$0xff]
        %v1176 = vld [vmem:[#allocation3 + $0x880] sm:$0xff]
        %v1177 = vld [vmem:[#allocation3 + $0x888] sm:$0xff]
        %v1178 = vld [vmem:[#allocation3 + $0x890] sm:$0xff]
        %v1179 = vld [vmem:[#allocation3 + $0x898] sm:$0xff]
        %v1180 = vld [vmem:[#allocation3 + $0x8a0] sm:$0xff]
        %v1181 = vld [vmem:[#allocation3 + $0x8a8] sm:$0xff]
        %v1182 = vld [vmem:[#allocation3 + $0x8b0] sm:$0xff]
        %v1183 = vld [vmem:[#allocation3 + $0x8b8] sm:$0xff]
        %v1184 = vld [vmem:[#allocation3 + $0x8c0] sm:$0xff]
        %v1185 = vld [vmem:[#allocation3 + $0x8c8] sm:$0xff]
        %v1186 = vld [vmem:[#allocation3 + $0x8d0] sm:$0xff]
        %v1187 = vld [vmem:[#allocation3 + $0x8d8] sm:$0xff]
        %v1188 = vld [vmem:[#allocation3 + $0x8e0] sm:$0xff]
        %v1189 = vld [vmem:[#allocation3 + $0x8e8] sm:$0xff]
        %v1190 = vld [vmem:[#allocation3 + $0x8f0] sm:$0xff]
        %v1191 = vld [vmem:[#allocation3 + $0x8f8] sm:$0xff]
        %v1192 = vld [vmem:[#allocation7] sm:$0xff]
        %v1193 = vld [vmem:[#allocation7 + $0x8] sm:$0xff]
        %v1194 = vld [vmem:[#allocation7 + $0x10] sm:$0xff]
        %v1195 = vld [vmem:[#allocation7 + $0x18] sm:$0xff]
        %v1196 = vld [vmem:[#allocation7 + $0x20] sm:$0xff]
        %v1197 = vld [vmem:[#allocation7 + $0x28] sm:$0xff]
        %v1198 = vld [vmem:[#allocation7 + $0x30] sm:$0xff]
        %v1199 = vld [vmem:[#allocation7 + $0x38] sm:$0xff]
        %v1200 = vld [vmem:[#allocation7 + $0x40] sm:$0xff]
        %v1201 = vld [vmem:[#allocation7 + $0x48] sm:$0xff]
        %v1202 = vld [vmem:[#allocation7 + $0x50] sm:$0xff]
        %v1203 = vld [vmem:[#allocation7 + $0x58] sm:$0xff]
        %v1204 = vld [vmem:[#allocation7 + $0x60] sm:$0xff]
        %v1205 = vld [vmem:[#allocation7 + $0x68] sm:$0xff]
        %v1206 = vld [vmem:[#allocation7 + $0x70] sm:$0xff]
        %v1207 = vld [vmem:[#allocation7 + $0x78] sm:$0xff]
        %v1208 = vld [vmem:[#allocation7 + $0x80] sm:$0xff]
        %v1209 = vld [vmem:[#allocation7 + $0x88] sm:$0xff]
        %v1210 = vld [vmem:[#allocation7 + $0x90] sm:$0xff]
        %v1211 = vld [vmem:[#allocation7 + $0x98] sm:$0xff]
        %v1212 = vld [vmem:[#allocation7 + $0xa0] sm:$0xff]
        %v1213 = vld [vmem:[#allocation7 + $0xa8] sm:$0xff]
        %v1214 = vld [vmem:[#allocation7 + $0xb0] sm:$0xff]
        %v1215 = vld [vmem:[#allocation7 + $0xb8] sm:$0xff]
        %v1216 = vld [vmem:[#allocation7 + $0xc0] sm:$0xff]
        %v1217 = vld [vmem:[#allocation7 + $0xc8] sm:$0xff]
        %v1218 = vld [vmem:[#allocation7 + $0xd0] sm:$0xff]
        %v1219 = vld [vmem:[#allocation7 + $0xd8] sm:$0xff]
        %v1220 = vld [vmem:[#allocation7 + $0xe0] sm:$0xff]
        %v1221 = vld [vmem:[#allocation7 + $0xe8] sm:$0xff]
        %v1222 = vld [vmem:[#allocation7 + $0xf0] sm:$0xff]
        %v1223 = vld [vmem:[#allocation7 + $0xf8] sm:$0xff]
        %v1224 = vld [vmem:[#allocation7 + $0x100] sm:$0xff]
        %v1225 = vld [vmem:[#allocation7 + $0x108] sm:$0xff]
        %v1226 = vld [vmem:[#allocation7 + $0x110] sm:$0xff]
        %v1227 = vld [vmem:[#allocation7 + $0x118] sm:$0xff]
        %v1228 = vld [vmem:[#allocation7 + $0x120] sm:$0xff]
        %v1229 = vld [vmem:[#allocation7 + $0x128] sm:$0xff]
        %v1230 = vld [vmem:[#allocation7 + $0x130] sm:$0xff]
        %v1231 = vld [vmem:[#allocation7 + $0x138] sm:$0xff]
        %v1232 = vld [vmem:[#allocation7 + $0x140] sm:$0xff]
        %v1233 = vld [vmem:[#allocation7 + $0x148] sm:$0xff]
        %v1234 = vld [vmem:[#allocation7 + $0x150] sm:$0xff]
        %v1235 = vld [vmem:[#allocation7 + $0x158] sm:$0xff]
        %v1236 = vld [vmem:[#allocation7 + $0x160] sm:$0xff]
        %v1237 = vld [vmem:[#allocation7 + $0x168] sm:$0xff]
        %v1238 = vld [vmem:[#allocation7 + $0x170] sm:$0xff]
        %v1239 = vld [vmem:[#allocation7 + $0x178] sm:$0xff]
        %v1240 = vld [vmem:[#allocation7 + $0x180] sm:$0xff]
        %v1241 = vld [vmem:[#allocation7 + $0x188] sm:$0xff]
        %v1242 = vld [vmem:[#allocation7 + $0x190] sm:$0xff]
        %v1243 = vld [vmem:[#allocation7 + $0x198] sm:$0xff]
        %v1244 = vld [vmem:[#allocation7 + $0x1a0] sm:$0xff]
        %v1245 = vld [vmem:[#allocation7 + $0x1a8] sm:$0xff]
        %v1246 = vld [vmem:[#allocation7 + $0x1b0] sm:$0xff]
        %v1247 = vld [vmem:[#allocation7 + $0x1b8] sm:$0xff]
        %v1248 = vld [vmem:[#allocation7 + $0x1c0] sm:$0xff]
        %v1249 = vld [vmem:[#allocation7 + $0x1c8] sm:$0xff]
        %v1250 = vld [vmem:[#allocation7 + $0x1d0] sm:$0xff]
        %v1251 = vld [vmem:[#allocation7 + $0x1d8] sm:$0xff]
        %v1252 = vld [vmem:[#allocation7 + $0x1e0] sm:$0xff]
        %v1253 = vld [vmem:[#allocation7 + $0x1e8] sm:$0xff]
        %v1254 = vld [vmem:[#allocation7 + $0x1f0] sm:$0xff]
        %v1255 = vld [vmem:[#allocation7 + $0x1f8] sm:$0xff]
        %v1256 = vld [vmem:[#allocation7 + $0x200] sm:$0xff]
        %v1257 = vld [vmem:[#allocation7 + $0x208] sm:$0xff]
        %v1258 = vld [vmem:[#allocation7 + $0x210] sm:$0xff]
        %v1259 = vld [vmem:[#allocation7 + $0x218] sm:$0xff]
        %v1260 = vld [vmem:[#allocation7 + $0x220] sm:$0xff]
        %v1261 = vld [vmem:[#allocation7 + $0x228] sm:$0xff]
        %v1262 = vld [vmem:[#allocation7 + $0x230] sm:$0xff]
        %v1263 = vld [vmem:[#allocation7 + $0x238] sm:$0xff]
        %v1264 = vld [vmem:[#allocation7 + $0x240] sm:$0xff]
        %v1265 = vld [vmem:[#allocation7 + $0x248] sm:$0xff]
        %v1266 = vld [vmem:[#allocation7 + $0x250] sm:$0xff]
        %v1267 = vld [vmem:[#allocation7 + $0x258] sm:$0xff]
        %v1268 = vld [vmem:[#allocation7 + $0x260] sm:$0xff]
        %v1269 = vld [vmem:[#allocation7 + $0x268] sm:$0xff]
        %v1270 = vld [vmem:[#allocation7 + $0x270] sm:$0xff]
        %v1271 = vld [vmem:[#allocation7 + $0x278] sm:$0xff]
        %v1272 = vld [vmem:[#allocation7 + $0x280] sm:$0xff]
        %v1273 = vld [vmem:[#allocation7 + $0x288] sm:$0xff]
        %v1274 = vld [vmem:[#allocation7 + $0x290] sm:$0xff]
        %v1275 = vld [vmem:[#allocation7 + $0x298] sm:$0xff]
        %v1276 = vld [vmem:[#allocation7 + $0x2a0] sm:$0xff]
        %v1277 = vld [vmem:[#allocation7 + $0x2a8] sm:$0xff]
        %v1278 = vld [vmem:[#allocation7 + $0x2b0] sm:$0xff]
        %v1279 = vld [vmem:[#allocation7 + $0x2b8] sm:$0xff]
        %v1280 = vld [vmem:[#allocation7 + $0x2c0] sm:$0xff]
        %v1281 = vld [vmem:[#allocation7 + $0x2c8] sm:$0xff]
        %v1282 = vld [vmem:[#allocation7 + $0x2d0] sm:$0xff]
        %v1283 = vld [vmem:[#allocation7 + $0x2d8] sm:$0xff]
        %v1284 = vld [vmem:[#allocation7 + $0x2e0] sm:$0xff]
        %v1285 = vld [vmem:[#allocation7 + $0x2e8] sm:$0xff]
        %v1286 = vld [vmem:[#allocation7 + $0x2f0] sm:$0xff]
        %v1287 = vld [vmem:[#allocation7 + $0x2f8] sm:$0xff]
        %v1288 = vld [vmem:[#allocation7 + $0x300] sm:$0xff]
        %v1289 = vld [vmem:[#allocation7 + $0x308] sm:$0xff]
        %v1290 = vld [vmem:[#allocation7 + $0x310] sm:$0xff]
        %v1291 = vld [vmem:[#allocation7 + $0x318] sm:$0xff]
        %v1292 = vld [vmem:[#allocation7 + $0x320] sm:$0xff]
        %v1293 = vld [vmem:[#allocation7 + $0x328] sm:$0xff]
        %v1294 = vld [vmem:[#allocation7 + $0x330] sm:$0xff]
        %v1295 = vld [vmem:[#allocation7 + $0x338] sm:$0xff]
        %v1296 = vld [vmem:[#allocation7 + $0x340] sm:$0xff]
        %v1297 = vld [vmem:[#allocation7 + $0x348] sm:$0xff]
        %v1298 = vld [vmem:[#allocation7 + $0x350] sm:$0xff]
        %v1299 = vld [vmem:[#allocation7 + $0x358] sm:$0xff]
        %v1300 = vld [vmem:[#allocation7 + $0x360] sm:$0xff]
        %v1301 = vld [vmem:[#allocation7 + $0x368] sm:$0xff]
        %v1302 = vld [vmem:[#allocation7 + $0x370] sm:$0xff]
        %v1303 = vld [vmem:[#allocation7 + $0x378] sm:$0xff]
        %v1304 = vld [vmem:[#allocation7 + $0x380] sm:$0xff]
        %v1305 = vld [vmem:[#allocation7 + $0x388] sm:$0xff]
        %v1306 = vld [vmem:[#allocation7 + $0x390] sm:$0xff]
        %v1307 = vld [vmem:[#allocation7 + $0x398] sm:$0xff]
        %v1308 = vld [vmem:[#allocation7 + $0x3a0] sm:$0xff]
        %v1309 = vld [vmem:[#allocation7 + $0x3a8] sm:$0xff]
        %v1310 = vld [vmem:[#allocation7 + $0x3b0] sm:$0xff]
        %v1311 = vld [vmem:[#allocation7 + $0x3b8] sm:$0xff]
        %v1312 = vld [vmem:[#allocation7 + $0x3c0] sm:$0xff]
        %v1313 = vld [vmem:[#allocation7 + $0x3c8] sm:$0xff]
        %v1314 = vld [vmem:[#allocation7 + $0x3d0] sm:$0xff]
        %v1315 = vld [vmem:[#allocation7 + $0x3d8] sm:$0xff]
        %v1316 = vld [vmem:[#allocation7 + $0x3e0] sm:$0xff]
        %v1317 = vld [vmem:[#allocation7 + $0x3e8] sm:$0xff]
        %v1318 = vld [vmem:[#allocation7 + $0x3f0] sm:$0xff]
        %v1319 = vld [vmem:[#allocation7 + $0x3f8] sm:$0xff]
        %v1320 = vld [vmem:[#allocation7 + $0x400] sm:$0xff]
        %v1321 = vld [vmem:[#allocation7 + $0x408] sm:$0xff]
        %v1322 = vld [vmem:[#allocation7 + $0x410] sm:$0xff]
        %v1323 = vld [vmem:[#allocation7 + $0x418] sm:$0xff]
        %v1324 = vld [vmem:[#allocation7 + $0x420] sm:$0xff]
        %v1325 = vld [vmem:[#allocation7 + $0x428] sm:$0xff]
        %v1326 = vld [vmem:[#allocation7 + $0x430] sm:$0xff]
        %v1327 = vld [vmem:[#allocation7 + $0x438] sm:$0xff]
        %v1328 = vld [vmem:[#allocation7 + $0x440] sm:$0xff]
        %v1329 = vld [vmem:[#allocation7 + $0x448] sm:$0xff]
        %v1330 = vld [vmem:[#allocation7 + $0x450] sm:$0xff]
        %v1331 = vld [vmem:[#allocation7 + $0x458] sm:$0xff]
        %v1332 = vld [vmem:[#allocation7 + $0x460] sm:$0xff]
        %v1333 = vld [vmem:[#allocation7 + $0x468] sm:$0xff]
        %v1334 = vld [vmem:[#allocation7 + $0x470] sm:$0xff]
        %v1335 = vld [vmem:[#allocation7 + $0x478] sm:$0xff]
        %1336 = vmatpush.msra.mxu0 %v1207
        %1337 = vmatpush.msra.mxu0 %v1206
        %1338 = vmatpush.msra.mxu0 %v1205
        %1339 = vmatpush.msra.mxu0 %v1204
        %1340 = vmatpush.msra.mxu0 %v1203
        %1341 = vmatpush.msra.mxu0 %v1202
        %1342 = vmatpush.msra.mxu0 %v1201
        %1343 = vmatpush.msra.mxu0 %v1200
        %1344 = vmatpush.msra.mxu0 %v1199
        %1345 = vmatpush.msra.mxu0 %v1198
        %1346 = vmatpush.msra.mxu0 %v1197
        %1347 = vmatpush.msra.mxu0 %v1196
        %1348 = vmatpush.msra.mxu0 %v1195
        %1349 = vmatpush.msra.mxu0 %v1194
        %1350 = vmatpush.msra.mxu0 %v1193
        %1351 = vmatpush.msra.mxu0 %v1192
        %1352 = vmatmul.f32.gmra.mxu0 %v904
        %v1353 = vpop.f32.mrf.mxu0
        %v1354 = vadd.f32 0.0, %v1353
        %1355 = vmatmul.f32.gmra.mxu0 %v913
        %v1356 = vpop.f32.mrf.mxu0
        %v1357 = vadd.f32 0.0, %v1356
        %1358 = vmatmul.f32.gmra.mxu0 %v922
        %v1359 = vpop.f32.mrf.mxu0
        %v1360 = vadd.f32 0.0, %v1359
        %1361 = vmatmul.f32.gmra.mxu0 %v931
        %v1362 = vpop.f32.mrf.mxu0
        %v1363 = vadd.f32 0.0, %v1362
        %1364 = vmatmul.f32.gmra.mxu0 %v940
        %v1365 = vpop.f32.mrf.mxu0
        %v1366 = vadd.f32 0.0, %v1365
        %1367 = vmatmul.f32.gmra.mxu0 %v949
        %v1368 = vpop.f32.mrf.mxu0
        %v1369 = vadd.f32 0.0, %v1368
        %1370 = vmatmul.f32.gmra.mxu0 %v958
        %v1371 = vpop.f32.mrf.mxu0
        %v1372 = vadd.f32 0.0, %v1371
        %1373 = vmatmul.f32.gmra.mxu0 %v967
        %v1374 = vpop.f32.mrf.mxu0
        %v1375 = vadd.f32 0.0, %v1374
        %1376 = vmatmul.f32.gmra.mxu0 %v976
        %v1377 = vpop.f32.mrf.mxu0
        %v1378 = vadd.f32 0.0, %v1377
        %1379 = vmatmul.f32.gmra.mxu0 %v985
        %v1380 = vpop.f32.mrf.mxu0
        %v1381 = vadd.f32 0.0, %v1380
        %1382 = vmatmul.f32.gmra.mxu0 %v994
        %v1383 = vpop.f32.mrf.mxu0
        %v1384 = vadd.f32 0.0, %v1383
        %1385 = vmatmul.f32.gmra.mxu0 %v1003
        %v1386 = vpop.f32.mrf.mxu0
        %v1387 = vadd.f32 0.0, %v1386
        %1388 = vmatmul.f32.gmra.mxu0 %v1012
        %v1389 = vpop.f32.mrf.mxu0
        %v1390 = vadd.f32 0.0, %v1389
        %1391 = vmatmul.f32.gmra.mxu0 %v1021
        %v1392 = vpop.f32.mrf.mxu0
        %v1393 = vadd.f32 0.0, %v1392
        %1394 = vmatmul.f32.gmra.mxu0 %v1030
        %v1395 = vpop.f32.mrf.mxu0
        %v1396 = vadd.f32 0.0, %v1395
        %1397 = vmatmul.f32.gmra.mxu0 %v1039
        %v1398 = vpop.f32.mrf.mxu0
        %v1399 = vadd.f32 0.0, %v1398
        %1400 = vmatmul.f32.gmra.mxu0 %v1048
        %v1401 = vpop.f32.mrf.mxu0
        %v1402 = vadd.f32 0.0, %v1401
        %1403 = vmatmul.f32.gmra.mxu0 %v1057
        %v1404 = vpop.f32.mrf.mxu0
        %v1405 = vadd.f32 0.0, %v1404
        %1406 = vmatmul.f32.gmra.mxu0 %v1066
        %v1407 = vpop.f32.mrf.mxu0
        %v1408 = vadd.f32 0.0, %v1407
        %1409 = vmatmul.f32.gmra.mxu0 %v1075
        %v1410 = vpop.f32.mrf.mxu0
        %v1411 = vadd.f32 0.0, %v1410
        %1412 = vmatmul.f32.gmra.mxu0 %v1084
        %v1413 = vpop.f32.mrf.mxu0
        %v1414 = vadd.f32 0.0, %v1413
        %1415 = vmatmul.f32.gmra.mxu0 %v1093
        %v1416 = vpop.f32.mrf.mxu0
        %v1417 = vadd.f32 0.0, %v1416
        %1418 = vmatmul.f32.gmra.mxu0 %v1102
        %v1419 = vpop.f32.mrf.mxu0
        %v1420 = vadd.f32 0.0, %v1419
        %1421 = vmatmul.f32.gmra.mxu0 %v1111
        %v1422 = vpop.f32.mrf.mxu0
        %v1423 = vadd.f32 0.0, %v1422
        %1424 = vmatmul.f32.gmra.mxu0 %v1120
        %v1425 = vpop.f32.mrf.mxu0
        %v1426 = vadd.f32 0.0, %v1425
        %1427 = vmatmul.f32.gmra.mxu0 %v1129
        %v1428 = vpop.f32.mrf.mxu0
        %v1429 = vadd.f32 0.0, %v1428
        %1430 = vmatmul.f32.gmra.mxu0 %v1138
        %v1431 = vpop.f32.mrf.mxu0
        %v1432 = vadd.f32 0.0, %v1431
        %1433 = vmatmul.f32.gmra.mxu0 %v1147
        %v1434 = vpop.f32.mrf.mxu0
        %v1435 = vadd.f32 0.0, %v1434
        %1436 = vmatmul.f32.gmra.mxu0 %v1156
        %v1437 = vpop.f32.mrf.mxu0
        %v1438 = vadd.f32 0.0, %v1437
        %1439 = vmatmul.f32.gmra.mxu0 %v1165
        %v1440 = vpop.f32.mrf.mxu0
        %v1441 = vadd.f32 0.0, %v1440
        %1442 = vmatmul.f32.gmra.mxu0 %v1174
        %v1443 = vpop.f32.mrf.mxu0
        %v1444 = vadd.f32 0.0, %v1443
        %1445 = vmatmul.f32.gmra.mxu0 %v1183
        %v1446 = vpop.f32.mrf.mxu0
        %v1447 = vadd.f32 0.0, %v1446
        %1448 = vdwg.mxu0
        %1449 = vmatpush.msra.mxu0 %v1223
        %1450 = vmatpush.msra.mxu0 %v1222
        %1451 = vmatpush.msra.mxu0 %v1221
        %1452 = vmatpush.msra.mxu0 %v1220
        %1453 = vmatpush.msra.mxu0 %v1219
        %1454 = vmatpush.msra.mxu0 %v1218
        %1455 = vmatpush.msra.mxu0 %v1217
        %1456 = vmatpush.msra.mxu0 %v1216
        %1457 = vmatpush.msra.mxu0 %v1215
        %1458 = vmatpush.msra.mxu0 %v1214
        %1459 = vmatpush.msra.mxu0 %v1213
        %1460 = vmatpush.msra.mxu0 %v1212
        %1461 = vmatpush.msra.mxu0 %v1211
        %1462 = vmatpush.msra.mxu0 %v1210
        %1463 = vmatpush.msra.mxu0 %v1209
        %1464 = vmatpush.msra.mxu0 %v1208
        %1465 = vmatmul.f32.gmra.mxu0 %v905
        %v1466 = vpop.f32.mrf.mxu0
        %v1467 = vadd.f32 %v1354, %v1466
        %1468 = vmatmul.f32.gmra.mxu0 %v914
        %v1469 = vpop.f32.mrf.mxu0
        %v1470 = vadd.f32 %v1357, %v1469
        %1471 = vmatmul.f32.gmra.mxu0 %v923
        %v1472 = vpop.f32.mrf.mxu0
        %v1473 = vadd.f32 %v1360, %v1472
        %1474 = vmatmul.f32.gmra.mxu0 %v932
        %v1475 = vpop.f32.mrf.mxu0
        %v1476 = vadd.f32 %v1363, %v1475
        %1477 = vmatmul.f32.gmra.mxu0 %v941
        %v1478 = vpop.f32.mrf.mxu0
        %v1479 = vadd.f32 %v1366, %v1478
        %1480 = vmatmul.f32.gmra.mxu0 %v950
        %v1481 = vpop.f32.mrf.mxu0
        %v1482 = vadd.f32 %v1369, %v1481
        %1483 = vmatmul.f32.gmra.mxu0 %v959
        %v1484 = vpop.f32.mrf.mxu0
        %v1485 = vadd.f32 %v1372, %v1484
        %1486 = vmatmul.f32.gmra.mxu0 %v968
        %v1487 = vpop.f32.mrf.mxu0
        %v1488 = vadd.f32 %v1375, %v1487
        %1489 = vmatmul.f32.gmra.mxu0 %v977
        %v1490 = vpop.f32.mrf.mxu0
        %v1491 = vadd.f32 %v1378, %v1490
        %1492 = vmatmul.f32.gmra.mxu0 %v986
        %v1493 = vpop.f32.mrf.mxu0
        %v1494 = vadd.f32 %v1381, %v1493
        %1495 = vmatmul.f32.gmra.mxu0 %v995
        %v1496 = vpop.f32.mrf.mxu0
        %v1497 = vadd.f32 %v1384, %v1496
        %1498 = vmatmul.f32.gmra.mxu0 %v1004
        %v1499 = vpop.f32.mrf.mxu0
        %v1500 = vadd.f32 %v1387, %v1499
        %1501 = vmatmul.f32.gmra.mxu0 %v1013
        %v1502 = vpop.f32.mrf.mxu0
        %v1503 = vadd.f32 %v1390, %v1502
        %1504 = vmatmul.f32.gmra.mxu0 %v1022
        %v1505 = vpop.f32.mrf.mxu0
        %v1506 = vadd.f32 %v1393, %v1505
        %1507 = vmatmul.f32.gmra.mxu0 %v1031
        %v1508 = vpop.f32.mrf.mxu0
        %v1509 = vadd.f32 %v1396, %v1508
        %1510 = vmatmul.f32.gmra.mxu0 %v1040
        %v1511 = vpop.f32.mrf.mxu0
        %v1512 = vadd.f32 %v1399, %v1511
        %1513 = vmatmul.f32.gmra.mxu0 %v1049
        %v1514 = vpop.f32.mrf.mxu0
        %v1515 = vadd.f32 %v1402, %v1514
        %1516 = vmatmul.f32.gmra.mxu0 %v1058
        %v1517 = vpop.f32.mrf.mxu0
        %v1518 = vadd.f32 %v1405, %v1517
        %1519 = vmatmul.f32.gmra.mxu0 %v1067
        %v1520 = vpop.f32.mrf.mxu0
        %v1521 = vadd.f32 %v1408, %v1520
        %1522 = vmatmul.f32.gmra.mxu0 %v1076
        %v1523 = vpop.f32.mrf.mxu0
        %v1524 = vadd.f32 %v1411, %v1523
        %1525 = vmatmul.f32.gmra.mxu0 %v1085
        %v1526 = vpop.f32.mrf.mxu0
        %v1527 = vadd.f32 %v1414, %v1526
        %1528 = vmatmul.f32.gmra.mxu0 %v1094
        %v1529 = vpop.f32.mrf.mxu0
        %v1530 = vadd.f32 %v1417, %v1529
        %1531 = vmatmul.f32.gmra.mxu0 %v1103
        %v1532 = vpop.f32.mrf.mxu0
        %v1533 = vadd.f32 %v1420, %v1532
        %1534 = vmatmul.f32.gmra.mxu0 %v1112
        %v1535 = vpop.f32.mrf.mxu0
        %v1536 = vadd.f32 %v1423, %v1535
        %1537 = vmatmul.f32.gmra.mxu0 %v1121
        %v1538 = vpop.f32.mrf.mxu0
        %v1539 = vadd.f32 %v1426, %v1538
        %1540 = vmatmul.f32.gmra.mxu0 %v1130
        %v1541 = vpop.f32.mrf.mxu0
        %v1542 = vadd.f32 %v1429, %v1541
        %1543 = vmatmul.f32.gmra.mxu0 %v1139
        %v1544 = vpop.f32.mrf.mxu0
        %v1545 = vadd.f32 %v1432, %v1544
        %1546 = vmatmul.f32.gmra.mxu0 %v1148
        %v1547 = vpop.f32.mrf.mxu0
        %v1548 = vadd.f32 %v1435, %v1547
        %1549 = vmatmul.f32.gmra.mxu0 %v1157
        %v1550 = vpop.f32.mrf.mxu0
        %v1551 = vadd.f32 %v1438, %v1550
        %1552 = vmatmul.f32.gmra.mxu0 %v1166
        %v1553 = vpop.f32.mrf.mxu0
        %v1554 = vadd.f32 %v1441, %v1553
        %1555 = vmatmul.f32.gmra.mxu0 %v1175
        %v1556 = vpop.f32.mrf.mxu0
        %v1557 = vadd.f32 %v1444, %v1556
        %1558 = vmatmul.f32.gmra.mxu0 %v1184
        %v1559 = vpop.f32.mrf.mxu0
        %v1560 = vadd.f32 %v1447, %v1559
        %1561 = vdwg.mxu0
        %1562 = vmatpush.msra.mxu0 %v1239
        %1563 = vmatpush.msra.mxu0 %v1238
        %1564 = vmatpush.msra.mxu0 %v1237
        %1565 = vmatpush.msra.mxu0 %v1236
        %1566 = vmatpush.msra.mxu0 %v1235
        %1567 = vmatpush.msra.mxu0 %v1234
        %1568 = vmatpush.msra.mxu0 %v1233
        %1569 = vmatpush.msra.mxu0 %v1232
        %1570 = vmatpush.msra.mxu0 %v1231
        %1571 = vmatpush.msra.mxu0 %v1230
        %1572 = vmatpush.msra.mxu0 %v1229
        %1573 = vmatpush.msra.mxu0 %v1228
        %1574 = vmatpush.msra.mxu0 %v1227
        %1575 = vmatpush.msra.mxu0 %v1226
        %1576 = vmatpush.msra.mxu0 %v1225
        %1577 = vmatpush.msra.mxu0 %v1224
        %1578 = vmatmul.f32.gmra.mxu0 %v906
        %v1579 = vpop.f32.mrf.mxu0
        %v1580 = vadd.f32 %v1467, %v1579
        %1581 = vmatmul.f32.gmra.mxu0 %v915
        %v1582 = vpop.f32.mrf.mxu0
        %v1583 = vadd.f32 %v1470, %v1582
        %1584 = vmatmul.f32.gmra.mxu0 %v924
        %v1585 = vpop.f32.mrf.mxu0
        %v1586 = vadd.f32 %v1473, %v1585
        %1587 = vmatmul.f32.gmra.mxu0 %v933
        %v1588 = vpop.f32.mrf.mxu0
        %v1589 = vadd.f32 %v1476, %v1588
        %1590 = vmatmul.f32.gmra.mxu0 %v942
        %v1591 = vpop.f32.mrf.mxu0
        %v1592 = vadd.f32 %v1479, %v1591
        %1593 = vmatmul.f32.gmra.mxu0 %v951
        %v1594 = vpop.f32.mrf.mxu0
        %v1595 = vadd.f32 %v1482, %v1594
        %1596 = vmatmul.f32.gmra.mxu0 %v960
        %v1597 = vpop.f32.mrf.mxu0
        %v1598 = vadd.f32 %v1485, %v1597
        %1599 = vmatmul.f32.gmra.mxu0 %v969
        %v1600 = vpop.f32.mrf.mxu0
        %v1601 = vadd.f32 %v1488, %v1600
        %1602 = vmatmul.f32.gmra.mxu0 %v978
        %v1603 = vpop.f32.mrf.mxu0
        %v1604 = vadd.f32 %v1491, %v1603
        %1605 = vmatmul.f32.gmra.mxu0 %v987
        %v1606 = vpop.f32.mrf.mxu0
        %v1607 = vadd.f32 %v1494, %v1606
        %1608 = vmatmul.f32.gmra.mxu0 %v996
        %v1609 = vpop.f32.mrf.mxu0
        %v1610 = vadd.f32 %v1497, %v1609
        %1611 = vmatmul.f32.gmra.mxu0 %v1005
        %v1612 = vpop.f32.mrf.mxu0
        %v1613 = vadd.f32 %v1500, %v1612
        %1614 = vmatmul.f32.gmra.mxu0 %v1014
        %v1615 = vpop.f32.mrf.mxu0
        %v1616 = vadd.f32 %v1503, %v1615
        %1617 = vmatmul.f32.gmra.mxu0 %v1023
        %v1618 = vpop.f32.mrf.mxu0
        %v1619 = vadd.f32 %v1506, %v1618
        %1620 = vmatmul.f32.gmra.mxu0 %v1032
        %v1621 = vpop.f32.mrf.mxu0
        %v1622 = vadd.f32 %v1509, %v1621
        %1623 = vmatmul.f32.gmra.mxu0 %v1041
        %v1624 = vpop.f32.mrf.mxu0
        %v1625 = vadd.f32 %v1512, %v1624
        %1626 = vmatmul.f32.gmra.mxu0 %v1050
        %v1627 = vpop.f32.mrf.mxu0
        %v1628 = vadd.f32 %v1515, %v1627
        %1629 = vmatmul.f32.gmra.mxu0 %v1059
        %v1630 = vpop.f32.mrf.mxu0
        %v1631 = vadd.f32 %v1518, %v1630
        %1632 = vmatmul.f32.gmra.mxu0 %v1068
        %v1633 = vpop.f32.mrf.mxu0
        %v1634 = vadd.f32 %v1521, %v1633
        %1635 = vmatmul.f32.gmra.mxu0 %v1077
        %v1636 = vpop.f32.mrf.mxu0
        %v1637 = vadd.f32 %v1524, %v1636
        %1638 = vmatmul.f32.gmra.mxu0 %v1086
        %v1639 = vpop.f32.mrf.mxu0
        %v1640 = vadd.f32 %v1527, %v1639
        %1641 = vmatmul.f32.gmra.mxu0 %v1095
        %v1642 = vpop.f32.mrf.mxu0
        %v1643 = vadd.f32 %v1530, %v1642
        %1644 = vmatmul.f32.gmra.mxu0 %v1104
        %v1645 = vpop.f32.mrf.mxu0
        %v1646 = vadd.f32 %v1533, %v1645
        %1647 = vmatmul.f32.gmra.mxu0 %v1113
        %v1648 = vpop.f32.mrf.mxu0
        %v1649 = vadd.f32 %v1536, %v1648
        %1650 = vmatmul.f32.gmra.mxu0 %v1122
        %v1651 = vpop.f32.mrf.mxu0
        %v1652 = vadd.f32 %v1539, %v1651
        %1653 = vmatmul.f32.gmra.mxu0 %v1131
        %v1654 = vpop.f32.mrf.mxu0
        %v1655 = vadd.f32 %v1542, %v1654
        %1656 = vmatmul.f32.gmra.mxu0 %v1140
        %v1657 = vpop.f32.mrf.mxu0
        %v1658 = vadd.f32 %v1545, %v1657
        %1659 = vmatmul.f32.gmra.mxu0 %v1149
        %v1660 = vpop.f32.mrf.mxu0
        %v1661 = vadd.f32 %v1548, %v1660
        %1662 = vmatmul.f32.gmra.mxu0 %v1158
        %v1663 = vpop.f32.mrf.mxu0
        %v1664 = vadd.f32 %v1551, %v1663
        %1665 = vmatmul.f32.gmra.mxu0 %v1167
        %v1666 = vpop.f32.mrf.mxu0
        %v1667 = vadd.f32 %v1554, %v1666
        %1668 = vmatmul.f32.gmra.mxu0 %v1176
        %v1669 = vpop.f32.mrf.mxu0
        %v1670 = vadd.f32 %v1557, %v1669
        %1671 = vmatmul.f32.gmra.mxu0 %v1185
        %v1672 = vpop.f32.mrf.mxu0
        %v1673 = vadd.f32 %v1560, %v1672
        %1674 = vdwg.mxu0
        %1675 = vmatpush.msra.mxu0 %v1255
        %1676 = vmatpush.msra.mxu0 %v1254
        %1677 = vmatpush.msra.mxu0 %v1253
        %1678 = vmatpush.msra.mxu0 %v1252
        %1679 = vmatpush.msra.mxu0 %v1251
        %1680 = vmatpush.msra.mxu0 %v1250
        %1681 = vmatpush.msra.mxu0 %v1249
        %1682 = vmatpush.msra.mxu0 %v1248
        %1683 = vmatpush.msra.mxu0 %v1247
        %1684 = vmatpush.msra.mxu0 %v1246
        %1685 = vmatpush.msra.mxu0 %v1245
        %1686 = vmatpush.msra.mxu0 %v1244
        %1687 = vmatpush.msra.mxu0 %v1243
        %1688 = vmatpush.msra.mxu0 %v1242
        %1689 = vmatpush.msra.mxu0 %v1241
        %1690 = vmatpush.msra.mxu0 %v1240
        %1691 = vmatmul.f32.gmra.mxu0 %v907
        %v1692 = vpop.f32.mrf.mxu0
        %v1693 = vadd.f32 %v1580, %v1692
        %1694 = vmatmul.f32.gmra.mxu0 %v916
        %v1695 = vpop.f32.mrf.mxu0
        %v1696 = vadd.f32 %v1583, %v1695
        %1697 = vmatmul.f32.gmra.mxu0 %v925
        %v1698 = vpop.f32.mrf.mxu0
        %v1699 = vadd.f32 %v1586, %v1698
        %1700 = vmatmul.f32.gmra.mxu0 %v934
        %v1701 = vpop.f32.mrf.mxu0
        %v1702 = vadd.f32 %v1589, %v1701
        %1703 = vmatmul.f32.gmra.mxu0 %v943
        %v1704 = vpop.f32.mrf.mxu0
        %v1705 = vadd.f32 %v1592, %v1704
        %1706 = vmatmul.f32.gmra.mxu0 %v952
        %v1707 = vpop.f32.mrf.mxu0
        %v1708 = vadd.f32 %v1595, %v1707
        %1709 = vmatmul.f32.gmra.mxu0 %v961
        %v1710 = vpop.f32.mrf.mxu0
        %v1711 = vadd.f32 %v1598, %v1710
        %1712 = vmatmul.f32.gmra.mxu0 %v970
        %v1713 = vpop.f32.mrf.mxu0
        %v1714 = vadd.f32 %v1601, %v1713
        %1715 = vmatmul.f32.gmra.mxu0 %v979
        %v1716 = vpop.f32.mrf.mxu0
        %v1717 = vadd.f32 %v1604, %v1716
        %1718 = vmatmul.f32.gmra.mxu0 %v988
        %v1719 = vpop.f32.mrf.mxu0
        %v1720 = vadd.f32 %v1607, %v1719
        %1721 = vmatmul.f32.gmra.mxu0 %v997
        %v1722 = vpop.f32.mrf.mxu0
        %v1723 = vadd.f32 %v1610, %v1722
        %1724 = vmatmul.f32.gmra.mxu0 %v1006
        %v1725 = vpop.f32.mrf.mxu0
        %v1726 = vadd.f32 %v1613, %v1725
        %1727 = vmatmul.f32.gmra.mxu0 %v1015
        %v1728 = vpop.f32.mrf.mxu0
        %v1729 = vadd.f32 %v1616, %v1728
        %1730 = vmatmul.f32.gmra.mxu0 %v1024
        %v1731 = vpop.f32.mrf.mxu0
        %v1732 = vadd.f32 %v1619, %v1731
        %1733 = vmatmul.f32.gmra.mxu0 %v1033
        %v1734 = vpop.f32.mrf.mxu0
        %v1735 = vadd.f32 %v1622, %v1734
        %1736 = vmatmul.f32.gmra.mxu0 %v1042
        %v1737 = vpop.f32.mrf.mxu0
        %v1738 = vadd.f32 %v1625, %v1737
        %1739 = vmatmul.f32.gmra.mxu0 %v1051
        %v1740 = vpop.f32.mrf.mxu0
        %v1741 = vadd.f32 %v1628, %v1740
        %1742 = vmatmul.f32.gmra.mxu0 %v1060
        %v1743 = vpop.f32.mrf.mxu0
        %v1744 = vadd.f32 %v1631, %v1743
        %1745 = vmatmul.f32.gmra.mxu0 %v1069
        %v1746 = vpop.f32.mrf.mxu0
        %v1747 = vadd.f32 %v1634, %v1746
        %1748 = vmatmul.f32.gmra.mxu0 %v1078
        %v1749 = vpop.f32.mrf.mxu0
        %v1750 = vadd.f32 %v1637, %v1749
        %1751 = vmatmul.f32.gmra.mxu0 %v1087
        %v1752 = vpop.f32.mrf.mxu0
        %v1753 = vadd.f32 %v1640, %v1752
        %1754 = vmatmul.f32.gmra.mxu0 %v1096
        %v1755 = vpop.f32.mrf.mxu0
        %v1756 = vadd.f32 %v1643, %v1755
        %1757 = vmatmul.f32.gmra.mxu0 %v1105
        %v1758 = vpop.f32.mrf.mxu0
        %v1759 = vadd.f32 %v1646, %v1758
        %1760 = vmatmul.f32.gmra.mxu0 %v1114
        %v1761 = vpop.f32.mrf.mxu0
        %v1762 = vadd.f32 %v1649, %v1761
        %1763 = vmatmul.f32.gmra.mxu0 %v1123
        %v1764 = vpop.f32.mrf.mxu0
        %v1765 = vadd.f32 %v1652, %v1764
        %1766 = vmatmul.f32.gmra.mxu0 %v1132
        %v1767 = vpop.f32.mrf.mxu0
        %v1768 = vadd.f32 %v1655, %v1767
        %1769 = vmatmul.f32.gmra.mxu0 %v1141
        %v1770 = vpop.f32.mrf.mxu0
        %v1771 = vadd.f32 %v1658, %v1770
        %1772 = vmatmul.f32.gmra.mxu0 %v1150
        %v1773 = vpop.f32.mrf.mxu0
        %v1774 = vadd.f32 %v1661, %v1773
        %1775 = vmatmul.f32.gmra.mxu0 %v1159
        %v1776 = vpop.f32.mrf.mxu0
        %v1777 = vadd.f32 %v1664, %v1776
        %1778 = vmatmul.f32.gmra.mxu0 %v1168
        %v1779 = vpop.f32.mrf.mxu0
        %v1780 = vadd.f32 %v1667, %v1779
        %1781 = vmatmul.f32.gmra.mxu0 %v1177
        %v1782 = vpop.f32.mrf.mxu0
        %v1783 = vadd.f32 %v1670, %v1782
        %1784 = vmatmul.f32.gmra.mxu0 %v1186
        %v1785 = vpop.f32.mrf.mxu0
        %v1786 = vadd.f32 %v1673, %v1785
        %1787 = vdwg.mxu0
        %1788 = vmatpush.msra.mxu0 %v1271
        %1789 = vmatpush.msra.mxu0 %v1270
        %1790 = vmatpush.msra.mxu0 %v1269
        %1791 = vmatpush.msra.mxu0 %v1268
        %1792 = vmatpush.msra.mxu0 %v1267
        %1793 = vmatpush.msra.mxu0 %v1266
        %1794 = vmatpush.msra.mxu0 %v1265
        %1795 = vmatpush.msra.mxu0 %v1264
        %1796 = vmatpush.msra.mxu0 %v1263
        %1797 = vmatpush.msra.mxu0 %v1262
        %1798 = vmatpush.msra.mxu0 %v1261
        %1799 = vmatpush.msra.mxu0 %v1260
        %1800 = vmatpush.msra.mxu0 %v1259
        %1801 = vmatpush.msra.mxu0 %v1258
        %1802 = vmatpush.msra.mxu0 %v1257
        %1803 = vmatpush.msra.mxu0 %v1256
        %1804 = vmatmul.f32.gmra.mxu0 %v908
        %v1805 = vpop.f32.mrf.mxu0
        %v1806 = vadd.f32 %v1693, %v1805
        %1807 = vmatmul.f32.gmra.mxu0 %v917
        %v1808 = vpop.f32.mrf.mxu0
        %v1809 = vadd.f32 %v1696, %v1808
        %1810 = vmatmul.f32.gmra.mxu0 %v926
        %v1811 = vpop.f32.mrf.mxu0
        %v1812 = vadd.f32 %v1699, %v1811
        %1813 = vmatmul.f32.gmra.mxu0 %v935
        %v1814 = vpop.f32.mrf.mxu0
        %v1815 = vadd.f32 %v1702, %v1814
        %1816 = vmatmul.f32.gmra.mxu0 %v944
        %v1817 = vpop.f32.mrf.mxu0
        %v1818 = vadd.f32 %v1705, %v1817
        %1819 = vmatmul.f32.gmra.mxu0 %v953
        %v1820 = vpop.f32.mrf.mxu0
        %v1821 = vadd.f32 %v1708, %v1820
        %1822 = vmatmul.f32.gmra.mxu0 %v962
        %v1823 = vpop.f32.mrf.mxu0
        %v1824 = vadd.f32 %v1711, %v1823
        %1825 = vmatmul.f32.gmra.mxu0 %v971
        %v1826 = vpop.f32.mrf.mxu0
        %v1827 = vadd.f32 %v1714, %v1826
        %1828 = vmatmul.f32.gmra.mxu0 %v980
        %v1829 = vpop.f32.mrf.mxu0
        %v1830 = vadd.f32 %v1717, %v1829
        %1831 = vmatmul.f32.gmra.mxu0 %v989
        %v1832 = vpop.f32.mrf.mxu0
        %v1833 = vadd.f32 %v1720, %v1832
        %1834 = vmatmul.f32.gmra.mxu0 %v998
        %v1835 = vpop.f32.mrf.mxu0
        %v1836 = vadd.f32 %v1723, %v1835
        %1837 = vmatmul.f32.gmra.mxu0 %v1007
        %v1838 = vpop.f32.mrf.mxu0
        %v1839 = vadd.f32 %v1726, %v1838
        %1840 = vmatmul.f32.gmra.mxu0 %v1016
        %v1841 = vpop.f32.mrf.mxu0
        %v1842 = vadd.f32 %v1729, %v1841
        %1843 = vmatmul.f32.gmra.mxu0 %v1025
        %v1844 = vpop.f32.mrf.mxu0
        %v1845 = vadd.f32 %v1732, %v1844
        %1846 = vmatmul.f32.gmra.mxu0 %v1034
        %v1847 = vpop.f32.mrf.mxu0
        %v1848 = vadd.f32 %v1735, %v1847
        %1849 = vmatmul.f32.gmra.mxu0 %v1043
        %v1850 = vpop.f32.mrf.mxu0
        %v1851 = vadd.f32 %v1738, %v1850
        %1852 = vmatmul.f32.gmra.mxu0 %v1052
        %v1853 = vpop.f32.mrf.mxu0
        %v1854 = vadd.f32 %v1741, %v1853
        %1855 = vmatmul.f32.gmra.mxu0 %v1061
        %v1856 = vpop.f32.mrf.mxu0
        %v1857 = vadd.f32 %v1744, %v1856
        %1858 = vmatmul.f32.gmra.mxu0 %v1070
        %v1859 = vpop.f32.mrf.mxu0
        %v1860 = vadd.f32 %v1747, %v1859
        %1861 = vmatmul.f32.gmra.mxu0 %v1079
        %v1862 = vpop.f32.mrf.mxu0
        %v1863 = vadd.f32 %v1750, %v1862
        %1864 = vmatmul.f32.gmra.mxu0 %v1088
        %v1865 = vpop.f32.mrf.mxu0
        %v1866 = vadd.f32 %v1753, %v1865
        %1867 = vmatmul.f32.gmra.mxu0 %v1097
        %v1868 = vpop.f32.mrf.mxu0
        %v1869 = vadd.f32 %v1756, %v1868
        %1870 = vmatmul.f32.gmra.mxu0 %v1106
        %v1871 = vpop.f32.mrf.mxu0
        %v1872 = vadd.f32 %v1759, %v1871
        %1873 = vmatmul.f32.gmra.mxu0 %v1115
        %v1874 = vpop.f32.mrf.mxu0
        %v1875 = vadd.f32 %v1762, %v1874
        %1876 = vmatmul.f32.gmra.mxu0 %v1124
        %v1877 = vpop.f32.mrf.mxu0
        %v1878 = vadd.f32 %v1765, %v1877
        %1879 = vmatmul.f32.gmra.mxu0 %v1133
        %v1880 = vpop.f32.mrf.mxu0
        %v1881 = vadd.f32 %v1768, %v1880
        %1882 = vmatmul.f32.gmra.mxu0 %v1142
        %v1883 = vpop.f32.mrf.mxu0
        %v1884 = vadd.f32 %v1771, %v1883
        %1885 = vmatmul.f32.gmra.mxu0 %v1151
        %v1886 = vpop.f32.mrf.mxu0
        %v1887 = vadd.f32 %v1774, %v1886
        %1888 = vmatmul.f32.gmra.mxu0 %v1160
        %v1889 = vpop.f32.mrf.mxu0
        %v1890 = vadd.f32 %v1777, %v1889
        %1891 = vmatmul.f32.gmra.mxu0 %v1169
        %v1892 = vpop.f32.mrf.mxu0
        %v1893 = vadd.f32 %v1780, %v1892
        %1894 = vmatmul.f32.gmra.mxu0 %v1178
        %v1895 = vpop.f32.mrf.mxu0
        %v1896 = vadd.f32 %v1783, %v1895
        %1897 = vmatmul.f32.gmra.mxu0 %v1187
        %v1898 = vpop.f32.mrf.mxu0
        %v1899 = vadd.f32 %v1786, %v1898
        %1900 = vdwg.mxu0
        %1901 = vmatpush.msra.mxu0 %v1287
        %1902 = vmatpush.msra.mxu0 %v1286
        %1903 = vmatpush.msra.mxu0 %v1285
        %1904 = vmatpush.msra.mxu0 %v1284
        %1905 = vmatpush.msra.mxu0 %v1283
        %1906 = vmatpush.msra.mxu0 %v1282
        %1907 = vmatpush.msra.mxu0 %v1281
        %1908 = vmatpush.msra.mxu0 %v1280
        %1909 = vmatpush.msra.mxu0 %v1279
        %1910 = vmatpush.msra.mxu0 %v1278
        %1911 = vmatpush.msra.mxu0 %v1277
        %1912 = vmatpush.msra.mxu0 %v1276
        %1913 = vmatpush.msra.mxu0 %v1275
        %1914 = vmatpush.msra.mxu0 %v1274
        %1915 = vmatpush.msra.mxu0 %v1273
        %1916 = vmatpush.msra.mxu0 %v1272
        %1917 = vmatmul.f32.gmra.mxu0 %v909
        %v1918 = vpop.f32.mrf.mxu0
        %v1919 = vadd.f32 %v1806, %v1918
        %1920 = vmatmul.f32.gmra.mxu0 %v918
        %v1921 = vpop.f32.mrf.mxu0
        %v1922 = vadd.f32 %v1809, %v1921
        %1923 = vmatmul.f32.gmra.mxu0 %v927
        %v1924 = vpop.f32.mrf.mxu0
        %v1925 = vadd.f32 %v1812, %v1924
        %1926 = vmatmul.f32.gmra.mxu0 %v936
        %v1927 = vpop.f32.mrf.mxu0
        %v1928 = vadd.f32 %v1815, %v1927
        %1929 = vmatmul.f32.gmra.mxu0 %v945
        %v1930 = vpop.f32.mrf.mxu0
        %v1931 = vadd.f32 %v1818, %v1930
        %1932 = vmatmul.f32.gmra.mxu0 %v954
        %v1933 = vpop.f32.mrf.mxu0
        %v1934 = vadd.f32 %v1821, %v1933
        %1935 = vmatmul.f32.gmra.mxu0 %v963
        %v1936 = vpop.f32.mrf.mxu0
        %v1937 = vadd.f32 %v1824, %v1936
        %1938 = vmatmul.f32.gmra.mxu0 %v972
        %v1939 = vpop.f32.mrf.mxu0
        %v1940 = vadd.f32 %v1827, %v1939
        %1941 = vmatmul.f32.gmra.mxu0 %v981
        %v1942 = vpop.f32.mrf.mxu0
        %v1943 = vadd.f32 %v1830, %v1942
        %1944 = vmatmul.f32.gmra.mxu0 %v990
        %v1945 = vpop.f32.mrf.mxu0
        %v1946 = vadd.f32 %v1833, %v1945
        %1947 = vmatmul.f32.gmra.mxu0 %v999
        %v1948 = vpop.f32.mrf.mxu0
        %v1949 = vadd.f32 %v1836, %v1948
        %1950 = vmatmul.f32.gmra.mxu0 %v1008
        %v1951 = vpop.f32.mrf.mxu0
        %v1952 = vadd.f32 %v1839, %v1951
        %1953 = vmatmul.f32.gmra.mxu0 %v1017
        %v1954 = vpop.f32.mrf.mxu0
        %v1955 = vadd.f32 %v1842, %v1954
        %1956 = vmatmul.f32.gmra.mxu0 %v1026
        %v1957 = vpop.f32.mrf.mxu0
        %v1958 = vadd.f32 %v1845, %v1957
        %1959 = vmatmul.f32.gmra.mxu0 %v1035
        %v1960 = vpop.f32.mrf.mxu0
        %v1961 = vadd.f32 %v1848, %v1960
        %1962 = vmatmul.f32.gmra.mxu0 %v1044
        %v1963 = vpop.f32.mrf.mxu0
        %v1964 = vadd.f32 %v1851, %v1963
        %1965 = vmatmul.f32.gmra.mxu0 %v1053
        %v1966 = vpop.f32.mrf.mxu0
        %v1967 = vadd.f32 %v1854, %v1966
        %1968 = vmatmul.f32.gmra.mxu0 %v1062
        %v1969 = vpop.f32.mrf.mxu0
        %v1970 = vadd.f32 %v1857, %v1969
        %1971 = vmatmul.f32.gmra.mxu0 %v1071
        %v1972 = vpop.f32.mrf.mxu0
        %v1973 = vadd.f32 %v1860, %v1972
        %1974 = vmatmul.f32.gmra.mxu0 %v1080
        %v1975 = vpop.f32.mrf.mxu0
        %v1976 = vadd.f32 %v1863, %v1975
        %1977 = vmatmul.f32.gmra.mxu0 %v1089
        %v1978 = vpop.f32.mrf.mxu0
        %v1979 = vadd.f32 %v1866, %v1978
        %1980 = vmatmul.f32.gmra.mxu0 %v1098
        %v1981 = vpop.f32.mrf.mxu0
        %v1982 = vadd.f32 %v1869, %v1981
        %1983 = vmatmul.f32.gmra.mxu0 %v1107
        %v1984 = vpop.f32.mrf.mxu0
        %v1985 = vadd.f32 %v1872, %v1984
        %1986 = vmatmul.f32.gmra.mxu0 %v1116
        %v1987 = vpop.f32.mrf.mxu0
        %v1988 = vadd.f32 %v1875, %v1987
        %1989 = vmatmul.f32.gmra.mxu0 %v1125
        %v1990 = vpop.f32.mrf.mxu0
        %v1991 = vadd.f32 %v1878, %v1990
        %1992 = vmatmul.f32.gmra.mxu0 %v1134
        %v1993 = vpop.f32.mrf.mxu0
        %v1994 = vadd.f32 %v1881, %v1993
        %1995 = vmatmul.f32.gmra.mxu0 %v1143
        %v1996 = vpop.f32.mrf.mxu0
        %v1997 = vadd.f32 %v1884, %v1996
        %1998 = vmatmul.f32.gmra.mxu0 %v1152
        %v1999 = vpop.f32.mrf.mxu0
        %v2000 = vadd.f32 %v1887, %v1999
        %2001 = vmatmul.f32.gmra.mxu0 %v1161
        %v2002 = vpop.f32.mrf.mxu0
        %v2003 = vadd.f32 %v1890, %v2002
        %2004 = vmatmul.f32.gmra.mxu0 %v1170
        %v2005 = vpop.f32.mrf.mxu0
        %v2006 = vadd.f32 %v1893, %v2005
        %2007 = vmatmul.f32.gmra.mxu0 %v1179
        %v2008 = vpop.f32.mrf.mxu0
        %v2009 = vadd.f32 %v1896, %v2008
        %2010 = vmatmul.f32.gmra.mxu0 %v1188
        %v2011 = vpop.f32.mrf.mxu0
        %v2012 = vadd.f32 %v1899, %v2011
        %2013 = vdwg.mxu0
        %2014 = vmatpush.msra.mxu0 %v1303
        %2015 = vmatpush.msra.mxu0 %v1302
        %2016 = vmatpush.msra.mxu0 %v1301
        %2017 = vmatpush.msra.mxu0 %v1300
        %2018 = vmatpush.msra.mxu0 %v1299
        %2019 = vmatpush.msra.mxu0 %v1298
        %2020 = vmatpush.msra.mxu0 %v1297
        %2021 = vmatpush.msra.mxu0 %v1296
        %2022 = vmatpush.msra.mxu0 %v1295
        %2023 = vmatpush.msra.mxu0 %v1294
        %2024 = vmatpush.msra.mxu0 %v1293
        %2025 = vmatpush.msra.mxu0 %v1292
        %2026 = vmatpush.msra.mxu0 %v1291
        %2027 = vmatpush.msra.mxu0 %v1290
        %2028 = vmatpush.msra.mxu0 %v1289
        %2029 = vmatpush.msra.mxu0 %v1288
        %2030 = vmatmul.f32.gmra.mxu0 %v910
        %v2031 = vpop.f32.mrf.mxu0
        %v2032 = vadd.f32 %v1919, %v2031
        %2033 = vmatmul.f32.gmra.mxu0 %v919
        %v2034 = vpop.f32.mrf.mxu0
        %v2035 = vadd.f32 %v1922, %v2034
        %2036 = vmatmul.f32.gmra.mxu0 %v928
        %v2037 = vpop.f32.mrf.mxu0
        %v2038 = vadd.f32 %v1925, %v2037
        %2039 = vmatmul.f32.gmra.mxu0 %v937
        %v2040 = vpop.f32.mrf.mxu0
        %v2041 = vadd.f32 %v1928, %v2040
        %2042 = vmatmul.f32.gmra.mxu0 %v946
        %v2043 = vpop.f32.mrf.mxu0
        %v2044 = vadd.f32 %v1931, %v2043
        %2045 = vmatmul.f32.gmra.mxu0 %v955
        %v2046 = vpop.f32.mrf.mxu0
        %v2047 = vadd.f32 %v1934, %v2046
        %2048 = vmatmul.f32.gmra.mxu0 %v964
        %v2049 = vpop.f32.mrf.mxu0
        %v2050 = vadd.f32 %v1937, %v2049
        %2051 = vmatmul.f32.gmra.mxu0 %v973
        %v2052 = vpop.f32.mrf.mxu0
        %v2053 = vadd.f32 %v1940, %v2052
        %2054 = vmatmul.f32.gmra.mxu0 %v982
        %v2055 = vpop.f32.mrf.mxu0
        %v2056 = vadd.f32 %v1943, %v2055
        %2057 = vmatmul.f32.gmra.mxu0 %v991
        %v2058 = vpop.f32.mrf.mxu0
        %v2059 = vadd.f32 %v1946, %v2058
        %2060 = vmatmul.f32.gmra.mxu0 %v1000
        %v2061 = vpop.f32.mrf.mxu0
        %v2062 = vadd.f32 %v1949, %v2061
        %2063 = vmatmul.f32.gmra.mxu0 %v1009
        %v2064 = vpop.f32.mrf.mxu0
        %v2065 = vadd.f32 %v1952, %v2064
        %2066 = vmatmul.f32.gmra.mxu0 %v1018
        %v2067 = vpop.f32.mrf.mxu0
        %v2068 = vadd.f32 %v1955, %v2067
        %2069 = vmatmul.f32.gmra.mxu0 %v1027
        %v2070 = vpop.f32.mrf.mxu0
        %v2071 = vadd.f32 %v1958, %v2070
        %2072 = vmatmul.f32.gmra.mxu0 %v1036
        %v2073 = vpop.f32.mrf.mxu0
        %v2074 = vadd.f32 %v1961, %v2073
        %2075 = vmatmul.f32.gmra.mxu0 %v1045
        %v2076 = vpop.f32.mrf.mxu0
        %v2077 = vadd.f32 %v1964, %v2076
        %2078 = vmatmul.f32.gmra.mxu0 %v1054
        %v2079 = vpop.f32.mrf.mxu0
        %v2080 = vadd.f32 %v1967, %v2079
        %2081 = vmatmul.f32.gmra.mxu0 %v1063
        %v2082 = vpop.f32.mrf.mxu0
        %v2083 = vadd.f32 %v1970, %v2082
        %2084 = vmatmul.f32.gmra.mxu0 %v1072
        %v2085 = vpop.f32.mrf.mxu0
        %v2086 = vadd.f32 %v1973, %v2085
        %2087 = vmatmul.f32.gmra.mxu0 %v1081
        %v2088 = vpop.f32.mrf.mxu0
        %v2089 = vadd.f32 %v1976, %v2088
        %2090 = vmatmul.f32.gmra.mxu0 %v1090
        %v2091 = vpop.f32.mrf.mxu0
        %v2092 = vadd.f32 %v1979, %v2091
        %2093 = vmatmul.f32.gmra.mxu0 %v1099
        %v2094 = vpop.f32.mrf.mxu0
        %v2095 = vadd.f32 %v1982, %v2094
        %2096 = vmatmul.f32.gmra.mxu0 %v1108
        %v2097 = vpop.f32.mrf.mxu0
        %v2098 = vadd.f32 %v1985, %v2097
        %2099 = vmatmul.f32.gmra.mxu0 %v1117
        %v2100 = vpop.f32.mrf.mxu0
        %v2101 = vadd.f32 %v1988, %v2100
        %2102 = vmatmul.f32.gmra.mxu0 %v1126
        %v2103 = vpop.f32.mrf.mxu0
        %v2104 = vadd.f32 %v1991, %v2103
        %2105 = vmatmul.f32.gmra.mxu0 %v1135
        %v2106 = vpop.f32.mrf.mxu0
        %v2107 = vadd.f32 %v1994, %v2106
        %2108 = vmatmul.f32.gmra.mxu0 %v1144
        %v2109 = vpop.f32.mrf.mxu0
        %v2110 = vadd.f32 %v1997, %v2109
        %2111 = vmatmul.f32.gmra.mxu0 %v1153
        %v2112 = vpop.f32.mrf.mxu0
        %v2113 = vadd.f32 %v2000, %v2112
        %2114 = vmatmul.f32.gmra.mxu0 %v1162
        %v2115 = vpop.f32.mrf.mxu0
        %v2116 = vadd.f32 %v2003, %v2115
        %2117 = vmatmul.f32.gmra.mxu0 %v1171
        %v2118 = vpop.f32.mrf.mxu0
        %v2119 = vadd.f32 %v2006, %v2118
        %2120 = vmatmul.f32.gmra.mxu0 %v1180
        %v2121 = vpop.f32.mrf.mxu0
        %v2122 = vadd.f32 %v2009, %v2121
        %2123 = vmatmul.f32.gmra.mxu0 %v1189
        %v2124 = vpop.f32.mrf.mxu0
        %v2125 = vadd.f32 %v2012, %v2124
        %2126 = vdwg.mxu0
        %2127 = vmatpush.msra.mxu0 %v1319
        %2128 = vmatpush.msra.mxu0 %v1318
        %2129 = vmatpush.msra.mxu0 %v1317
        %2130 = vmatpush.msra.mxu0 %v1316
        %2131 = vmatpush.msra.mxu0 %v1315
        %2132 = vmatpush.msra.mxu0 %v1314
        %2133 = vmatpush.msra.mxu0 %v1313
        %2134 = vmatpush.msra.mxu0 %v1312
        %2135 = vmatpush.msra.mxu0 %v1311
        %2136 = vmatpush.msra.mxu0 %v1310
        %2137 = vmatpush.msra.mxu0 %v1309
        %2138 = vmatpush.msra.mxu0 %v1308
        %2139 = vmatpush.msra.mxu0 %v1307
        %2140 = vmatpush.msra.mxu0 %v1306
        %2141 = vmatpush.msra.mxu0 %v1305
        %2142 = vmatpush.msra.mxu0 %v1304
        %2143 = vmatmul.f32.gmra.mxu0 %v911
        %v2144 = vpop.f32.mrf.mxu0
        %v2145 = vadd.f32 %v2032, %v2144
        %2146 = vmatmul.f32.gmra.mxu0 %v920
        %v2147 = vpop.f32.mrf.mxu0
        %v2148 = vadd.f32 %v2035, %v2147
        %2149 = vmatmul.f32.gmra.mxu0 %v929
        %v2150 = vpop.f32.mrf.mxu0
        %v2151 = vadd.f32 %v2038, %v2150
        %2152 = vmatmul.f32.gmra.mxu0 %v938
        %v2153 = vpop.f32.mrf.mxu0
        %v2154 = vadd.f32 %v2041, %v2153
        %2155 = vmatmul.f32.gmra.mxu0 %v947
        %v2156 = vpop.f32.mrf.mxu0
        %v2157 = vadd.f32 %v2044, %v2156
        %2158 = vmatmul.f32.gmra.mxu0 %v956
        %v2159 = vpop.f32.mrf.mxu0
        %v2160 = vadd.f32 %v2047, %v2159
        %2161 = vmatmul.f32.gmra.mxu0 %v965
        %v2162 = vpop.f32.mrf.mxu0
        %v2163 = vadd.f32 %v2050, %v2162
        %2164 = vmatmul.f32.gmra.mxu0 %v974
        %v2165 = vpop.f32.mrf.mxu0
        %v2166 = vadd.f32 %v2053, %v2165
        %2167 = vmatmul.f32.gmra.mxu0 %v983
        %v2168 = vpop.f32.mrf.mxu0
        %v2169 = vadd.f32 %v2056, %v2168
        %2170 = vmatmul.f32.gmra.mxu0 %v992
        %v2171 = vpop.f32.mrf.mxu0
        %v2172 = vadd.f32 %v2059, %v2171
        %2173 = vmatmul.f32.gmra.mxu0 %v1001
        %v2174 = vpop.f32.mrf.mxu0
        %v2175 = vadd.f32 %v2062, %v2174
        %2176 = vmatmul.f32.gmra.mxu0 %v1010
        %v2177 = vpop.f32.mrf.mxu0
        %v2178 = vadd.f32 %v2065, %v2177
        %2179 = vmatmul.f32.gmra.mxu0 %v1019
        %v2180 = vpop.f32.mrf.mxu0
        %v2181 = vadd.f32 %v2068, %v2180
        %2182 = vmatmul.f32.gmra.mxu0 %v1028
        %v2183 = vpop.f32.mrf.mxu0
        %v2184 = vadd.f32 %v2071, %v2183
        %2185 = vmatmul.f32.gmra.mxu0 %v1037
        %v2186 = vpop.f32.mrf.mxu0
        %v2187 = vadd.f32 %v2074, %v2186
        %2188 = vmatmul.f32.gmra.mxu0 %v1046
        %v2189 = vpop.f32.mrf.mxu0
        %v2190 = vadd.f32 %v2077, %v2189
        %2191 = vmatmul.f32.gmra.mxu0 %v1055
        %v2192 = vpop.f32.mrf.mxu0
        %v2193 = vadd.f32 %v2080, %v2192
        %2194 = vmatmul.f32.gmra.mxu0 %v1064
        %v2195 = vpop.f32.mrf.mxu0
        %v2196 = vadd.f32 %v2083, %v2195
        %2197 = vmatmul.f32.gmra.mxu0 %v1073
        %v2198 = vpop.f32.mrf.mxu0
        %v2199 = vadd.f32 %v2086, %v2198
        %2200 = vmatmul.f32.gmra.mxu0 %v1082
        %v2201 = vpop.f32.mrf.mxu0
        %v2202 = vadd.f32 %v2089, %v2201
        %2203 = vmatmul.f32.gmra.mxu0 %v1091
        %v2204 = vpop.f32.mrf.mxu0
        %v2205 = vadd.f32 %v2092, %v2204
        %2206 = vmatmul.f32.gmra.mxu0 %v1100
        %v2207 = vpop.f32.mrf.mxu0
        %v2208 = vadd.f32 %v2095, %v2207
        %2209 = vmatmul.f32.gmra.mxu0 %v1109
        %v2210 = vpop.f32.mrf.mxu0
        %v2211 = vadd.f32 %v2098, %v2210
        %2212 = vmatmul.f32.gmra.mxu0 %v1118
        %v2213 = vpop.f32.mrf.mxu0
        %v2214 = vadd.f32 %v2101, %v2213
        %2215 = vmatmul.f32.gmra.mxu0 %v1127
        %v2216 = vpop.f32.mrf.mxu0
        %v2217 = vadd.f32 %v2104, %v2216
        %2218 = vmatmul.f32.gmra.mxu0 %v1136
        %v2219 = vpop.f32.mrf.mxu0
        %v2220 = vadd.f32 %v2107, %v2219
        %2221 = vmatmul.f32.gmra.mxu0 %v1145
        %v2222 = vpop.f32.mrf.mxu0
        %v2223 = vadd.f32 %v2110, %v2222
        %2224 = vmatmul.f32.gmra.mxu0 %v1154
        %v2225 = vpop.f32.mrf.mxu0
        %v2226 = vadd.f32 %v2113, %v2225
        %2227 = vmatmul.f32.gmra.mxu0 %v1163
        %v2228 = vpop.f32.mrf.mxu0
        %v2229 = vadd.f32 %v2116, %v2228
        %2230 = vmatmul.f32.gmra.mxu0 %v1172
        %v2231 = vpop.f32.mrf.mxu0
        %v2232 = vadd.f32 %v2119, %v2231
        %2233 = vmatmul.f32.gmra.mxu0 %v1181
        %v2234 = vpop.f32.mrf.mxu0
        %v2235 = vadd.f32 %v2122, %v2234
        %2236 = vmatmul.f32.gmra.mxu0 %v1190
        %v2237 = vpop.f32.mrf.mxu0
        %v2238 = vadd.f32 %v2125, %v2237
        %2239 = vdwg.mxu0
        %2240 = vmatpush.msra.mxu0 %v1335
        %2241 = vmatpush.msra.mxu0 %v1334
        %2242 = vmatpush.msra.mxu0 %v1333
        %2243 = vmatpush.msra.mxu0 %v1332
        %2244 = vmatpush.msra.mxu0 %v1331
        %2245 = vmatpush.msra.mxu0 %v1330
        %2246 = vmatpush.msra.mxu0 %v1329
        %2247 = vmatpush.msra.mxu0 %v1328
        %2248 = vmatpush.msra.mxu0 %v1327
        %2249 = vmatpush.msra.mxu0 %v1326
        %2250 = vmatpush.msra.mxu0 %v1325
        %2251 = vmatpush.msra.mxu0 %v1324
        %2252 = vmatpush.msra.mxu0 %v1323
        %2253 = vmatpush.msra.mxu0 %v1322
        %2254 = vmatpush.msra.mxu0 %v1321
        %2255 = vmatpush.msra.mxu0 %v1320
        %2256 = vmatmul.f32.gmra.mxu0 %v912
        %v2257 = vpop.f32.mrf.mxu0
        %v2258 = vadd.f32 %v2145, %v2257
        %2259 = vmatmul.f32.gmra.mxu0 %v921
        %v2260 = vpop.f32.mrf.mxu0
        %v2261 = vadd.f32 %v2148, %v2260
        %2262 = vmatmul.f32.gmra.mxu0 %v930
        %v2263 = vpop.f32.mrf.mxu0
        %v2264 = vadd.f32 %v2151, %v2263
        %2265 = vmatmul.f32.gmra.mxu0 %v939
        %v2266 = vpop.f32.mrf.mxu0
        %v2267 = vadd.f32 %v2154, %v2266
        %2268 = vmatmul.f32.gmra.mxu0 %v948
        %v2269 = vpop.f32.mrf.mxu0
        %v2270 = vadd.f32 %v2157, %v2269
        %2271 = vmatmul.f32.gmra.mxu0 %v957
        %v2272 = vpop.f32.mrf.mxu0
        %v2273 = vadd.f32 %v2160, %v2272
        %2274 = vmatmul.f32.gmra.mxu0 %v966
        %v2275 = vpop.f32.mrf.mxu0
        %v2276 = vadd.f32 %v2163, %v2275
        %2277 = vmatmul.f32.gmra.mxu0 %v975
        %v2278 = vpop.f32.mrf.mxu0
        %v2279 = vadd.f32 %v2166, %v2278
        %2280 = vmatmul.f32.gmra.mxu0 %v984
        %v2281 = vpop.f32.mrf.mxu0
        %v2282 = vadd.f32 %v2169, %v2281
        %2283 = vmatmul.f32.gmra.mxu0 %v993
        %v2284 = vpop.f32.mrf.mxu0
        %v2285 = vadd.f32 %v2172, %v2284
        %2286 = vmatmul.f32.gmra.mxu0 %v1002
        %v2287 = vpop.f32.mrf.mxu0
        %v2288 = vadd.f32 %v2175, %v2287
        %2289 = vmatmul.f32.gmra.mxu0 %v1011
        %v2290 = vpop.f32.mrf.mxu0
        %v2291 = vadd.f32 %v2178, %v2290
        %2292 = vmatmul.f32.gmra.mxu0 %v1020
        %v2293 = vpop.f32.mrf.mxu0
        %v2294 = vadd.f32 %v2181, %v2293
        %2295 = vmatmul.f32.gmra.mxu0 %v1029
        %v2296 = vpop.f32.mrf.mxu0
        %v2297 = vadd.f32 %v2184, %v2296
        %2298 = vmatmul.f32.gmra.mxu0 %v1038
        %v2299 = vpop.f32.mrf.mxu0
        %v2300 = vadd.f32 %v2187, %v2299
        %2301 = vmatmul.f32.gmra.mxu0 %v1047
        %v2302 = vpop.f32.mrf.mxu0
        %v2303 = vadd.f32 %v2190, %v2302
        %2304 = vmatmul.f32.gmra.mxu0 %v1056
        %v2305 = vpop.f32.mrf.mxu0
        %v2306 = vadd.f32 %v2193, %v2305
        %2307 = vmatmul.f32.gmra.mxu0 %v1065
        %v2308 = vpop.f32.mrf.mxu0
        %v2309 = vadd.f32 %v2196, %v2308
        %2310 = vmatmul.f32.gmra.mxu0 %v1074
        %v2311 = vpop.f32.mrf.mxu0
        %v2312 = vadd.f32 %v2199, %v2311
        %2313 = vmatmul.f32.gmra.mxu0 %v1083
        %v2314 = vpop.f32.mrf.mxu0
        %v2315 = vadd.f32 %v2202, %v2314
        %2316 = vmatmul.f32.gmra.mxu0 %v1092
        %v2317 = vpop.f32.mrf.mxu0
        %v2318 = vadd.f32 %v2205, %v2317
        %2319 = vmatmul.f32.gmra.mxu0 %v1101
        %v2320 = vpop.f32.mrf.mxu0
        %v2321 = vadd.f32 %v2208, %v2320
        %2322 = vmatmul.f32.gmra.mxu0 %v1110
        %v2323 = vpop.f32.mrf.mxu0
        %v2324 = vadd.f32 %v2211, %v2323
        %2325 = vmatmul.f32.gmra.mxu0 %v1119
        %v2326 = vpop.f32.mrf.mxu0
        %v2327 = vadd.f32 %v2214, %v2326
        %2328 = vmatmul.f32.gmra.mxu0 %v1128
        %v2329 = vpop.f32.mrf.mxu0
        %v2330 = vadd.f32 %v2217, %v2329
        %2331 = vmatmul.f32.gmra.mxu0 %v1137
        %v2332 = vpop.f32.mrf.mxu0
        %v2333 = vadd.f32 %v2220, %v2332
        %2334 = vmatmul.f32.gmra.mxu0 %v1146
        %v2335 = vpop.f32.mrf.mxu0
        %v2336 = vadd.f32 %v2223, %v2335
        %2337 = vmatmul.f32.gmra.mxu0 %v1155
        %v2338 = vpop.f32.mrf.mxu0
        %v2339 = vadd.f32 %v2226, %v2338
        %2340 = vmatmul.f32.gmra.mxu0 %v1164
        %v2341 = vpop.f32.mrf.mxu0
        %v2342 = vadd.f32 %v2229, %v2341
        %2343 = vmatmul.f32.gmra.mxu0 %v1173
        %v2344 = vpop.f32.mrf.mxu0
        %v2345 = vadd.f32 %v2232, %v2344
        %2346 = vmatmul.f32.gmra.mxu0 %v1182
        %v2347 = vpop.f32.mrf.mxu0
        %v2348 = vadd.f32 %v2235, %v2347
        %2349 = vmatmul.f32.gmra.mxu0 %v1191
        %v2350 = vpop.f32.mrf.mxu0
        %v2351 = vadd.f32 %v2238, %v2350
        %2352 = vdwg.mxu0
        %2353 = vst [vmem:[%s211] sm:$0xff] %v2258
        %2354 = vst [vmem:[%s211 + $0x8] sm:$0xff] %v2261
        %2355 = vst [vmem:[%s211 + $0x10] sm:$0xff] %v2264
        %2356 = vst [vmem:[%s211 + $0x18] sm:$0xff] %v2267
        %2357 = vst [vmem:[%s211 + $0x20] sm:$0xff] %v2270
        %2358 = vst [vmem:[%s211 + $0x28] sm:$0xff] %v2273
        %2359 = vst [vmem:[%s211 + $0x30] sm:$0xff] %v2276
        %2360 = vst [vmem:[%s211 + $0x38] sm:$0xff] %v2279
        %2361 = vst [vmem:[%s211 + $0x40] sm:$0xff] %v2282
        %2362 = vst [vmem:[%s211 + $0x48] sm:$0xff] %v2285
        %2363 = vst [vmem:[%s211 + $0x50] sm:$0xff] %v2288
        %2364 = vst [vmem:[%s211 + $0x58] sm:$0xff] %v2291
        %2365 = vst [vmem:[%s211 + $0x60] sm:$0xff] %v2294
        %2366 = vst [vmem:[%s211 + $0x68] sm:$0xff] %v2297
        %2367 = vst [vmem:[%s211 + $0x70] sm:$0xff] %v2300
        %2368 = vst [vmem:[%s211 + $0x78] sm:$0xff] %v2303
        %2369 = vst [vmem:[%s211 + $0x80] sm:$0xff] %v2306
        %2370 = vst [vmem:[%s211 + $0x88] sm:$0xff] %v2309
        %2371 = vst [vmem:[%s211 + $0x90] sm:$0xff] %v2312
        %2372 = vst [vmem:[%s211 + $0x98] sm:$0xff] %v2315
        %2373 = vst [vmem:[%s211 + $0xa0] sm:$0xff] %v2318
        %2374 = vst [vmem:[%s211 + $0xa8] sm:$0xff] %v2321
        %2375 = vst [vmem:[%s211 + $0xb0] sm:$0xff] %v2324
        %2376 = vst [vmem:[%s211 + $0xb8] sm:$0xff] %v2327
        %2377 = vst [vmem:[%s211 + $0xc0] sm:$0xff] %v2330
        %2378 = vst [vmem:[%s211 + $0xc8] sm:$0xff] %v2333
        %2379 = vst [vmem:[%s211 + $0xd0] sm:$0xff] %v2336
        %2380 = vst [vmem:[%s211 + $0xd8] sm:$0xff] %v2339
        %2381 = vst [vmem:[%s211 + $0xe0] sm:$0xff] %v2342
        %2382 = vst [vmem:[%s211 + $0xe8] sm:$0xff] %v2345
        %2383 = vst [vmem:[%s211 + $0xf0] sm:$0xff] %v2348
        %2384 = vst [vmem:[%s211 + $0xf8] sm:$0xff] %v2351
        %2385 = vmatpush.msra.mxu0 %v2303
        %2386 = vmatpush.msra.mxu0 %v2300
        %2387 = vmatpush.msra.mxu0 %v2297
        %2388 = vmatpush.msra.mxu0 %v2294
        %2389 = vmatpush.msra.mxu0 %v2291
        %2390 = vmatpush.msra.mxu0 %v2288
        %2391 = vmatpush.msra.mxu0 %v2285
        %2392 = vmatpush.msra.mxu0 %v2282
        %2393 = vmatpush.msra.mxu0 %v2279
        %2394 = vmatpush.msra.mxu0 %v2276
        %2395 = vmatpush.msra.mxu0 %v2273
        %2396 = vmatpush.msra.mxu0 %v2270
        %2397 = vmatpush.msra.mxu0 %v2267
        %2398 = vmatpush.msra.mxu0 %v2264
        %2399 = vmatpush.msra.mxu0 %v2261
        %2400 = vmatpush.msra.mxu0 %v2258
        %2401 = vmatmul.f32.gmra.mxu0 1.0
        %v2402 = vpop.f32.mrf.mxu0
        %v2403 = vadd.f32 0.0, %v2402
        %2404 = vdwg.mxu0
        %2405 = vmatpush.msra.mxu0 %v2351
        %2406 = vmatpush.msra.mxu0 %v2348
        %2407 = vmatpush.msra.mxu0 %v2345
        %2408 = vmatpush.msra.mxu0 %v2342
        %2409 = vmatpush.msra.mxu0 %v2339
        %2410 = vmatpush.msra.mxu0 %v2336
        %2411 = vmatpush.msra.mxu0 %v2333
        %2412 = vmatpush.msra.mxu0 %v2330
        %2413 = vmatpush.msra.mxu0 %v2327
        %2414 = vmatpush.msra.mxu0 %v2324
        %2415 = vmatpush.msra.mxu0 %v2321
        %2416 = vmatpush.msra.mxu0 %v2318
        %2417 = vmatpush.msra.mxu0 %v2315
        %2418 = vmatpush.msra.mxu0 %v2312
        %2419 = vmatpush.msra.mxu0 %v2309
        %2420 = vmatpush.msra.mxu0 %v2306
        %2421 = vmatmul.f32.gmra.mxu0 1.0
        %v2422 = vpop.f32.mrf.mxu0
        %v2423 = vadd.f32 %v2403, %v2422
        %2424 = vdwg.mxu0
        %v2425 = vmul.f32 %v2258, %v2258
        %v2426 = vmul.f32 %v2261, %v2261
        %v2427 = vmul.f32 %v2264, %v2264
        %v2428 = vmul.f32 %v2267, %v2267
        %v2429 = vmul.f32 %v2270, %v2270
        %v2430 = vmul.f32 %v2273, %v2273
        %v2431 = vmul.f32 %v2276, %v2276
        %v2432 = vmul.f32 %v2279, %v2279
        %v2433 = vmul.f32 %v2282, %v2282
        %v2434 = vmul.f32 %v2285, %v2285
        %v2435 = vmul.f32 %v2288, %v2288
        %v2436 = vmul.f32 %v2291, %v2291
        %v2437 = vmul.f32 %v2294, %v2294
        %v2438 = vmul.f32 %v2297, %v2297
        %v2439 = vmul.f32 %v2300, %v2300
        %v2440 = vmul.f32 %v2303, %v2303
        %v2441 = vmul.f32 %v2306, %v2306
        %v2442 = vmul.f32 %v2309, %v2309
        %v2443 = vmul.f32 %v2312, %v2312
        %v2444 = vmul.f32 %v2315, %v2315
        %v2445 = vmul.f32 %v2318, %v2318
        %v2446 = vmul.f32 %v2321, %v2321
        %v2447 = vmul.f32 %v2324, %v2324
        %v2448 = vmul.f32 %v2327, %v2327
        %v2449 = vmul.f32 %v2330, %v2330
        %v2450 = vmul.f32 %v2333, %v2333
        %v2451 = vmul.f32 %v2336, %v2336
        %v2452 = vmul.f32 %v2339, %v2339
        %v2453 = vmul.f32 %v2342, %v2342
        %v2454 = vmul.f32 %v2345, %v2345
        %v2455 = vmul.f32 %v2348, %v2348
        %v2456 = vmul.f32 %v2351, %v2351
        %2457 = vmatpush.msra.mxu0 %v2440
        %2458 = vmatpush.msra.mxu0 %v2439
        %2459 = vmatpush.msra.mxu0 %v2438
        %2460 = vmatpush.msra.mxu0 %v2437
        %2461 = vmatpush.msra.mxu0 %v2436
        %2462 = vmatpush.msra.mxu0 %v2435
        %2463 = vmatpush.msra.mxu0 %v2434
        %2464 = vmatpush.msra.mxu0 %v2433
        %2465 = vmatpush.msra.mxu0 %v2432
        %2466 = vmatpush.msra.mxu0 %v2431
        %2467 = vmatpush.msra.mxu0 %v2430
        %2468 = vmatpush.msra.mxu0 %v2429
        %2469 = vmatpush.msra.mxu0 %v2428
        %2470 = vmatpush.msra.mxu0 %v2427
        %2471 = vmatpush.msra.mxu0 %v2426
        %2472 = vmatpush.msra.mxu0 %v2425
        %2473 = vmatmul.f32.gmra.mxu0 1.0
        %v2474 = vpop.f32.mrf.mxu0
        %v2475 = vadd.f32 0.0, %v2474
        %2476 = vdwg.mxu0
        %2477 = vmatpush.msra.mxu0 %v2456
        %2478 = vmatpush.msra.mxu0 %v2455
        %2479 = vmatpush.msra.mxu0 %v2454
        %2480 = vmatpush.msra.mxu0 %v2453
        %2481 = vmatpush.msra.mxu0 %v2452
        %2482 = vmatpush.msra.mxu0 %v2451
        %2483 = vmatpush.msra.mxu0 %v2450
        %2484 = vmatpush.msra.mxu0 %v2449
        %2485 = vmatpush.msra.mxu0 %v2448
        %2486 = vmatpush.msra.mxu0 %v2447
        %2487 = vmatpush.msra.mxu0 %v2446
        %2488 = vmatpush.msra.mxu0 %v2445
        %2489 = vmatpush.msra.mxu0 %v2444
        %2490 = vmatpush.msra.mxu0 %v2443
        %2491 = vmatpush.msra.mxu0 %v2442
        %2492 = vmatpush.msra.mxu0 %v2441
        %2493 = vmatmul.f32.gmra.mxu0 1.0
        %v2494 = vpop.f32.mrf.mxu0
        %v2495 = vadd.f32 %v2475, %v2494
        %2496 = vdwg.mxu0
        %v2498 = vrot.slane %v2495, 7
        %vm2500 = vcmask 1040384
        %v2501 = vsel %vm2500, %v2423, %v2498
        %2502 = vst [vmem:[%s218] sm:$0x3] %v2501
        %s2503 = sand.u32 %s80, 1
        %s2504 = scalar_lea.sflag [#allocation6], %s2503
        %s2505 = sand.u32 %s80, 1
        %s2506 = smul.addr %s2505, 256
        %s2507 = scalar_lea.vmem [#allocation9], %s2506
        %s2508 = sand.u32 %s106, 1
        %s2509 = scalar_lea.sflag [#allocation11], %s2508
        %s2510 = sand.u32 %s106, 1
        %s2511 = smul.addr %s2510, 2
        %s2512 = scalar_lea.vmem [#allocation10], %s2511
        // Predicated region
        $region37: #{tpu_custom_call.1} parent=27 // pred_check
          %p2513 = pneg %p90
        $region38: #{tpu_custom_call.1} parent=27 // pred_check_branch
          %2515 = sbr.rel (%p2513) target = $region40
        $region39: #{tpu_custom_call.1} parent=27 // pred_region
          %2517 = vsyncadd %s2504, 0
          %s2518 = smul.addr %s25, 32
          %s2519 = smul.addr %s2518, 8
          %s2520 = scalar_lea.hbm %s2, %s2519
          %s2521 = sshll.u32 %s2507, 4
          %s2522 = int_to_ptr.vmem [resolvable:$true] %s2521
          %s2523 = sshll.u32 %s2520, 4
          %s2524 = int_to_ptr.hbm [resolvable:$true] %s2523
          %2529 = dma.vmem_to_hbm [thread:$0]  %s2522, 4096, %s2524, %s2504, 128, 128, 8
        $region40: #{tpu_custom_call.1} parent=27 // pred_fallthru
          _
        // Predicated region
        $region41: #{tpu_custom_call.1} parent=27 // pred_check
          %p2530 = pneg %p116
        $region42: #{tpu_custom_call.1} parent=27 // pred_check_branch
          %2532 = sbr.rel (%p2530) target = $region44
        $region43: #{tpu_custom_call.1} parent=27 // pred_region
          %2534 = vsyncadd %s2509, 0
          %s2535 = smul.addr %s25, 2
          %s2536 = scalar_lea.hbm %s3, %s2535
          %s2538 = sshll.u32 %s2512, 4
          %s2539 = int_to_ptr.vmem [resolvable:$true] %s2538
          %s2540 = sshll.u32 %s2536, 4
          %s2541 = int_to_ptr.hbm [resolvable:$true] %s2540
          %2543 = dma.vmem_to_hbm [thread:$0]  %s2539, 32, %s2541, %s2509
        $region44: #{tpu_custom_call.1} parent=27 // pred_fallthru
          _
      $region28: #{tpu_custom_call.1} parent=5 // pred_fallthru
        _
      %p2544 = scmp.le.s32.totalorder 2, %s20
      // Predicated region
      $region45: #{tpu_custom_call.1} parent=5 // pred_check
        %p2545 = pneg %p2544
      $region46: #{tpu_custom_call.1} parent=5 // pred_check_branch
        %2547 = sbr.rel (%p2545) target = $region48
      $region47: #{tpu_custom_call.1} parent=5 // pred_region
        %s2548 = ssub.s32 %s20, 2
        // Predicated region
        $region49: #{tpu_custom_call.1} parent=47 // pred_check
          %p2549 = pneg %p96
        $region50: #{tpu_custom_call.1} parent=47 // pred_check_branch
          %2551 = sbr.rel (%p2549) target = $region52
        $region51: #{tpu_custom_call.1} parent=47 // pred_region
          %s2552 = sand.u32 %s81, 1
          %s2553 = scalar_lea.sflag [#allocation6], %s2552
          %s2554 = sand.u32 %s81, 1
          %s2555 = smul.addr %s2554, 256
          %s2556 = scalar_lea.vmem [#allocation9], %s2555
          %2558 = dma.done %s2553, 4096
        $region52: #{tpu_custom_call.1} parent=47 // pred_fallthru
          _
        // Predicated region
        $region53: #{tpu_custom_call.1} parent=47 // pred_check
          %p2559 = pneg %p122
        $region54: #{tpu_custom_call.1} parent=47 // pred_check_branch
          %2561 = sbr.rel (%p2559) target = $region56
        $region55: #{tpu_custom_call.1} parent=47 // pred_region
          %s2562 = sand.u32 %s107, 1
          %s2563 = scalar_lea.sflag [#allocation11], %s2562
          %s2564 = sand.u32 %s107, 1
          %s2565 = smul.addr %s2564, 2
          %s2566 = scalar_lea.vmem [#allocation10], %s2565
          %2568 = dma.done %s2563, 32
        $region56: #{tpu_custom_call.1} parent=47 // pred_fallthru
          _
      $region48: #{tpu_custom_call.1} parent=5 // pred_fallthru
        _
    $region6: #{tpu_custom_call.1} parent=1 // loop_footer
      %s24 = sadd.s32 1, %s20
    $region7: #{tpu_custom_call.1} parent=1 // loop_footer_branch
      %19 = sbr.rel target = $region3
    $region8: #{tpu_custom_call.1} parent=1 // loop_exit
      _
    %2569 = vsyncpa [#allocation5], 1
    %s2570 = scalar_lea.sflag [#allocation5], 1
    %2571 = vsyncpa %s2570, 1
    %2572 = vsyncpa [#allocation8], 1
    %2573 = vsyncpa [#allocation6], 1
    %s2574 = scalar_lea.sflag [#allocation6], 1
    %2575 = vsyncpa %s2574, 1
    %2576 = vsyncpa [#allocation11], 1
    %s2577 = scalar_lea.sflag [#allocation11], 1
    %2578 = vsyncpa %s2577, 1

</llo_original>
